<compile_context>
chip_gen: v7x
topology: tpu7x:2x2x1
jax: 0.10.0
libtpu: 0.0.40
codegen_flags: <defaults>
</compile_context>

<pallas_src>
import numpy as np
import jax
import jax.numpy as jnp
from jax.experimental import pallas as pl
from jax.experimental.pallas import tpu as pltpu


# ---------------------------------------------------------------------------
# Pallas kernel: three fused lane-dense matmuls
# ---------------------------------------------------------------------------
def _rn_kernel(x_ref, wfc_ref, bfc_ref, w1_ref, b1_ref, w2_ref, b2_ref, o_ref):
    # fc1 + ReLU
    h = jnp.dot(x_ref[...], wfc_ref[...], preferred_element_type=jnp.float32)
    h = jnp.maximum(h + bfc_ref[...], 0.0)

    # ConvTranspose2d(6 -> 16, k=5, s=2, p=2, op=1) + ReLU  (as a dense matmul)
    a1 = jnp.dot(h, w1_ref[...], preferred_element_type=jnp.float32)
    a1 = jnp.maximum(a1 + b1_ref[...], 0.0)

    # ConvTranspose2d(16 -> C, k=5, s=2, p=2, op=1) + sigmoid (as a dense matmul)
    y = jnp.dot(a1, w2_ref[...], preferred_element_type=jnp.float32) + b2_ref[...]

    # numerically-stable sigmoid (no overflow for very negative y)
    e = jnp.exp(-jnp.abs(y))
    r = 1.0 / (1.0 + e)
    o_ref[...] = jnp.where(y >= 0.0, r, e * r)


# ---------------------------------------------------------------------------
# Wrapper-side parameter transforms
# ---------------------------------------------------------------------------
def _deconv_pt(x_nchw, wt):
    """PyTorch ConvTranspose2d(k=5, s=2, p=2, op=1) WITHOUT bias, via a
    regular dilated conv.  wt: (Ci, Co, 5, 5)."""
    w_conv = jnp.transpose(wt, (1, 0, 2, 3))[:, :, ::-1, ::-1]   # (Co, Ci, 5, 5)
    return jax.lax.conv_general_dilated(
        x_nchw, w_conv, window_strides=(1, 1),
        padding=[(2, 3), (2, 3)],          # k-1-p = 2, k-1-p+op = 3
        lhs_dilation=(2, 2),
        dimension_numbers=("NCHW", "OIHW", "NCHW"))


def init_rn_params(key, input_dims, output_dim):
    ch = input_dims[0] // 4        # com_height
    cw = input_dims[1] // 4        # com_width  (PyTorch reshapes to (N, 6, cw, ch))
    c_out = input_dims[2]
    f = 6 * cw * ch                # fc1 output features
    m1 = 16 * (2 * cw) * (2 * ch)  # flattened conv1 output
    m2 = c_out * (4 * cw) * (4 * ch)

    ks = jax.random.split(key, 6)
    w_fc_pt = jax.random.normal(ks[0], (f, output_dim), jnp.float32) * 0.1   # Linear (out, in)
    b_fc = jax.random.normal(ks[1], (f,), jnp.float32) * 0.1
    w_c1 = jax.random.normal(ks[2], (6, 16, 5, 5), jnp.float32) * 0.1        # ConvTranspose2d (Ci, Co, 5, 5)
    b_c1 = jax.random.normal(ks[3], (16,), jnp.float32) * 0.1
    w_c2 = jax.random.normal(ks[4], (16, c_out, 5, 5), jnp.float32) * 0.1
    b_c2 = jax.random.normal(ks[5], (c_out,), jnp.float32) * 0.1

    # ---- effective dense weights: push basis vectors through the deconvs ----
    # Row order of W1eff matches the PyTorch flatten of h.reshape(N, 6, cw, ch);
    # column order is flatten(16, 2cw, 2ch).  Row order of W2eff matches that
    # column order; its column order is flatten(C, 4cw, 4ch) == per-sample NCHW,
    # so the kernel's packed output reshapes straight to (N, C, 4cw, 4ch).
    eye_f = jnp.eye(f, dtype=jnp.float32).reshape(f, 6, cw, ch)
    w1_eff = _deconv_pt(eye_f, w_c1).reshape(f, m1)
    eye_m1 = jnp.eye(m1, dtype=jnp.float32).reshape(m1, 16, 2 * cw, 2 * ch)
    w2_eff = _deconv_pt(eye_m1, w_c2).reshape(m1, m2)

    b1_eff = jnp.broadcast_to(b_c1.reshape(16, 1, 1),
                              (16, 2 * cw, 2 * ch)).reshape(1, m1)
    b2_eff = jnp.broadcast_to(b_c2.reshape(c_out, 1, 1),
                              (c_out, 4 * cw, 4 * ch)).reshape(1, m2)

    return dict(
        cw=cw, ch=ch, c_out=c_out,
        # raw PyTorch-layout parameters (used by the pure-JAX reference)
        w_fc_pt=w_fc_pt, b_fc=b_fc, w_c1=w_c1, b_c1=b_c1, w_c2=w_c2, b_c2=b_c2,
        # kernel-side pre-transformed parameters
        wfc=jnp.transpose(w_fc_pt),          # (D, F)
        bfc=b_fc.reshape(1, f),              # (1, F)
        w1_eff=w1_eff,                       # (F, M1)
        b1_eff=b1_eff,                       # (1, M1)
        w2_eff=w2_eff,                       # (M1, C*H*W)
        b2_eff=b2_eff,                       # (1, C*H*W)
    )


def _choose_b_tile(n):
    """Batch tile: multiple of 8 (sublane-aligned), <=128, and small enough to
    give >=2 grid blocks when the batch allows (keeps both v7x TCs busy)."""
    bt = 128
    while bt > 8 and pl.cdiv(n, bt) < 2:
        bt //= 2
    return bt


def rn_forward(params, x):
    """x: (N, output_dim) -> (N, C, 4*com_width, 4*com_height), matching PyTorch RN."""
    n, d = x.shape
    cw, ch, c_out = params["cw"], params["ch"], params["c_out"]
    h2, w2 = 4 * cw, 4 * ch
    f = params["wfc"].shape[1]
    m1 = params["w1_eff"].shape[1]
    out_cols = params["w2_eff"].shape[1]

    bt = _choose_b_tile(n)
    n_pad = pl.cdiv(n, bt) * bt
    if n_pad != n:
        x = jnp.pad(x, ((0, n_pad - n), (0, 0)))

    def const_spec(shape):
        return pl.BlockSpec(shape, lambda i, _nd=len(shape): (0,) * _nd)

    y = pl.pallas_call(
        _rn_kernel,
        out_shape=jax.ShapeDtypeStruct((n_pad, out_cols), jnp.float32),
        grid_spec=pltpu.PrefetchScalarGridSpec(
            num_scalar_prefetch=0,
            grid=(n_pad // bt,),
            in_specs=[
                pl.BlockSpec((bt, d), lambda i: (i, 0)),   # x  (batch-blocked)
                const_spec((d, f)),                        # fc weight
                const_spec((1, f)),                        # fc bias
                const_spec((f, m1)),                       # deconv1 effective weight
                const_spec((1, m1)),                       # deconv1 effective bias
                const_spec((m1, out_cols)),                # deconv2 effective weight
                const_spec((1, out_cols)),                 # deconv2 effective bias
            ],
            out_specs=pl.BlockSpec((bt, out_cols), lambda i: (i, 0)),
        ),
        compiler_params=pltpu.CompilerParams(
            dimension_semantics=("parallel",),
            vmem_limit_bytes=32 * 1024 * 1024,   # headroom over v5e's 16 MiB default
        ),
    )(x, params["wfc"], params["bfc"],
      params["w1_eff"], params["b1_eff"],
      params["w2_eff"], params["b2_eff"])

    # Drop batch padding; packed columns are already in NCHW order.
    return y[:n].reshape(n, c_out, h2, w2)


# ---------------------------------------------------------------------------
# Pure-JAX reference (PyTorch semantics) for correctness checking
# ---------------------------------------------------------------------------
def _deconv_ref(x, wt, b):
    co = wt.shape[1]
    return _deconv_pt(x, wt) + b.reshape(1, co, 1, 1)


def rn_forward_ref(params, x):
    n = x.shape[0]
    cw, ch = params["cw"], params["ch"]
    h = jnp.maximum(x @ params["w_fc_pt"].T + params["b_fc"], 0.0)
    h = h.reshape(n, 6, cw, ch)
    h = jnp.maximum(_deconv_ref(h, params["w_c1"], params["b_c1"]), 0.0)
    return jax.nn.sigmoid(_deconv_ref(h, params["w_c2"], params["b_c2"]))


if __name__ == "__main__":
    input_dims = (16, 16, 4)   # (H, W, C) as used by the module
    output_dim = 32
    batch = 2

    key = jax.random.PRNGKey(0)
    k_param, k_x = jax.random.split(key)
    params = init_rn_params(k_param, input_dims, output_dim)
    x = jax.random.normal(k_x, (batch, output_dim), jnp.float32)

    fwd = jax.jit(lambda xx: rn_forward(params, xx))
    out = jax.block_until_ready(fwd(x))

    assert out.shape == (batch, input_dims[2], input_dims[0], input_dims[1]), out.shape
    assert bool(jnp.all(jnp.isfinite(out)))

    ref = jax.block_until_ready(rn_forward_ref(params, x))
    err = float(jnp.max(jnp.abs(out - ref)))
    assert bool(jnp.allclose(out, ref, atol=1e-4, rtol=1e-4)), err

    print("KERNEL_OK")
</pallas_src>

<mosaic_0001>
module attributes {stable_mosaic.version = 11 : i64} {
  func.func @_rn_kernel(%arg0: i32, %arg1: memref<8x32xf32, #tpu.memory_space<vmem>>, %arg2: memref<32x96xf32, #tpu.memory_space<vmem>>, %arg3: memref<1x96xf32, #tpu.memory_space<vmem>>, %arg4: memref<96x1024xf32, #tpu.memory_space<vmem>>, %arg5: memref<1x1024xf32, #tpu.memory_space<vmem>>, %arg6: memref<1024x1024xf32, #tpu.memory_space<vmem>>, %arg7: memref<1x1024xf32, #tpu.memory_space<vmem>>, %arg8: memref<8x1024xf32, #tpu.memory_space<vmem>>) attributes {dimension_semantics = [#tpu.dimension_semantics<parallel>], iteration_bounds = array<i64: 1>, scalar_prefetch = 0 : i64, scratch_operands = 0 : i64, tpu.core_type = #tpu.core_type<tc>, window_params = [{transform_indices = @transform_0, window_bounds = array<i64: 8, 32>}, {pipeline_mode = #tpu.pipeline_mode<synchronous>, transform_indices = @transform_1, window_bounds = array<i64: 32, 96>}, {pipeline_mode = #tpu.pipeline_mode<synchronous>, transform_indices = @transform_2, window_bounds = array<i64: 1, 96>}, {pipeline_mode = #tpu.pipeline_mode<synchronous>, transform_indices = @transform_3, window_bounds = array<i64: 96, 1024>}, {pipeline_mode = #tpu.pipeline_mode<synchronous>, transform_indices = @transform_4, window_bounds = array<i64: 1, 1024>}, {pipeline_mode = #tpu.pipeline_mode<synchronous>, transform_indices = @transform_5, window_bounds = array<i64: 1024, 1024>}, {pipeline_mode = #tpu.pipeline_mode<synchronous>, transform_indices = @transform_6, window_bounds = array<i64: 1, 1024>}, {transform_indices = @transform_7, window_bounds = array<i64: 8, 1024>}]} {
    %c0 = arith.constant 0 : index
    %c0_0 = arith.constant 0 : index
    %0 = vector.load %arg1[%c0, %c0_0] : memref<8x32xf32, #tpu.memory_space<vmem>>, vector<8x32xf32>
    %c0_1 = arith.constant 0 : index
    %c0_2 = arith.constant 0 : index
    %1 = vector.load %arg2[%c0_1, %c0_2] : memref<32x96xf32, #tpu.memory_space<vmem>>, vector<32x96xf32>
    %cst = arith.constant dense<0.000000e+00> : vector<8x96xf32>
    %2 = tpu.matmul %0, %1, %cst {dimension_numbers = #tpu.dot_dimension_numbers<[1], [0], [0], [1], [0, 0, 1, 1], [], []>} : vector<8x32xf32>, vector<32x96xf32>, vector<8x96xf32> -> vector<8x96xf32>
    %c0_3 = arith.constant 0 : index
    %c0_4 = arith.constant 0 : index
    %3 = vector.load %arg3[%c0_3, %c0_4] : memref<1x96xf32, #tpu.memory_space<vmem>>, vector<1x96xf32>
    %4 = vector.broadcast %3 : vector<1x96xf32> to vector<8x96xf32>
    %5 = arith.addf %2, %4 : vector<8x96xf32>
    %cst_5 = arith.constant 0.000000e+00 : f32
    %6 = vector.broadcast %cst_5 : f32 to vector<8x96xf32>
    %7 = arith.maximumf %5, %6 : vector<8x96xf32>
    %c0_6 = arith.constant 0 : index
    %c0_7 = arith.constant 0 : index
    %8 = vector.load %arg4[%c0_6, %c0_7] : memref<96x1024xf32, #tpu.memory_space<vmem>>, vector<96x1024xf32>
    %cst_8 = arith.constant dense<0.000000e+00> : vector<8x1024xf32>
    %9 = tpu.matmul %7, %8, %cst_8 {dimension_numbers = #tpu.dot_dimension_numbers<[1], [0], [0], [1], [0, 0, 1, 1], [], []>} : vector<8x96xf32>, vector<96x1024xf32>, vector<8x1024xf32> -> vector<8x1024xf32>
    %c0_9 = arith.constant 0 : index
    %c0_10 = arith.constant 0 : index
    %10 = vector.load %arg5[%c0_9, %c0_10] : memref<1x1024xf32, #tpu.memory_space<vmem>>, vector<1x1024xf32>
    %11 = vector.broadcast %10 : vector<1x1024xf32> to vector<8x1024xf32>
    %12 = arith.addf %9, %11 : vector<8x1024xf32>
    %cst_11 = arith.constant 0.000000e+00 : f32
    %13 = vector.broadcast %cst_11 : f32 to vector<8x1024xf32>
    %14 = arith.maximumf %12, %13 : vector<8x1024xf32>
    %c0_12 = arith.constant 0 : index
    %c0_13 = arith.constant 0 : index
    %15 = vector.load %arg6[%c0_12, %c0_13] : memref<1024x1024xf32, #tpu.memory_space<vmem>>, vector<1024x1024xf32>
    %cst_14 = arith.constant dense<0.000000e+00> : vector<8x1024xf32>
    %16 = tpu.matmul %14, %15, %cst_14 {dimension_numbers = #tpu.dot_dimension_numbers<[1], [0], [0], [1], [0, 0, 1, 1], [], []>} : vector<8x1024xf32>, vector<1024x1024xf32>, vector<8x1024xf32> -> vector<8x1024xf32>
    %c0_15 = arith.constant 0 : index
    %c0_16 = arith.constant 0 : index
    %17 = vector.load %arg7[%c0_15, %c0_16] : memref<1x1024xf32, #tpu.memory_space<vmem>>, vector<1x1024xf32>
    %18 = vector.broadcast %17 : vector<1x1024xf32> to vector<8x1024xf32>
    %19 = arith.addf %16, %18 : vector<8x1024xf32>
    %20 = math.absf %19 : vector<8x1024xf32>
    %cst_17 = arith.constant 0.000000e+00 : f32
    %21 = vector.broadcast %cst_17 : f32 to vector<8x1024xf32>
    %22 = arith.subf %21, %20 : vector<8x1024xf32>
    %23 = math.exp %22 : vector<8x1024xf32>
    %cst_18 = arith.constant 1.000000e+00 : f32
    %24 = vector.broadcast %cst_18 : f32 to vector<8x1024xf32>
    %25 = arith.addf %24, %23 : vector<8x1024xf32>
    %cst_19 = arith.constant 1.000000e+00 : f32
    %26 = vector.broadcast %cst_19 : f32 to vector<8x1024xf32>
    %27 = arith.divf %26, %25 : vector<8x1024xf32>
    %cst_20 = arith.constant 0.000000e+00 : f32
    %28 = vector.broadcast %cst_20 : f32 to vector<8x1024xf32>
    %29 = arith.cmpf oge, %19, %28 : vector<8x1024xf32>
    %30 = arith.mulf %23, %27 : vector<8x1024xf32>
    %31 = arith.select %29, %27, %30 : vector<8x1024xi1>, vector<8x1024xf32>
    %c0_21 = arith.constant 0 : index
    %c0_22 = arith.constant 0 : index
    %32 = vector.load %arg8[%c0_21, %c0_22] : memref<8x1024xf32, #tpu.memory_space<vmem>>, vector<8x1024xf32>
    tpu.vector_store %arg8[%c0_21, %c0_22], %31 {strides = array<i32>} : memref<8x1024xf32, #tpu.memory_space<vmem>>, vector<8x1024xf32>,
    return
  }
  func.func @transform_0(%arg0: i32) -> (i32, i32) {
    %c0_i32 = arith.constant 0 : i32
    %c0_i32_0 = arith.constant 0 : i32
    return %arg0, %c0_i32 : i32, i32
  }
  func.func @transform_1(%arg0: i32) -> (i32, i32) {
    %c0_i32 = arith.constant 0 : i32
    %c0_i32_0 = arith.constant 0 : i32
    %c0_i32_1 = arith.constant 0 : i32
    return %c0_i32, %c0_i32_0 : i32, i32
  }
  func.func @transform_2(%arg0: i32) -> (i32, i32) {
    %c0_i32 = arith.constant 0 : i32
    %c0_i32_0 = arith.constant 0 : i32
    %c0_i32_1 = arith.constant 0 : i32
    return %c0_i32, %c0_i32_0 : i32, i32
  }
  func.func @transform_3(%arg0: i32) -> (i32, i32) {
    %c0_i32 = arith.constant 0 : i32
    %c0_i32_0 = arith.constant 0 : i32
    %c0_i32_1 = arith.constant 0 : i32
    return %c0_i32, %c0_i32_0 : i32, i32
  }
  func.func @transform_4(%arg0: i32) -> (i32, i32) {
    %c0_i32 = arith.constant 0 : i32
    %c0_i32_0 = arith.constant 0 : i32
    %c0_i32_1 = arith.constant 0 : i32
    return %c0_i32, %c0_i32_0 : i32, i32
  }
  func.func @transform_5(%arg0: i32) -> (i32, i32) {
    %c0_i32 = arith.constant 0 : i32
    %c0_i32_0 = arith.constant 0 : i32
    %c0_i32_1 = arith.constant 0 : i32
    return %c0_i32, %c0_i32_0 : i32, i32
  }
  func.func @transform_6(%arg0: i32) -> (i32, i32) {
    %c0_i32 = arith.constant 0 : i32
    %c0_i32_0 = arith.constant 0 : i32
    %c0_i32_1 = arith.constant 0 : i32
    return %c0_i32, %c0_i32_0 : i32, i32
  }
  func.func @transform_7(%arg0: i32) -> (i32, i32) {
    %c0_i32 = arith.constant 0 : i32
    %c0_i32_0 = arith.constant 0 : i32
    return %arg0, %c0_i32 : i32, i32
  }
}

</mosaic_0001>

<llo_original>
// kernel: _lambda_.1
$region0: #{_lambda_.1}
  #allocation0 [shape = 'u32[]', space=smem, size = 0x4, offset = 0x4, fixed_abs, tag = 'smem constant byte address 0x4 - core index']
  #allocation1 [shape = 'u32[144,128]{1,0:T(1,128)}', space=vmem, size = 0x12000, scoped, tag = 'internal scratch']
  %s0 = inlined_call_operand.vmem [shape: f32[8,32], index: 0, kind: input, shape index: {}]
  %s1 = inlined_call_operand.hbm [shape: f32[32,96], index: 1, kind: input, shape index: {}]
  %s2 = inlined_call_operand.hbm [shape: f32[1,96], index: 2, kind: input, shape index: {}]
  %s3 = inlined_call_operand.hbm [shape: f32[96,1024], index: 3, kind: input, shape index: {}]
  %s4 = inlined_call_operand.hbm [shape: f32[1,1024], index: 4, kind: input, shape index: {}]
  %s5 = inlined_call_operand.hbm [shape: f32[1024,1024], index: 5, kind: input, shape index: {}]
  %s6 = inlined_call_operand.hbm [shape: f32[1,1024], index: 6, kind: input, shape index: {}]
  %s7 = inlined_call_operand.vmem [shape: f32[8,1024], index: 7, kind: output, shape index: {}]
  %s8 = sld [smem:[#allocation0]]
  $region62: #{_lambda_.1} parent=0
    _
  %s10 = ssub.s32 1, %s8
  %s11 = scalar_select 0, %s10, %s8
  $region1: #{_lambda_.1} parent=0
    #allocation2 [shape = 'u8[16384]{0}', space=vmem, size = 0x4000, scoped, tag = 'input window, operand 1, single buffered']
    #allocation3 [shape = 's32[1]{0}', space=sflag, size = 0x4, scoped, tag = 'scoped memory for _lambda_.1']
    #allocation4 [shape = 'u8[512]{0}', space=vmem, size = 0x400, scoped, tag = 'input window, operand 2, single buffered']
    #allocation5 [shape = 's32[1]{0}', space=sflag, size = 0x4, scoped, tag = 'scoped memory for _lambda_.1']
    #allocation6 [shape = 'u8[393216]{0}', space=vmem, size = 0x60000, scoped, tag = 'input window, operand 3, single buffered']
    #allocation7 [shape = 'u8[4096]{0}', space=vmem, size = 0x1000, scoped, tag = 'input window, operand 4, single buffered']
    #allocation8 [shape = 's32[1]{0}', space=sflag, size = 0x4, scoped, tag = 'scoped memory for _lambda_.1']
    #allocation9 [shape = 'u8[4194304]{0}', space=vmem, size = 0x400000, scoped, tag = 'input window, operand 5, single buffered']
    #allocation10 [shape = 'u8[4096]{0}', space=vmem, size = 0x1000, scoped, tag = 'input window, operand 6, single buffered']
    #allocation11 [shape = 's32[1]{0}', space=sflag, size = 0x4, scoped, tag = 'scoped memory for _lambda_.1']
    %12 = vsyncpa [#allocation3], 0
    %13 = vsyncpa [#allocation5], 0
    %14 = vsyncpa [#allocation8], 0
    %15 = vsyncpa [#allocation11], 0
    // Predicated region
    $region2: #{_lambda_.1} parent=1 // pred_check
      _
    $region3: #{_lambda_.1} parent=1 // pred_check_branch
      %17 = sbr.rel (0) target = $region5
    $region4: #{_lambda_.1} parent=1 // pred_region
      _
    $region5: #{_lambda_.1} parent=1 // pred_fallthru
      _
    // Predicated region
    $region6: #{_lambda_.1} parent=1 // pred_check
      _
    $region7: #{_lambda_.1} parent=1 // pred_check_branch
      %19 = sbr.rel (0) target = $region9
    $region8: #{_lambda_.1} parent=1 // pred_region
      %s21 = ssub.s32 512, 512
      %22 = vsyncadd [#allocation3], %s21
      %s23 = sshll.u32 [#allocation2], 4
      %s24 = int_to_ptr.vmem [resolvable:$true] %s23
      %29 = dma.hbm_to_vmem [thread:$0]  %s1, 512, %s24, [#allocation3], 128, 128, 8
    $region9: #{_lambda_.1} parent=1 // pred_fallthru
      _
    // Predicated region
    $region10: #{_lambda_.1} parent=1 // pred_check
      _
    $region11: #{_lambda_.1} parent=1 // pred_check_branch
      %31 = sbr.rel (0) target = $region13
    $region12: #{_lambda_.1} parent=1 // pred_region
      %s33 = ssub.s32 16, 16
      %34 = vsyncadd [#allocation5], %s33
      %s36 = sshll.u32 [#allocation4], 4
      %s37 = int_to_ptr.vmem [resolvable:$true] %s36
      %39 = dma.hbm_to_vmem [thread:$0]  %s2, 16, %s37, [#allocation5]
    $region13: #{_lambda_.1} parent=1 // pred_fallthru
      _
    // Predicated region
    $region14: #{_lambda_.1} parent=1 // pred_check
      _
    $region15: #{_lambda_.1} parent=1 // pred_check_branch
      %41 = sbr.rel (0) target = $region17
    $region16: #{_lambda_.1} parent=1 // pred_region
      %s43 = ssub.s32 12288, 12288
      %44 = vsyncadd [#allocation5], %s43
      %s45 = sshll.u32 [#allocation6], 4
      %s46 = int_to_ptr.vmem [resolvable:$true] %s45
      %51 = dma.hbm_to_vmem [thread:$0]  %s3, 12288, %s46, [#allocation5], 1024, 1024, 64
    $region17: #{_lambda_.1} parent=1 // pred_fallthru
      _
    // Predicated region
    $region18: #{_lambda_.1} parent=1 // pred_check
      _
    $region19: #{_lambda_.1} parent=1 // pred_check_branch
      %53 = sbr.rel (0) target = $region21
    $region20: #{_lambda_.1} parent=1 // pred_region
      %s55 = ssub.s32 128, 128
      %56 = vsyncadd [#allocation8], %s55
      %s58 = sshll.u32 [#allocation7], 4
      %s59 = int_to_ptr.vmem [resolvable:$true] %s58
      %61 = dma.hbm_to_vmem [thread:$0]  %s4, 128, %s59, [#allocation8]
    $region21: #{_lambda_.1} parent=1 // pred_fallthru
      _
    // Predicated region
    $region22: #{_lambda_.1} parent=1 // pred_check
      _
    $region23: #{_lambda_.1} parent=1 // pred_check_branch
      %63 = sbr.rel (0) target = $region25
    $region24: #{_lambda_.1} parent=1 // pred_region
      %s65 = ssub.s32 131072, 131072
      %66 = vsyncadd [#allocation8], %s65
      %s67 = sshll.u32 [#allocation9], 4
      %s68 = int_to_ptr.vmem [resolvable:$true] %s67
      %73 = dma.hbm_to_vmem [thread:$0]  %s5, 131072, %s68, [#allocation8], 1024, 1024, 64
    $region25: #{_lambda_.1} parent=1 // pred_fallthru
      _
    // Predicated region
    $region26: #{_lambda_.1} parent=1 // pred_check
      _
    $region27: #{_lambda_.1} parent=1 // pred_check_branch
      %75 = sbr.rel (0) target = $region29
    $region28: #{_lambda_.1} parent=1 // pred_region
      %s77 = ssub.s32 128, 128
      %78 = vsyncadd [#allocation11], %s77
      %s80 = sshll.u32 [#allocation10], 4
      %s81 = int_to_ptr.vmem [resolvable:$true] %s80
      %83 = dma.hbm_to_vmem [thread:$0]  %s6, 128, %s81, [#allocation11]
    $region29: #{_lambda_.1} parent=1 // pred_fallthru
      _
    // Predicated region
    $region30: #{_lambda_.1} parent=1 // pred_check
      _
    $region31: #{_lambda_.1} parent=1 // pred_check_branch
      %85 = sbr.rel (0) target = $region33
    $region32: #{_lambda_.1} parent=1 // pred_region
      %86 = dma.done [#allocation3], 512
    $region33: #{_lambda_.1} parent=1 // pred_fallthru
      _
    // Predicated region
    $region34: #{_lambda_.1} parent=1 // pred_check
      _
    $region35: #{_lambda_.1} parent=1 // pred_check_branch
      %88 = sbr.rel (0) target = $region37
    $region36: #{_lambda_.1} parent=1 // pred_region
      %89 = dma.done [#allocation5], 16
    $region37: #{_lambda_.1} parent=1 // pred_fallthru
      _
    // Predicated region
    $region38: #{_lambda_.1} parent=1 // pred_check
      _
    $region39: #{_lambda_.1} parent=1 // pred_check_branch
      %91 = sbr.rel (0) target = $region41
    $region40: #{_lambda_.1} parent=1 // pred_region
      %92 = dma.done [#allocation5], 12288
    $region41: #{_lambda_.1} parent=1 // pred_fallthru
      _
    // Predicated region
    $region42: #{_lambda_.1} parent=1 // pred_check
      _
    $region43: #{_lambda_.1} parent=1 // pred_check_branch
      %94 = sbr.rel (0) target = $region45
    $region44: #{_lambda_.1} parent=1 // pred_region
      %95 = dma.done [#allocation8], 128
    $region45: #{_lambda_.1} parent=1 // pred_fallthru
      _
    // Predicated region
    $region46: #{_lambda_.1} parent=1 // pred_check
      _
    $region47: #{_lambda_.1} parent=1 // pred_check_branch
      %97 = sbr.rel (0) target = $region49
    $region48: #{_lambda_.1} parent=1 // pred_region
      %98 = dma.done [#allocation8], 131072
    $region49: #{_lambda_.1} parent=1 // pred_fallthru
      _
    // Predicated region
    $region50: #{_lambda_.1} parent=1 // pred_check
      _
    $region51: #{_lambda_.1} parent=1 // pred_check_branch
      %100 = sbr.rel (0) target = $region53
    $region52: #{_lambda_.1} parent=1 // pred_region
      %101 = dma.done [#allocation11], 128
    $region53: #{_lambda_.1} parent=1 // pred_fallthru
      _
    %v102 = vld [vmem:[%s0] sm:$0xff]
    %v103 = vld [vmem:[#allocation2] sm:$0xff]
    %v104 = vld [vmem:[#allocation2 + $0x8] sm:$0xff]
    %v105 = vld [vmem:[#allocation2 + $0x10] sm:$0xff]
    %v106 = vld [vmem:[#allocation2 + $0x18] sm:$0xff]
    %v107 = vld [vmem:[#allocation4] sm:$0x1]
    %v109 = vlaneseq
    %v110 = vshrl.u32 %v109, 7
    %v111 = vsub.s32 0, %v110
    %v112 = vrot.slane %v107, %v111
    %vm114 = vcmask 261120
    %v116 = vsel %vm114, %v102, 0
    %118 = vmatprep.subr.mxu0 0.0
    %119 = vmatpush1.msra.mxu0 %v103
    %120 = vmatprep.subr.mxu0 0.0
    %121 = vmatpush1.msra.mxu0 %v104
    %122 = vmatprep.subr.mxu0 0.0
    %123 = vmatpush1.msra.mxu0 %v105
    %124 = vmatprep.subr.mxu0 0.0
    %125 = vmatpush1.msra.mxu0 %v106
    %126 = vmatprep.subr.mxu0 0.0
    %127 = vmatpush1.msra.mxu0 0.0
    %128 = vmatprep.subr.mxu0 0.0
    %129 = vmatpush1.msra.mxu0 0.0
    %130 = vmatprep.subr.mxu0 0.0
    %131 = vmatpush1.msra.mxu0 0.0
    %132 = vmatprep.subr.mxu0 0.0
    %133 = vmatpush1.msra.mxu0 0.0
    %134 = vmatprep.subr.mxu0 0.0
    %135 = vmatpush1.msra.mxu0 0.0
    %136 = vmatprep.subr.mxu0 0.0
    %137 = vmatpush1.msra.mxu0 0.0
    %138 = vmatprep.subr.mxu0 0.0
    %139 = vmatpush1.msra.mxu0 0.0
    %140 = vmatprep.subr.mxu0 0.0
    %141 = vmatpush1.msra.mxu0 0.0
    %142 = vmatprep.subr.mxu0 0.0
    %143 = vmatpush1.msra.mxu0 0.0
    %144 = vmatprep.subr.mxu0 0.0
    %145 = vmatpush1.msra.mxu0 0.0
    %146 = vmatprep.subr.mxu0 0.0
    %147 = vmatpush1.msra.mxu0 0.0
    %148 = vmatprep.subr.mxu0 0.0
    %149 = vmatpush1.msra.mxu0 0.0
    %150 = vmatprep.subr.mxu0 0.0
    %151 = vmatpush1.msra.mxu0 0.0
    %152 = vmatprep.subr.mxu0 0.0
    %153 = vmatpush1.msra.mxu0 0.0
    %154 = vmatprep.subr.mxu0 0.0
    %155 = vmatpush1.msra.mxu0 0.0
    %156 = vmatprep.subr.mxu0 0.0
    %157 = vmatpush1.msra.mxu0 0.0
    %158 = vmatprep.subr.mxu0 0.0
    %159 = vmatpush1.msra.mxu0 0.0
    %160 = vmatprep.subr.mxu0 0.0
    %161 = vmatpush1.msra.mxu0 0.0
    %162 = vmatprep.subr.mxu0 0.0
    %163 = vmatpush1.msra.mxu0 0.0
    %164 = vmatprep.subr.mxu0 0.0
    %165 = vmatpush1.msra.mxu0 0.0
    %166 = vmatprep.subr.mxu0 0.0
    %167 = vmatpush1.msra.mxu0 0.0
    %168 = vmatprep.subr.mxu0 0.0
    %169 = vmatpush1.msra.mxu0 0.0
    %170 = vmatprep.subr.mxu0 0.0
    %171 = vmatpush1.msra.mxu0 0.0
    %172 = vmatprep.subr.mxu0 0.0
    %173 = vmatpush1.msra.mxu0 0.0
    %174 = vmatprep.subr.mxu0 0.0
    %175 = vmatpush1.msra.mxu0 0.0
    %176 = vmatprep.subr.mxu0 0.0
    %177 = vmatpush1.msra.mxu0 0.0
    %178 = vmatprep.subr.mxu0 0.0
    %179 = vmatpush1.msra.mxu0 0.0
    %180 = vmatprep.subr.mxu0 0.0
    %181 = vmatpush1.msra.mxu0 0.0
    %182 = vmatprep.mubr.f32.mxu0 0.0
    %183 = vmatmul.mubr.f32.gmra.mrb[0].mxu0 %v116
    %v184 = vpop.f32.mrb[0].mxu0
    %v185 = vadd.f32 %v112, %v184
    %v186 = vpop.f32.mrb[0].mxu0
    %187 = vdwg.mxu0
    %v188 = vmax.f32 %v185, 0.0
    %v189 = vld [vmem:[#allocation6] sm:$0xff]
    %v190 = vld [vmem:[#allocation6 + $0x8] sm:$0xff]
    %v191 = vld [vmem:[#allocation6 + $0x10] sm:$0xff]
    %v192 = vld [vmem:[#allocation6 + $0x18] sm:$0xff]
    %v193 = vld [vmem:[#allocation6 + $0x20] sm:$0xff]
    %v194 = vld [vmem:[#allocation6 + $0x28] sm:$0xff]
    %v195 = vld [vmem:[#allocation6 + $0x30] sm:$0xff]
    %v196 = vld [vmem:[#allocation6 + $0x38] sm:$0xff]
    %v197 = vld [vmem:[#allocation6 + $0x40] sm:$0xff]
    %v198 = vld [vmem:[#allocation6 + $0x48] sm:$0xff]
    %v199 = vld [vmem:[#allocation6 + $0x50] sm:$0xff]
    %v200 = vld [vmem:[#allocation6 + $0x58] sm:$0xff]
    %v201 = vld [vmem:[#allocation6 + $0x60] sm:$0xff]
    %v202 = vld [vmem:[#allocation6 + $0x68] sm:$0xff]
    %v203 = vld [vmem:[#allocation6 + $0x70] sm:$0xff]
    %v204 = vld [vmem:[#allocation6 + $0x78] sm:$0xff]
    %v205 = vld [vmem:[#allocation6 + $0x80] sm:$0xff]
    %v206 = vld [vmem:[#allocation6 + $0x88] sm:$0xff]
    %v207 = vld [vmem:[#allocation6 + $0x90] sm:$0xff]
    %v208 = vld [vmem:[#allocation6 + $0x98] sm:$0xff]
    %v209 = vld [vmem:[#allocation6 + $0xa0] sm:$0xff]
    %v210 = vld [vmem:[#allocation6 + $0xa8] sm:$0xff]
    %v211 = vld [vmem:[#allocation6 + $0xb0] sm:$0xff]
    %v212 = vld [vmem:[#allocation6 + $0xb8] sm:$0xff]
    %v213 = vld [vmem:[#allocation6 + $0xc0] sm:$0xff]
    %v214 = vld [vmem:[#allocation6 + $0xc8] sm:$0xff]
    %v215 = vld [vmem:[#allocation6 + $0xd0] sm:$0xff]
    %v216 = vld [vmem:[#allocation6 + $0xd8] sm:$0xff]
    %v217 = vld [vmem:[#allocation6 + $0xe0] sm:$0xff]
    %v218 = vld [vmem:[#allocation6 + $0xe8] sm:$0xff]
    %v219 = vld [vmem:[#allocation6 + $0xf0] sm:$0xff]
    %v220 = vld [vmem:[#allocation6 + $0xf8] sm:$0xff]
    %v221 = vld [vmem:[#allocation6 + $0x100] sm:$0xff]
    %v222 = vld [vmem:[#allocation6 + $0x108] sm:$0xff]
    %v223 = vld [vmem:[#allocation6 + $0x110] sm:$0xff]
    %v224 = vld [vmem:[#allocation6 + $0x118] sm:$0xff]
    %v225 = vld [vmem:[#allocation6 + $0x120] sm:$0xff]
    %v226 = vld [vmem:[#allocation6 + $0x128] sm:$0xff]
    %v227 = vld [vmem:[#allocation6 + $0x130] sm:$0xff]
    %v228 = vld [vmem:[#allocation6 + $0x138] sm:$0xff]
    %v229 = vld [vmem:[#allocation6 + $0x140] sm:$0xff]
    %v230 = vld [vmem:[#allocation6 + $0x148] sm:$0xff]
    %v231 = vld [vmem:[#allocation6 + $0x150] sm:$0xff]
    %v232 = vld [vmem:[#allocation6 + $0x158] sm:$0xff]
    %v233 = vld [vmem:[#allocation6 + $0x160] sm:$0xff]
    %v234 = vld [vmem:[#allocation6 + $0x168] sm:$0xff]
    %v235 = vld [vmem:[#allocation6 + $0x170] sm:$0xff]
    %v236 = vld [vmem:[#allocation6 + $0x178] sm:$0xff]
    %v237 = vld [vmem:[#allocation6 + $0x180] sm:$0xff]
    %v238 = vld [vmem:[#allocation6 + $0x188] sm:$0xff]
    %v239 = vld [vmem:[#allocation6 + $0x190] sm:$0xff]
    %v240 = vld [vmem:[#allocation6 + $0x198] sm:$0xff]
    %v241 = vld [vmem:[#allocation6 + $0x1a0] sm:$0xff]
    %v242 = vld [vmem:[#allocation6 + $0x1a8] sm:$0xff]
    %v243 = vld [vmem:[#allocation6 + $0x1b0] sm:$0xff]
    %v244 = vld [vmem:[#allocation6 + $0x1b8] sm:$0xff]
    %v245 = vld [vmem:[#allocation6 + $0x1c0] sm:$0xff]
    %v246 = vld [vmem:[#allocation6 + $0x1c8] sm:$0xff]
    %v247 = vld [vmem:[#allocation6 + $0x1d0] sm:$0xff]
    %v248 = vld [vmem:[#allocation6 + $0x1d8] sm:$0xff]
    %v249 = vld [vmem:[#allocation6 + $0x1e0] sm:$0xff]
    %v250 = vld [vmem:[#allocation6 + $0x1e8] sm:$0xff]
    %v251 = vld [vmem:[#allocation6 + $0x1f0] sm:$0xff]
    %v252 = vld [vmem:[#allocation6 + $0x1f8] sm:$0xff]
    %v253 = vld [vmem:[#allocation6 + $0x200] sm:$0xff]
    %v254 = vld [vmem:[#allocation6 + $0x208] sm:$0xff]
    %v255 = vld [vmem:[#allocation6 + $0x210] sm:$0xff]
    %v256 = vld [vmem:[#allocation6 + $0x218] sm:$0xff]
    %v257 = vld [vmem:[#allocation6 + $0x220] sm:$0xff]
    %v258 = vld [vmem:[#allocation6 + $0x228] sm:$0xff]
    %v259 = vld [vmem:[#allocation6 + $0x230] sm:$0xff]
    %v260 = vld [vmem:[#allocation6 + $0x238] sm:$0xff]
    %v261 = vld [vmem:[#allocation6 + $0x240] sm:$0xff]
    %v262 = vld [vmem:[#allocation6 + $0x248] sm:$0xff]
    %v263 = vld [vmem:[#allocation6 + $0x250] sm:$0xff]
    %v264 = vld [vmem:[#allocation6 + $0x258] sm:$0xff]
    %v265 = vld [vmem:[#allocation6 + $0x260] sm:$0xff]
    %v266 = vld [vmem:[#allocation6 + $0x268] sm:$0xff]
    %v267 = vld [vmem:[#allocation6 + $0x270] sm:$0xff]
    %v268 = vld [vmem:[#allocation6 + $0x278] sm:$0xff]
    %v269 = vld [vmem:[#allocation6 + $0x280] sm:$0xff]
    %v270 = vld [vmem:[#allocation6 + $0x288] sm:$0xff]
    %v271 = vld [vmem:[#allocation6 + $0x290] sm:$0xff]
    %v272 = vld [vmem:[#allocation6 + $0x298] sm:$0xff]
    %v273 = vld [vmem:[#allocation6 + $0x2a0] sm:$0xff]
    %v274 = vld [vmem:[#allocation6 + $0x2a8] sm:$0xff]
    %v275 = vld [vmem:[#allocation6 + $0x2b0] sm:$0xff]
    %v276 = vld [vmem:[#allocation6 + $0x2b8] sm:$0xff]
    %v277 = vld [vmem:[#allocation6 + $0x2c0] sm:$0xff]
    %v278 = vld [vmem:[#allocation6 + $0x2c8] sm:$0xff]
    %v279 = vld [vmem:[#allocation6 + $0x2d0] sm:$0xff]
    %v280 = vld [vmem:[#allocation6 + $0x2d8] sm:$0xff]
    %v281 = vld [vmem:[#allocation6 + $0x2e0] sm:$0xff]
    %v282 = vld [vmem:[#allocation6 + $0x2e8] sm:$0xff]
    %v283 = vld [vmem:[#allocation6 + $0x2f0] sm:$0xff]
    %v284 = vld [vmem:[#allocation6 + $0x2f8] sm:$0xff]
    %v285 = vld [vmem:[#allocation7] sm:$0xff]
    %v287 = vlaneseq
    %v288 = vshrl.u32 %v287, 7
    %v289 = vsub.s32 0, %v288
    %v290 = vrot.slane %v285, %v289
    %v291 = vlaneseq
    %v292 = vshrl.u32 %v291, 7
    %v293 = vsub.s32 1, %v292
    %v294 = vrot.slane %v285, %v293
    %v295 = vlaneseq
    %v296 = vshrl.u32 %v295, 7
    %v297 = vsub.s32 2, %v296
    %v298 = vrot.slane %v285, %v297
    %v299 = vlaneseq
    %v300 = vshrl.u32 %v299, 7
    %v301 = vsub.s32 3, %v300
    %v302 = vrot.slane %v285, %v301
    %v303 = vlaneseq
    %v304 = vshrl.u32 %v303, 7
    %v305 = vsub.s32 4, %v304
    %v306 = vrot.slane %v285, %v305
    %v307 = vlaneseq
    %v308 = vshrl.u32 %v307, 7
    %v309 = vsub.s32 5, %v308
    %v310 = vrot.slane %v285, %v309
    %v311 = vlaneseq
    %v312 = vshrl.u32 %v311, 7
    %v313 = vsub.s32 6, %v312
    %v314 = vrot.slane %v285, %v313
    %v315 = vlaneseq
    %v316 = vshrl.u32 %v315, 7
    %v317 = vsub.s32 7, %v316
    %v318 = vrot.slane %v285, %v317
    %vm327 = vcmask 785408
    %v329 = vsel %vm327, %v188, 0
    %331 = vmatprep.subr.mxu0 %v190
    %332 = vmatpush1.msra.mxu0 %v189
    %333 = vmatprep.subr.mxu0 %v198
    %334 = vmatpush1.msra.mxu0 %v197
    %335 = vmatprep.subr.mxu0 %v206
    %336 = vmatpush1.msra.mxu0 %v205
    %337 = vmatprep.subr.mxu0 %v214
    %338 = vmatpush1.msra.mxu0 %v213
    %339 = vmatprep.subr.mxu0 %v222
    %340 = vmatpush1.msra.mxu0 %v221
    %341 = vmatprep.subr.mxu0 %v230
    %342 = vmatpush1.msra.mxu0 %v229
    %343 = vmatprep.subr.mxu0 %v238
    %344 = vmatpush1.msra.mxu0 %v237
    %345 = vmatprep.subr.mxu0 %v246
    %346 = vmatpush1.msra.mxu0 %v245
    %347 = vmatprep.subr.mxu0 %v254
    %348 = vmatpush1.msra.mxu0 %v253
    %349 = vmatprep.subr.mxu0 %v262
    %350 = vmatpush1.msra.mxu0 %v261
    %351 = vmatprep.subr.mxu0 %v270
    %352 = vmatpush1.msra.mxu0 %v269
    %353 = vmatprep.subr.mxu0 %v278
    %354 = vmatpush1.msra.mxu0 %v277
    %355 = vmatprep.subr.mxu0 0.0
    %356 = vmatpush1.msra.mxu0 0.0
    %357 = vmatprep.subr.mxu0 0.0
    %358 = vmatpush1.msra.mxu0 0.0
    %359 = vmatprep.subr.mxu0 0.0
    %360 = vmatpush1.msra.mxu0 0.0
    %361 = vmatprep.subr.mxu0 0.0
    %362 = vmatpush1.msra.mxu0 0.0
    %363 = vmatprep.subr.mxu0 0.0
    %364 = vmatpush1.msra.mxu0 0.0
    %365 = vmatprep.subr.mxu0 0.0
    %366 = vmatpush1.msra.mxu0 0.0
    %367 = vmatprep.subr.mxu0 0.0
    %368 = vmatpush1.msra.mxu0 0.0
    %369 = vmatprep.subr.mxu0 0.0
    %370 = vmatpush1.msra.mxu0 0.0
    %371 = vmatprep.subr.mxu0 0.0
    %372 = vmatpush1.msra.mxu0 0.0
    %373 = vmatprep.subr.mxu0 0.0
    %374 = vmatpush1.msra.mxu0 0.0
    %375 = vmatprep.subr.mxu0 0.0
    %376 = vmatpush1.msra.mxu0 0.0
    %377 = vmatprep.subr.mxu0 0.0
    %378 = vmatpush1.msra.mxu0 0.0
    %379 = vmatprep.subr.mxu0 0.0
    %380 = vmatpush1.msra.mxu0 0.0
    %381 = vmatprep.subr.mxu0 0.0
    %382 = vmatpush1.msra.mxu0 0.0
    %383 = vmatprep.subr.mxu0 0.0
    %384 = vmatpush1.msra.mxu0 0.0
    %385 = vmatprep.subr.mxu0 0.0
    %386 = vmatpush1.msra.mxu0 0.0
    %387 = vmatprep.subr.mxu0 0.0
    %388 = vmatpush1.msra.mxu0 0.0
    %389 = vmatprep.subr.mxu0 0.0
    %390 = vmatpush1.msra.mxu0 0.0
    %391 = vmatprep.subr.mxu0 0.0
    %392 = vmatpush1.msra.mxu0 0.0
    %393 = vmatprep.subr.mxu0 0.0
    %394 = vmatpush1.msra.mxu0 0.0
    %395 = vmatprep.mubr.f32.mxu0 0.0
    %396 = vmatmul.mubr.f32.gmra.mrb[0].mxu0 %v329
    %v397 = vpop.f32.mrb[0].mxu0
    %v398 = vadd.f32 %v290, %v397
    %v399 = vpop.f32.mrb[0].mxu0
    %v400 = vadd.f32 %v294, %v399
    %401 = vdwg.mxu0
    %402 = vmatprep.subr.mxu0 %v192
    %403 = vmatpush1.msra.mxu0 %v191
    %404 = vmatprep.subr.mxu0 %v200
    %405 = vmatpush1.msra.mxu0 %v199
    %406 = vmatprep.subr.mxu0 %v208
    %407 = vmatpush1.msra.mxu0 %v207
    %408 = vmatprep.subr.mxu0 %v216
    %409 = vmatpush1.msra.mxu0 %v215
    %410 = vmatprep.subr.mxu0 %v224
    %411 = vmatpush1.msra.mxu0 %v223
    %412 = vmatprep.subr.mxu0 %v232
    %413 = vmatpush1.msra.mxu0 %v231
    %414 = vmatprep.subr.mxu0 %v240
    %415 = vmatpush1.msra.mxu0 %v239
    %416 = vmatprep.subr.mxu0 %v248
    %417 = vmatpush1.msra.mxu0 %v247
    %418 = vmatprep.subr.mxu0 %v256
    %419 = vmatpush1.msra.mxu0 %v255
    %420 = vmatprep.subr.mxu0 %v264
    %421 = vmatpush1.msra.mxu0 %v263
    %422 = vmatprep.subr.mxu0 %v272
    %423 = vmatpush1.msra.mxu0 %v271
    %424 = vmatprep.subr.mxu0 %v280
    %425 = vmatpush1.msra.mxu0 %v279
    %426 = vmatprep.subr.mxu0 0.0
    %427 = vmatpush1.msra.mxu0 0.0
    %428 = vmatprep.subr.mxu0 0.0
    %429 = vmatpush1.msra.mxu0 0.0
    %430 = vmatprep.subr.mxu0 0.0
    %431 = vmatpush1.msra.mxu0 0.0
    %432 = vmatprep.subr.mxu0 0.0
    %433 = vmatpush1.msra.mxu0 0.0
    %434 = vmatprep.subr.mxu0 0.0
    %435 = vmatpush1.msra.mxu0 0.0
    %436 = vmatprep.subr.mxu0 0.0
    %437 = vmatpush1.msra.mxu0 0.0
    %438 = vmatprep.subr.mxu0 0.0
    %439 = vmatpush1.msra.mxu0 0.0
    %440 = vmatprep.subr.mxu0 0.0
    %441 = vmatpush1.msra.mxu0 0.0
    %442 = vmatprep.subr.mxu0 0.0
    %443 = vmatpush1.msra.mxu0 0.0
    %444 = vmatprep.subr.mxu0 0.0
    %445 = vmatpush1.msra.mxu0 0.0
    %446 = vmatprep.subr.mxu0 0.0
    %447 = vmatpush1.msra.mxu0 0.0
    %448 = vmatprep.subr.mxu0 0.0
    %449 = vmatpush1.msra.mxu0 0.0
    %450 = vmatprep.subr.mxu0 0.0
    %451 = vmatpush1.msra.mxu0 0.0
    %452 = vmatprep.subr.mxu0 0.0
    %453 = vmatpush1.msra.mxu0 0.0
    %454 = vmatprep.subr.mxu0 0.0
    %455 = vmatpush1.msra.mxu0 0.0
    %456 = vmatprep.subr.mxu0 0.0
    %457 = vmatpush1.msra.mxu0 0.0
    %458 = vmatprep.subr.mxu0 0.0
    %459 = vmatpush1.msra.mxu0 0.0
    %460 = vmatprep.subr.mxu0 0.0
    %461 = vmatpush1.msra.mxu0 0.0
    %462 = vmatprep.subr.mxu0 0.0
    %463 = vmatpush1.msra.mxu0 0.0
    %464 = vmatprep.subr.mxu0 0.0
    %465 = vmatpush1.msra.mxu0 0.0
    %466 = vmatprep.mubr.f32.mxu0 0.0
    %467 = vmatmul.mubr.f32.gmra.mrb[0].mxu0 %v329
    %v468 = vpop.f32.mrb[0].mxu0
    %v469 = vadd.f32 %v298, %v468
    %v470 = vpop.f32.mrb[0].mxu0
    %v471 = vadd.f32 %v302, %v470
    %472 = vdwg.mxu0
    %473 = vmatprep.subr.mxu0 %v194
    %474 = vmatpush1.msra.mxu0 %v193
    %475 = vmatprep.subr.mxu0 %v202
    %476 = vmatpush1.msra.mxu0 %v201
    %477 = vmatprep.subr.mxu0 %v210
    %478 = vmatpush1.msra.mxu0 %v209
    %479 = vmatprep.subr.mxu0 %v218
    %480 = vmatpush1.msra.mxu0 %v217
    %481 = vmatprep.subr.mxu0 %v226
    %482 = vmatpush1.msra.mxu0 %v225
    %483 = vmatprep.subr.mxu0 %v234
    %484 = vmatpush1.msra.mxu0 %v233
    %485 = vmatprep.subr.mxu0 %v242
    %486 = vmatpush1.msra.mxu0 %v241
    %487 = vmatprep.subr.mxu0 %v250
    %488 = vmatpush1.msra.mxu0 %v249
    %489 = vmatprep.subr.mxu0 %v258
    %490 = vmatpush1.msra.mxu0 %v257
    %491 = vmatprep.subr.mxu0 %v266
    %492 = vmatpush1.msra.mxu0 %v265
    %493 = vmatprep.subr.mxu0 %v274
    %494 = vmatpush1.msra.mxu0 %v273
    %495 = vmatprep.subr.mxu0 %v282
    %496 = vmatpush1.msra.mxu0 %v281
    %497 = vmatprep.subr.mxu0 0.0
    %498 = vmatpush1.msra.mxu0 0.0
    %499 = vmatprep.subr.mxu0 0.0
    %500 = vmatpush1.msra.mxu0 0.0
    %501 = vmatprep.subr.mxu0 0.0
    %502 = vmatpush1.msra.mxu0 0.0
    %503 = vmatprep.subr.mxu0 0.0
    %504 = vmatpush1.msra.mxu0 0.0
    %505 = vmatprep.subr.mxu0 0.0
    %506 = vmatpush1.msra.mxu0 0.0
    %507 = vmatprep.subr.mxu0 0.0
    %508 = vmatpush1.msra.mxu0 0.0
    %509 = vmatprep.subr.mxu0 0.0
    %510 = vmatpush1.msra.mxu0 0.0
    %511 = vmatprep.subr.mxu0 0.0
    %512 = vmatpush1.msra.mxu0 0.0
    %513 = vmatprep.subr.mxu0 0.0
    %514 = vmatpush1.msra.mxu0 0.0
    %515 = vmatprep.subr.mxu0 0.0
    %516 = vmatpush1.msra.mxu0 0.0
    %517 = vmatprep.subr.mxu0 0.0
    %518 = vmatpush1.msra.mxu0 0.0
    %519 = vmatprep.subr.mxu0 0.0
    %520 = vmatpush1.msra.mxu0 0.0
    %521 = vmatprep.subr.mxu0 0.0
    %522 = vmatpush1.msra.mxu0 0.0
    %523 = vmatprep.subr.mxu0 0.0
    %524 = vmatpush1.msra.mxu0 0.0
    %525 = vmatprep.subr.mxu0 0.0
    %526 = vmatpush1.msra.mxu0 0.0
    %527 = vmatprep.subr.mxu0 0.0
    %528 = vmatpush1.msra.mxu0 0.0
    %529 = vmatprep.subr.mxu0 0.0
    %530 = vmatpush1.msra.mxu0 0.0
    %531 = vmatprep.subr.mxu0 0.0
    %532 = vmatpush1.msra.mxu0 0.0
    %533 = vmatprep.subr.mxu0 0.0
    %534 = vmatpush1.msra.mxu0 0.0
    %535 = vmatprep.subr.mxu0 0.0
    %536 = vmatpush1.msra.mxu0 0.0
    %537 = vmatprep.mubr.f32.mxu0 0.0
    %538 = vmatmul.mubr.f32.gmra.mrb[0].mxu0 %v329
    %v539 = vpop.f32.mrb[0].mxu0
    %v540 = vadd.f32 %v306, %v539
    %v541 = vpop.f32.mrb[0].mxu0
    %v542 = vadd.f32 %v310, %v541
    %543 = vdwg.mxu0
    %544 = vmatprep.subr.mxu0 %v196
    %545 = vmatpush1.msra.mxu0 %v195
    %546 = vmatprep.subr.mxu0 %v204
    %547 = vmatpush1.msra.mxu0 %v203
    %548 = vmatprep.subr.mxu0 %v212
    %549 = vmatpush1.msra.mxu0 %v211
    %550 = vmatprep.subr.mxu0 %v220
    %551 = vmatpush1.msra.mxu0 %v219
    %552 = vmatprep.subr.mxu0 %v228
    %553 = vmatpush1.msra.mxu0 %v227
    %554 = vmatprep.subr.mxu0 %v236
    %555 = vmatpush1.msra.mxu0 %v235
    %556 = vmatprep.subr.mxu0 %v244
    %557 = vmatpush1.msra.mxu0 %v243
    %558 = vmatprep.subr.mxu0 %v252
    %559 = vmatpush1.msra.mxu0 %v251
    %560 = vmatprep.subr.mxu0 %v260
    %561 = vmatpush1.msra.mxu0 %v259
    %562 = vmatprep.subr.mxu0 %v268
    %563 = vmatpush1.msra.mxu0 %v267
    %564 = vmatprep.subr.mxu0 %v276
    %565 = vmatpush1.msra.mxu0 %v275
    %566 = vmatprep.subr.mxu0 %v284
    %567 = vmatpush1.msra.mxu0 %v283
    %568 = vmatprep.subr.mxu0 0.0
    %569 = vmatpush1.msra.mxu0 0.0
    %570 = vmatprep.subr.mxu0 0.0
    %571 = vmatpush1.msra.mxu0 0.0
    %572 = vmatprep.subr.mxu0 0.0
    %573 = vmatpush1.msra.mxu0 0.0
    %574 = vmatprep.subr.mxu0 0.0
    %575 = vmatpush1.msra.mxu0 0.0
    %576 = vmatprep.subr.mxu0 0.0
    %577 = vmatpush1.msra.mxu0 0.0
    %578 = vmatprep.subr.mxu0 0.0
    %579 = vmatpush1.msra.mxu0 0.0
    %580 = vmatprep.subr.mxu0 0.0
    %581 = vmatpush1.msra.mxu0 0.0
    %582 = vmatprep.subr.mxu0 0.0
    %583 = vmatpush1.msra.mxu0 0.0
    %584 = vmatprep.subr.mxu0 0.0
    %585 = vmatpush1.msra.mxu0 0.0
    %586 = vmatprep.subr.mxu0 0.0
    %587 = vmatpush1.msra.mxu0 0.0
    %588 = vmatprep.subr.mxu0 0.0
    %589 = vmatpush1.msra.mxu0 0.0
    %590 = vmatprep.subr.mxu0 0.0
    %591 = vmatpush1.msra.mxu0 0.0
    %592 = vmatprep.subr.mxu0 0.0
    %593 = vmatpush1.msra.mxu0 0.0
    %594 = vmatprep.subr.mxu0 0.0
    %595 = vmatpush1.msra.mxu0 0.0
    %596 = vmatprep.subr.mxu0 0.0
    %597 = vmatpush1.msra.mxu0 0.0
    %598 = vmatprep.subr.mxu0 0.0
    %599 = vmatpush1.msra.mxu0 0.0
    %600 = vmatprep.subr.mxu0 0.0
    %601 = vmatpush1.msra.mxu0 0.0
    %602 = vmatprep.subr.mxu0 0.0
    %603 = vmatpush1.msra.mxu0 0.0
    %604 = vmatprep.subr.mxu0 0.0
    %605 = vmatpush1.msra.mxu0 0.0
    %606 = vmatprep.subr.mxu0 0.0
    %607 = vmatpush1.msra.mxu0 0.0
    %608 = vmatprep.mubr.f32.mxu0 0.0
    %609 = vmatmul.mubr.f32.gmra.mrb[0].mxu0 %v329
    %v610 = vpop.f32.mrb[0].mxu0
    %v611 = vadd.f32 %v314, %v610
    %v612 = vpop.f32.mrb[0].mxu0
    %v613 = vadd.f32 %v318, %v612
    %614 = vdwg.mxu0
    %v615 = vmax.f32 %v398, 0.0
    %v616 = vmax.f32 %v400, 0.0
    %v617 = vmax.f32 %v469, 0.0
    %v618 = vmax.f32 %v471, 0.0
    %v619 = vmax.f32 %v540, 0.0
    %v620 = vmax.f32 %v542, 0.0
    %v621 = vmax.f32 %v611, 0.0
    %v622 = vmax.f32 %v613, 0.0
    %v623 = vld [vmem:[#allocation9] sm:$0xff]
    %v624 = vld [vmem:[#allocation9 + $0x8] sm:$0xff]
    %v625 = vld [vmem:[#allocation9 + $0x10] sm:$0xff]
    %v626 = vld [vmem:[#allocation9 + $0x18] sm:$0xff]
    %v627 = vld [vmem:[#allocation9 + $0x20] sm:$0xff]
    %v628 = vld [vmem:[#allocation9 + $0x28] sm:$0xff]
    %v629 = vld [vmem:[#allocation9 + $0x30] sm:$0xff]
    %v630 = vld [vmem:[#allocation9 + $0x38] sm:$0xff]
    %v631 = vld [vmem:[#allocation9 + $0x40] sm:$0xff]
    %v632 = vld [vmem:[#allocation9 + $0x48] sm:$0xff]
    %v633 = vld [vmem:[#allocation9 + $0x50] sm:$0xff]
    %v634 = vld [vmem:[#allocation9 + $0x58] sm:$0xff]
    %v635 = vld [vmem:[#allocation9 + $0x60] sm:$0xff]
    %v636 = vld [vmem:[#allocation9 + $0x68] sm:$0xff]
    %v637 = vld [vmem:[#allocation9 + $0x70] sm:$0xff]
    %v638 = vld [vmem:[#allocation9 + $0x78] sm:$0xff]
    %v639 = vld [vmem:[#allocation9 + $0x80] sm:$0xff]
    %v640 = vld [vmem:[#allocation9 + $0x88] sm:$0xff]
    %v641 = vld [vmem:[#allocation9 + $0x90] sm:$0xff]
    %v642 = vld [vmem:[#allocation9 + $0x98] sm:$0xff]
    %v643 = vld [vmem:[#allocation9 + $0xa0] sm:$0xff]
    %v644 = vld [vmem:[#allocation9 + $0xa8] sm:$0xff]
    %v645 = vld [vmem:[#allocation9 + $0xb0] sm:$0xff]
    %v646 = vld [vmem:[#allocation9 + $0xb8] sm:$0xff]
    %v647 = vld [vmem:[#allocation9 + $0xc0] sm:$0xff]
    %v648 = vld [vmem:[#allocation9 + $0xc8] sm:$0xff]
    %v649 = vld [vmem:[#allocation9 + $0xd0] sm:$0xff]
    %v650 = vld [vmem:[#allocation9 + $0xd8] sm:$0xff]
    %v651 = vld [vmem:[#allocation9 + $0xe0] sm:$0xff]
    %v652 = vld [vmem:[#allocation9 + $0xe8] sm:$0xff]
    %v653 = vld [vmem:[#allocation9 + $0xf0] sm:$0xff]
    %v654 = vld [vmem:[#allocation9 + $0xf8] sm:$0xff]
    %v655 = vld [vmem:[#allocation9 + $0x100] sm:$0xff]
    %v656 = vld [vmem:[#allocation9 + $0x108] sm:$0xff]
    %v657 = vld [vmem:[#allocation9 + $0x110] sm:$0xff]
    %v658 = vld [vmem:[#allocation9 + $0x118] sm:$0xff]
    %v659 = vld [vmem:[#allocation9 + $0x120] sm:$0xff]
    %v660 = vld [vmem:[#allocation9 + $0x128] sm:$0xff]
    %v661 = vld [vmem:[#allocation9 + $0x130] sm:$0xff]
    %v662 = vld [vmem:[#allocation9 + $0x138] sm:$0xff]
    %v663 = vld [vmem:[#allocation9 + $0x140] sm:$0xff]
    %v664 = vld [vmem:[#allocation9 + $0x148] sm:$0xff]
    %v665 = vld [vmem:[#allocation9 + $0x150] sm:$0xff]
    %v666 = vld [vmem:[#allocation9 + $0x158] sm:$0xff]
    %v667 = vld [vmem:[#allocation9 + $0x160] sm:$0xff]
    %v668 = vld [vmem:[#allocation9 + $0x168] sm:$0xff]
    %v669 = vld [vmem:[#allocation9 + $0x170] sm:$0xff]
    %v670 = vld [vmem:[#allocation9 + $0x178] sm:$0xff]
    %v671 = vld [vmem:[#allocation9 + $0x180] sm:$0xff]
    %v672 = vld [vmem:[#allocation9 + $0x188] sm:$0xff]
    %v673 = vld [vmem:[#allocation9 + $0x190] sm:$0xff]
    %v674 = vld [vmem:[#allocation9 + $0x198] sm:$0xff]
    %v675 = vld [vmem:[#allocation9 + $0x1a0] sm:$0xff]
    %v676 = vld [vmem:[#allocation9 + $0x1a8] sm:$0xff]
    %v677 = vld [vmem:[#allocation9 + $0x1b0] sm:$0xff]
    %v678 = vld [vmem:[#allocation9 + $0x1b8] sm:$0xff]
    %v679 = vld [vmem:[#allocation9 + $0x1c0] sm:$0xff]
    %v680 = vld [vmem:[#allocation9 + $0x1c8] sm:$0xff]
    %v681 = vld [vmem:[#allocation9 + $0x1d0] sm:$0xff]
    %v682 = vld [vmem:[#allocation9 + $0x1d8] sm:$0xff]
    %v683 = vld [vmem:[#allocation9 + $0x1e0] sm:$0xff]
    %v684 = vld [vmem:[#allocation9 + $0x1e8] sm:$0xff]
    %v685 = vld [vmem:[#allocation9 + $0x1f0] sm:$0xff]
    %v686 = vld [vmem:[#allocation9 + $0x1f8] sm:$0xff]
    %v687 = vld [vmem:[#allocation9 + $0x200] sm:$0xff]
    %v688 = vld [vmem:[#allocation9 + $0x208] sm:$0xff]
    %v689 = vld [vmem:[#allocation9 + $0x210] sm:$0xff]
    %v690 = vld [vmem:[#allocation9 + $0x218] sm:$0xff]
    %v691 = vld [vmem:[#allocation9 + $0x220] sm:$0xff]
    %v692 = vld [vmem:[#allocation9 + $0x228] sm:$0xff]
    %v693 = vld [vmem:[#allocation9 + $0x230] sm:$0xff]
    %v694 = vld [vmem:[#allocation9 + $0x238] sm:$0xff]
    %v695 = vld [vmem:[#allocation9 + $0x240] sm:$0xff]
    %v696 = vld [vmem:[#allocation9 + $0x248] sm:$0xff]
    %v697 = vld [vmem:[#allocation9 + $0x250] sm:$0xff]
    %v698 = vld [vmem:[#allocation9 + $0x258] sm:$0xff]
    %v699 = vld [vmem:[#allocation9 + $0x260] sm:$0xff]
    %v700 = vld [vmem:[#allocation9 + $0x268] sm:$0xff]
    %v701 = vld [vmem:[#allocation9 + $0x270] sm:$0xff]
    %v702 = vld [vmem:[#allocation9 + $0x278] sm:$0xff]
    %v703 = vld [vmem:[#allocation9 + $0x280] sm:$0xff]
    %v704 = vld [vmem:[#allocation9 + $0x288] sm:$0xff]
    %v705 = vld [vmem:[#allocation9 + $0x290] sm:$0xff]
    %v706 = vld [vmem:[#allocation9 + $0x298] sm:$0xff]
    %v707 = vld [vmem:[#allocation9 + $0x2a0] sm:$0xff]
    %v708 = vld [vmem:[#allocation9 + $0x2a8] sm:$0xff]
    %v709 = vld [vmem:[#allocation9 + $0x2b0] sm:$0xff]
    %v710 = vld [vmem:[#allocation9 + $0x2b8] sm:$0xff]
    %v711 = vld [vmem:[#allocation9 + $0x2c0] sm:$0xff]
    %v712 = vld [vmem:[#allocation9 + $0x2c8] sm:$0xff]
    %v713 = vld [vmem:[#allocation9 + $0x2d0] sm:$0xff]
    %v714 = vld [vmem:[#allocation9 + $0x2d8] sm:$0xff]
    %v715 = vld [vmem:[#allocation9 + $0x2e0] sm:$0xff]
    %v716 = vld [vmem:[#allocation9 + $0x2e8] sm:$0xff]
    %v717 = vld [vmem:[#allocation9 + $0x2f0] sm:$0xff]
    %v718 = vld [vmem:[#allocation9 + $0x2f8] sm:$0xff]
    %v719 = vld [vmem:[#allocation9 + $0x300] sm:$0xff]
    %v720 = vld [vmem:[#allocation9 + $0x308] sm:$0xff]
    %v721 = vld [vmem:[#allocation9 + $0x310] sm:$0xff]
    %v722 = vld [vmem:[#allocation9 + $0x318] sm:$0xff]
    %v723 = vld [vmem:[#allocation9 + $0x320] sm:$0xff]
    %v724 = vld [vmem:[#allocation9 + $0x328] sm:$0xff]
    %v725 = vld [vmem:[#allocation9 + $0x330] sm:$0xff]
    %v726 = vld [vmem:[#allocation9 + $0x338] sm:$0xff]
    %v727 = vld [vmem:[#allocation9 + $0x340] sm:$0xff]
    %v728 = vld [vmem:[#allocation9 + $0x348] sm:$0xff]
    %v729 = vld [vmem:[#allocation9 + $0x350] sm:$0xff]
    %v730 = vld [vmem:[#allocation9 + $0x358] sm:$0xff]
    %v731 = vld [vmem:[#allocation9 + $0x360] sm:$0xff]
    %v732 = vld [vmem:[#allocation9 + $0x368] sm:$0xff]
    %v733 = vld [vmem:[#allocation9 + $0x370] sm:$0xff]
    %v734 = vld [vmem:[#allocation9 + $0x378] sm:$0xff]
    %v735 = vld [vmem:[#allocation9 + $0x380] sm:$0xff]
    %v736 = vld [vmem:[#allocation9 + $0x388] sm:$0xff]
    %v737 = vld [vmem:[#allocation9 + $0x390] sm:$0xff]
    %v738 = vld [vmem:[#allocation9 + $0x398] sm:$0xff]
    %v739 = vld [vmem:[#allocation9 + $0x3a0] sm:$0xff]
    %v740 = vld [vmem:[#allocation9 + $0x3a8] sm:$0xff]
    %v741 = vld [vmem:[#allocation9 + $0x3b0] sm:$0xff]
    %v742 = vld [vmem:[#allocation9 + $0x3b8] sm:$0xff]
    %v743 = vld [vmem:[#allocation9 + $0x3c0] sm:$0xff]
    %v744 = vld [vmem:[#allocation9 + $0x3c8] sm:$0xff]
    %v745 = vld [vmem:[#allocation9 + $0x3d0] sm:$0xff]
    %v746 = vld [vmem:[#allocation9 + $0x3d8] sm:$0xff]
    %v747 = vld [vmem:[#allocation9 + $0x3e0] sm:$0xff]
    %v748 = vld [vmem:[#allocation9 + $0x3e8] sm:$0xff]
    %v749 = vld [vmem:[#allocation9 + $0x3f0] sm:$0xff]
    %v750 = vld [vmem:[#allocation9 + $0x3f8] sm:$0xff]
    %v751 = vld [vmem:[#allocation9 + $0x400] sm:$0xff]
    %v752 = vld [vmem:[#allocation9 + $0x408] sm:$0xff]
    %v753 = vld [vmem:[#allocation9 + $0x410] sm:$0xff]
    %v754 = vld [vmem:[#allocation9 + $0x418] sm:$0xff]
    %v755 = vld [vmem:[#allocation9 + $0x420] sm:$0xff]
    %v756 = vld [vmem:[#allocation9 + $0x428] sm:$0xff]
    %v757 = vld [vmem:[#allocation9 + $0x430] sm:$0xff]
    %v758 = vld [vmem:[#allocation9 + $0x438] sm:$0xff]
    %v759 = vld [vmem:[#allocation9 + $0x440] sm:$0xff]
    %v760 = vld [vmem:[#allocation9 + $0x448] sm:$0xff]
    %v761 = vld [vmem:[#allocation9 + $0x450] sm:$0xff]
    %v762 = vld [vmem:[#allocation9 + $0x458] sm:$0xff]
    %v763 = vld [vmem:[#allocation9 + $0x460] sm:$0xff]
    %v764 = vld [vmem:[#allocation9 + $0x468] sm:$0xff]
    %v765 = vld [vmem:[#allocation9 + $0x470] sm:$0xff]
    %v766 = vld [vmem:[#allocation9 + $0x478] sm:$0xff]
    %v767 = vld [vmem:[#allocation9 + $0x480] sm:$0xff]
    %v768 = vld [vmem:[#allocation9 + $0x488] sm:$0xff]
    %v769 = vld [vmem:[#allocation9 + $0x490] sm:$0xff]
    %v770 = vld [vmem:[#allocation9 + $0x498] sm:$0xff]
    %v771 = vld [vmem:[#allocation9 + $0x4a0] sm:$0xff]
    %v772 = vld [vmem:[#allocation9 + $0x4a8] sm:$0xff]
    %v773 = vld [vmem:[#allocation9 + $0x4b0] sm:$0xff]
    %v774 = vld [vmem:[#allocation9 + $0x4b8] sm:$0xff]
    %v775 = vld [vmem:[#allocation9 + $0x4c0] sm:$0xff]
    %v776 = vld [vmem:[#allocation9 + $0x4c8] sm:$0xff]
    %v777 = vld [vmem:[#allocation9 + $0x4d0] sm:$0xff]
    %v778 = vld [vmem:[#allocation9 + $0x4d8] sm:$0xff]
    %v779 = vld [vmem:[#allocation9 + $0x4e0] sm:$0xff]
    %v780 = vld [vmem:[#allocation9 + $0x4e8] sm:$0xff]
    %v781 = vld [vmem:[#allocation9 + $0x4f0] sm:$0xff]
    %v782 = vld [vmem:[#allocation9 + $0x4f8] sm:$0xff]
    %v783 = vld [vmem:[#allocation9 + $0x500] sm:$0xff]
    %v784 = vld [vmem:[#allocation9 + $0x508] sm:$0xff]
    %v785 = vld [vmem:[#allocation9 + $0x510] sm:$0xff]
    %v786 = vld [vmem:[#allocation9 + $0x518] sm:$0xff]
    %v787 = vld [vmem:[#allocation9 + $0x520] sm:$0xff]
    %v788 = vld [vmem:[#allocation9 + $0x528] sm:$0xff]
    %v789 = vld [vmem:[#allocation9 + $0x530] sm:$0xff]
    %v790 = vld [vmem:[#allocation9 + $0x538] sm:$0xff]
    %v791 = vld [vmem:[#allocation9 + $0x540] sm:$0xff]
    %v792 = vld [vmem:[#allocation9 + $0x548] sm:$0xff]
    %v793 = vld [vmem:[#allocation9 + $0x550] sm:$0xff]
    %v794 = vld [vmem:[#allocation9 + $0x558] sm:$0xff]
    %v795 = vld [vmem:[#allocation9 + $0x560] sm:$0xff]
    %v796 = vld [vmem:[#allocation9 + $0x568] sm:$0xff]
    %v797 = vld [vmem:[#allocation9 + $0x570] sm:$0xff]
    %v798 = vld [vmem:[#allocation9 + $0x578] sm:$0xff]
    %v799 = vld [vmem:[#allocation9 + $0x580] sm:$0xff]
    %v800 = vld [vmem:[#allocation9 + $0x588] sm:$0xff]
    %v801 = vld [vmem:[#allocation9 + $0x590] sm:$0xff]
    %v802 = vld [vmem:[#allocation9 + $0x598] sm:$0xff]
    %v803 = vld [vmem:[#allocation9 + $0x5a0] sm:$0xff]
    %v804 = vld [vmem:[#allocation9 + $0x5a8] sm:$0xff]
    %v805 = vld [vmem:[#allocation9 + $0x5b0] sm:$0xff]
    %v806 = vld [vmem:[#allocation9 + $0x5b8] sm:$0xff]
    %v807 = vld [vmem:[#allocation9 + $0x5c0] sm:$0xff]
    %v808 = vld [vmem:[#allocation9 + $0x5c8] sm:$0xff]
    %v809 = vld [vmem:[#allocation9 + $0x5d0] sm:$0xff]
    %v810 = vld [vmem:[#allocation9 + $0x5d8] sm:$0xff]
    %v811 = vld [vmem:[#allocation9 + $0x5e0] sm:$0xff]
    %v812 = vld [vmem:[#allocation9 + $0x5e8] sm:$0xff]
    %v813 = vld [vmem:[#allocation9 + $0x5f0] sm:$0xff]
    %v814 = vld [vmem:[#allocation9 + $0x5f8] sm:$0xff]
    %v815 = vld [vmem:[#allocation9 + $0x600] sm:$0xff]
    %v816 = vld [vmem:[#allocation9 + $0x608] sm:$0xff]
    %v817 = vld [vmem:[#allocation9 + $0x610] sm:$0xff]
    %v818 = vld [vmem:[#allocation9 + $0x618] sm:$0xff]
    %v819 = vld [vmem:[#allocation9 + $0x620] sm:$0xff]
    %v820 = vld [vmem:[#allocation9 + $0x628] sm:$0xff]
    %v821 = vld [vmem:[#allocation9 + $0x630] sm:$0xff]
    %v822 = vld [vmem:[#allocation9 + $0x638] sm:$0xff]
    %v823 = vld [vmem:[#allocation9 + $0x640] sm:$0xff]
    %v824 = vld [vmem:[#allocation9 + $0x648] sm:$0xff]
    %v825 = vld [vmem:[#allocation9 + $0x650] sm:$0xff]
    %v826 = vld [vmem:[#allocation9 + $0x658] sm:$0xff]
    %v827 = vld [vmem:[#allocation9 + $0x660] sm:$0xff]
    %v828 = vld [vmem:[#allocation9 + $0x668] sm:$0xff]
    %v829 = vld [vmem:[#allocation9 + $0x670] sm:$0xff]
    %v830 = vld [vmem:[#allocation9 + $0x678] sm:$0xff]
    %v831 = vld [vmem:[#allocation9 + $0x680] sm:$0xff]
    %v832 = vld [vmem:[#allocation9 + $0x688] sm:$0xff]
    %v833 = vld [vmem:[#allocation9 + $0x690] sm:$0xff]
    %v834 = vld [vmem:[#allocation9 + $0x698] sm:$0xff]
    %v835 = vld [vmem:[#allocation9 + $0x6a0] sm:$0xff]
    %v836 = vld [vmem:[#allocation9 + $0x6a8] sm:$0xff]
    %v837 = vld [vmem:[#allocation9 + $0x6b0] sm:$0xff]
    %v838 = vld [vmem:[#allocation9 + $0x6b8] sm:$0xff]
    %v839 = vld [vmem:[#allocation9 + $0x6c0] sm:$0xff]
    %v840 = vld [vmem:[#allocation9 + $0x6c8] sm:$0xff]
    %v841 = vld [vmem:[#allocation9 + $0x6d0] sm:$0xff]
    %v842 = vld [vmem:[#allocation9 + $0x6d8] sm:$0xff]
    %v843 = vld [vmem:[#allocation9 + $0x6e0] sm:$0xff]
    %v844 = vld [vmem:[#allocation9 + $0x6e8] sm:$0xff]
    %v845 = vld [vmem:[#allocation9 + $0x6f0] sm:$0xff]
    %v846 = vld [vmem:[#allocation9 + $0x6f8] sm:$0xff]
    %v847 = vld [vmem:[#allocation9 + $0x700] sm:$0xff]
    %v848 = vld [vmem:[#allocation9 + $0x708] sm:$0xff]
    %v849 = vld [vmem:[#allocation9 + $0x710] sm:$0xff]
    %v850 = vld [vmem:[#allocation9 + $0x718] sm:$0xff]
    %v851 = vld [vmem:[#allocation9 + $0x720] sm:$0xff]
    %v852 = vld [vmem:[#allocation9 + $0x728] sm:$0xff]
    %v853 = vld [vmem:[#allocation9 + $0x730] sm:$0xff]
    %v854 = vld [vmem:[#allocation9 + $0x738] sm:$0xff]
    %v855 = vld [vmem:[#allocation9 + $0x740] sm:$0xff]
    %v856 = vld [vmem:[#allocation9 + $0x748] sm:$0xff]
    %v857 = vld [vmem:[#allocation9 + $0x750] sm:$0xff]
    %v858 = vld [vmem:[#allocation9 + $0x758] sm:$0xff]
    %v859 = vld [vmem:[#allocation9 + $0x760] sm:$0xff]
    %v860 = vld [vmem:[#allocation9 + $0x768] sm:$0xff]
    %v861 = vld [vmem:[#allocation9 + $0x770] sm:$0xff]
    %v862 = vld [vmem:[#allocation9 + $0x778] sm:$0xff]
    %v863 = vld [vmem:[#allocation9 + $0x780] sm:$0xff]
    %v864 = vld [vmem:[#allocation9 + $0x788] sm:$0xff]
    %v865 = vld [vmem:[#allocation9 + $0x790] sm:$0xff]
    %v866 = vld [vmem:[#allocation9 + $0x798] sm:$0xff]
    %v867 = vld [vmem:[#allocation9 + $0x7a0] sm:$0xff]
    %v868 = vld [vmem:[#allocation9 + $0x7a8] sm:$0xff]
    %v869 = vld [vmem:[#allocation9 + $0x7b0] sm:$0xff]
    %v870 = vld [vmem:[#allocation9 + $0x7b8] sm:$0xff]
    %v871 = vld [vmem:[#allocation9 + $0x7c0] sm:$0xff]
    %v872 = vld [vmem:[#allocation9 + $0x7c8] sm:$0xff]
    %v873 = vld [vmem:[#allocation9 + $0x7d0] sm:$0xff]
    %v874 = vld [vmem:[#allocation9 + $0x7d8] sm:$0xff]
    %v875 = vld [vmem:[#allocation9 + $0x7e0] sm:$0xff]
    %v876 = vld [vmem:[#allocation9 + $0x7e8] sm:$0xff]
    %v877 = vld [vmem:[#allocation9 + $0x7f0] sm:$0xff]
    %v878 = vld [vmem:[#allocation9 + $0x7f8] sm:$0xff]
    %v879 = vld [vmem:[#allocation9 + $0x800] sm:$0xff]
    %v880 = vld [vmem:[#allocation9 + $0x808] sm:$0xff]
    %v881 = vld [vmem:[#allocation9 + $0x810] sm:$0xff]
    %v882 = vld [vmem:[#allocation9 + $0x818] sm:$0xff]
    %v883 = vld [vmem:[#allocation9 + $0x820] sm:$0xff]
    %v884 = vld [vmem:[#allocation9 + $0x828] sm:$0xff]
    %v885 = vld [vmem:[#allocation9 + $0x830] sm:$0xff]
    %v886 = vld [vmem:[#allocation9 + $0x838] sm:$0xff]
    %v887 = vld [vmem:[#allocation9 + $0x840] sm:$0xff]
    %v888 = vld [vmem:[#allocation9 + $0x848] sm:$0xff]
    %v889 = vld [vmem:[#allocation9 + $0x850] sm:$0xff]
    %v890 = vld [vmem:[#allocation9 + $0x858] sm:$0xff]
    %v891 = vld [vmem:[#allocation9 + $0x860] sm:$0xff]
    %v892 = vld [vmem:[#allocation9 + $0x868] sm:$0xff]
    %v893 = vld [vmem:[#allocation9 + $0x870] sm:$0xff]
    %v894 = vld [vmem:[#allocation9 + $0x878] sm:$0xff]
    %v895 = vld [vmem:[#allocation9 + $0x880] sm:$0xff]
    %v896 = vld [vmem:[#allocation9 + $0x888] sm:$0xff]
    %v897 = vld [vmem:[#allocation9 + $0x890] sm:$0xff]
    %v898 = vld [vmem:[#allocation9 + $0x898] sm:$0xff]
    %v899 = vld [vmem:[#allocation9 + $0x8a0] sm:$0xff]
    %v900 = vld [vmem:[#allocation9 + $0x8a8] sm:$0xff]
    %v901 = vld [vmem:[#allocation9 + $0x8b0] sm:$0xff]
    %v902 = vld [vmem:[#allocation9 + $0x8b8] sm:$0xff]
    %v903 = vld [vmem:[#allocation9 + $0x8c0] sm:$0xff]
    %v904 = vld [vmem:[#allocation9 + $0x8c8] sm:$0xff]
    %v905 = vld [vmem:[#allocation9 + $0x8d0] sm:$0xff]
    %v906 = vld [vmem:[#allocation9 + $0x8d8] sm:$0xff]
    %v907 = vld [vmem:[#allocation9 + $0x8e0] sm:$0xff]
    %v908 = vld [vmem:[#allocation9 + $0x8e8] sm:$0xff]
    %v909 = vld [vmem:[#allocation9 + $0x8f0] sm:$0xff]
    %v910 = vld [vmem:[#allocation9 + $0x8f8] sm:$0xff]
    %v911 = vld [vmem:[#allocation9 + $0x900] sm:$0xff]
    %v912 = vld [vmem:[#allocation9 + $0x908] sm:$0xff]
    %v913 = vld [vmem:[#allocation9 + $0x910] sm:$0xff]
    %v914 = vld [vmem:[#allocation9 + $0x918] sm:$0xff]
    %v915 = vld [vmem:[#allocation9 + $0x920] sm:$0xff]
    %v916 = vld [vmem:[#allocation9 + $0x928] sm:$0xff]
    %v917 = vld [vmem:[#allocation9 + $0x930] sm:$0xff]
    %v918 = vld [vmem:[#allocation9 + $0x938] sm:$0xff]
    %v919 = vld [vmem:[#allocation9 + $0x940] sm:$0xff]
    %v920 = vld [vmem:[#allocation9 + $0x948] sm:$0xff]
    %v921 = vld [vmem:[#allocation9 + $0x950] sm:$0xff]
    %v922 = vld [vmem:[#allocation9 + $0x958] sm:$0xff]
    %v923 = vld [vmem:[#allocation9 + $0x960] sm:$0xff]
    %v924 = vld [vmem:[#allocation9 + $0x968] sm:$0xff]
    %v925 = vld [vmem:[#allocation9 + $0x970] sm:$0xff]
    %v926 = vld [vmem:[#allocation9 + $0x978] sm:$0xff]
    %v927 = vld [vmem:[#allocation9 + $0x980] sm:$0xff]
    %v928 = vld [vmem:[#allocation9 + $0x988] sm:$0xff]
    %v929 = vld [vmem:[#allocation9 + $0x990] sm:$0xff]
    %v930 = vld [vmem:[#allocation9 + $0x998] sm:$0xff]
    %v931 = vld [vmem:[#allocation9 + $0x9a0] sm:$0xff]
    %v932 = vld [vmem:[#allocation9 + $0x9a8] sm:$0xff]
    %v933 = vld [vmem:[#allocation9 + $0x9b0] sm:$0xff]
    %v934 = vld [vmem:[#allocation9 + $0x9b8] sm:$0xff]
    %v935 = vld [vmem:[#allocation9 + $0x9c0] sm:$0xff]
    %v936 = vld [vmem:[#allocation9 + $0x9c8] sm:$0xff]
    %v937 = vld [vmem:[#allocation9 + $0x9d0] sm:$0xff]
    %v938 = vld [vmem:[#allocation9 + $0x9d8] sm:$0xff]
    %v939 = vld [vmem:[#allocation9 + $0x9e0] sm:$0xff]
    %v940 = vld [vmem:[#allocation9 + $0x9e8] sm:$0xff]
    %v941 = vld [vmem:[#allocation9 + $0x9f0] sm:$0xff]
    %v942 = vld [vmem:[#allocation9 + $0x9f8] sm:$0xff]
    %v943 = vld [vmem:[#allocation9 + $0xa00] sm:$0xff]
    %v944 = vld [vmem:[#allocation9 + $0xa08] sm:$0xff]
    %v945 = vld [vmem:[#allocation9 + $0xa10] sm:$0xff]
    %v946 = vld [vmem:[#allocation9 + $0xa18] sm:$0xff]
    %v947 = vld [vmem:[#allocation9 + $0xa20] sm:$0xff]
    %v948 = vld [vmem:[#allocation9 + $0xa28] sm:$0xff]
    %v949 = vld [vmem:[#allocation9 + $0xa30] sm:$0xff]
    %v950 = vld [vmem:[#allocation9 + $0xa38] sm:$0xff]
    %v951 = vld [vmem:[#allocation9 + $0xa40] sm:$0xff]
    %v952 = vld [vmem:[#allocation9 + $0xa48] sm:$0xff]
    %v953 = vld [vmem:[#allocation9 + $0xa50] sm:$0xff]
    %v954 = vld [vmem:[#allocation9 + $0xa58] sm:$0xff]
    %v955 = vld [vmem:[#allocation9 + $0xa60] sm:$0xff]
    %v956 = vld [vmem:[#allocation9 + $0xa68] sm:$0xff]
    %v957 = vld [vmem:[#allocation9 + $0xa70] sm:$0xff]
    %v958 = vld [vmem:[#allocation9 + $0xa78] sm:$0xff]
    %v959 = vld [vmem:[#allocation9 + $0xa80] sm:$0xff]
    %v960 = vld [vmem:[#allocation9 + $0xa88] sm:$0xff]
    %v961 = vld [vmem:[#allocation9 + $0xa90] sm:$0xff]
    %v962 = vld [vmem:[#allocation9 + $0xa98] sm:$0xff]
    %v963 = vld [vmem:[#allocation9 + $0xaa0] sm:$0xff]
    %v964 = vld [vmem:[#allocation9 + $0xaa8] sm:$0xff]
    %v965 = vld [vmem:[#allocation9 + $0xab0] sm:$0xff]
    %v966 = vld [vmem:[#allocation9 + $0xab8] sm:$0xff]
    %v967 = vld [vmem:[#allocation9 + $0xac0] sm:$0xff]
    %v968 = vld [vmem:[#allocation9 + $0xac8] sm:$0xff]
    %v969 = vld [vmem:[#allocation9 + $0xad0] sm:$0xff]
    %v970 = vld [vmem:[#allocation9 + $0xad8] sm:$0xff]
    %v971 = vld [vmem:[#allocation9 + $0xae0] sm:$0xff]
    %v972 = vld [vmem:[#allocation9 + $0xae8] sm:$0xff]
    %v973 = vld [vmem:[#allocation9 + $0xaf0] sm:$0xff]
    %v974 = vld [vmem:[#allocation9 + $0xaf8] sm:$0xff]
    %v975 = vld [vmem:[#allocation9 + $0xb00] sm:$0xff]
    %v976 = vld [vmem:[#allocation9 + $0xb08] sm:$0xff]
    %v977 = vld [vmem:[#allocation9 + $0xb10] sm:$0xff]
    %v978 = vld [vmem:[#allocation9 + $0xb18] sm:$0xff]
    %v979 = vld [vmem:[#allocation9 + $0xb20] sm:$0xff]
    %v980 = vld [vmem:[#allocation9 + $0xb28] sm:$0xff]
    %v981 = vld [vmem:[#allocation9 + $0xb30] sm:$0xff]
    %v982 = vld [vmem:[#allocation9 + $0xb38] sm:$0xff]
    %v983 = vld [vmem:[#allocation9 + $0xb40] sm:$0xff]
    %v984 = vld [vmem:[#allocation9 + $0xb48] sm:$0xff]
    %v985 = vld [vmem:[#allocation9 + $0xb50] sm:$0xff]
    %v986 = vld [vmem:[#allocation9 + $0xb58] sm:$0xff]
    %v987 = vld [vmem:[#allocation9 + $0xb60] sm:$0xff]
    %v988 = vld [vmem:[#allocation9 + $0xb68] sm:$0xff]
    %v989 = vld [vmem:[#allocation9 + $0xb70] sm:$0xff]
    %v990 = vld [vmem:[#allocation9 + $0xb78] sm:$0xff]
    %v991 = vld [vmem:[#allocation9 + $0xb80] sm:$0xff]
    %v992 = vld [vmem:[#allocation9 + $0xb88] sm:$0xff]
    %v993 = vld [vmem:[#allocation9 + $0xb90] sm:$0xff]
    %v994 = vld [vmem:[#allocation9 + $0xb98] sm:$0xff]
    %v995 = vld [vmem:[#allocation9 + $0xba0] sm:$0xff]
    %v996 = vld [vmem:[#allocation9 + $0xba8] sm:$0xff]
    %v997 = vld [vmem:[#allocation9 + $0xbb0] sm:$0xff]
    %v998 = vld [vmem:[#allocation9 + $0xbb8] sm:$0xff]
    %v999 = vld [vmem:[#allocation9 + $0xbc0] sm:$0xff]
    %v1000 = vld [vmem:[#allocation9 + $0xbc8] sm:$0xff]
    %v1001 = vld [vmem:[#allocation9 + $0xbd0] sm:$0xff]
    %v1002 = vld [vmem:[#allocation9 + $0xbd8] sm:$0xff]
    %v1003 = vld [vmem:[#allocation9 + $0xbe0] sm:$0xff]
    %v1004 = vld [vmem:[#allocation9 + $0xbe8] sm:$0xff]
    %v1005 = vld [vmem:[#allocation9 + $0xbf0] sm:$0xff]
    %v1006 = vld [vmem:[#allocation9 + $0xbf8] sm:$0xff]
    %v1007 = vld [vmem:[#allocation9 + $0xc00] sm:$0xff]
    %v1008 = vld [vmem:[#allocation9 + $0xc08] sm:$0xff]
    %v1009 = vld [vmem:[#allocation9 + $0xc10] sm:$0xff]
    %v1010 = vld [vmem:[#allocation9 + $0xc18] sm:$0xff]
    %v1011 = vld [vmem:[#allocation9 + $0xc20] sm:$0xff]
    %v1012 = vld [vmem:[#allocation9 + $0xc28] sm:$0xff]
    %v1013 = vld [vmem:[#allocation9 + $0xc30] sm:$0xff]
    %v1014 = vld [vmem:[#allocation9 + $0xc38] sm:$0xff]
    %v1015 = vld [vmem:[#allocation9 + $0xc40] sm:$0xff]
    %v1016 = vld [vmem:[#allocation9 + $0xc48] sm:$0xff]
    %v1017 = vld [vmem:[#allocation9 + $0xc50] sm:$0xff]
    %v1018 = vld [vmem:[#allocation9 + $0xc58] sm:$0xff]
    %v1019 = vld [vmem:[#allocation9 + $0xc60] sm:$0xff]
    %v1020 = vld [vmem:[#allocation9 + $0xc68] sm:$0xff]
    %v1021 = vld [vmem:[#allocation9 + $0xc70] sm:$0xff]
    %v1022 = vld [vmem:[#allocation9 + $0xc78] sm:$0xff]
    %v1023 = vld [vmem:[#allocation9 + $0xc80] sm:$0xff]
    %v1024 = vld [vmem:[#allocation9 + $0xc88] sm:$0xff]
    %v1025 = vld [vmem:[#allocation9 + $0xc90] sm:$0xff]
    %v1026 = vld [vmem:[#allocation9 + $0xc98] sm:$0xff]
    %v1027 = vld [vmem:[#allocation9 + $0xca0] sm:$0xff]
    %v1028 = vld [vmem:[#allocation9 + $0xca8] sm:$0xff]
    %v1029 = vld [vmem:[#allocation9 + $0xcb0] sm:$0xff]
    %v1030 = vld [vmem:[#allocation9 + $0xcb8] sm:$0xff]
    %v1031 = vld [vmem:[#allocation9 + $0xcc0] sm:$0xff]
    %v1032 = vld [vmem:[#allocation9 + $0xcc8] sm:$0xff]
    %v1033 = vld [vmem:[#allocation9 + $0xcd0] sm:$0xff]
    %v1034 = vld [vmem:[#allocation9 + $0xcd8] sm:$0xff]
    %v1035 = vld [vmem:[#allocation9 + $0xce0] sm:$0xff]
    %v1036 = vld [vmem:[#allocation9 + $0xce8] sm:$0xff]
    %v1037 = vld [vmem:[#allocation9 + $0xcf0] sm:$0xff]
    %v1038 = vld [vmem:[#allocation9 + $0xcf8] sm:$0xff]
    %v1039 = vld [vmem:[#allocation9 + $0xd00] sm:$0xff]
    %v1040 = vld [vmem:[#allocation9 + $0xd08] sm:$0xff]
    %v1041 = vld [vmem:[#allocation9 + $0xd10] sm:$0xff]
    %v1042 = vld [vmem:[#allocation9 + $0xd18] sm:$0xff]
    %v1043 = vld [vmem:[#allocation9 + $0xd20] sm:$0xff]
    %v1044 = vld [vmem:[#allocation9 + $0xd28] sm:$0xff]
    %v1045 = vld [vmem:[#allocation9 + $0xd30] sm:$0xff]
    %v1046 = vld [vmem:[#allocation9 + $0xd38] sm:$0xff]
    %v1047 = vld [vmem:[#allocation9 + $0xd40] sm:$0xff]
    %v1048 = vld [vmem:[#allocation9 + $0xd48] sm:$0xff]
    %v1049 = vld [vmem:[#allocation9 + $0xd50] sm:$0xff]
    %v1050 = vld [vmem:[#allocation9 + $0xd58] sm:$0xff]
    %v1051 = vld [vmem:[#allocation9 + $0xd60] sm:$0xff]
    %v1052 = vld [vmem:[#allocation9 + $0xd68] sm:$0xff]
    %v1053 = vld [vmem:[#allocation9 + $0xd70] sm:$0xff]
    %v1054 = vld [vmem:[#allocation9 + $0xd78] sm:$0xff]
    %v1055 = vld [vmem:[#allocation9 + $0xd80] sm:$0xff]
    %v1056 = vld [vmem:[#allocation9 + $0xd88] sm:$0xff]
    %v1057 = vld [vmem:[#allocation9 + $0xd90] sm:$0xff]
    %v1058 = vld [vmem:[#allocation9 + $0xd98] sm:$0xff]
    %v1059 = vld [vmem:[#allocation9 + $0xda0] sm:$0xff]
    %v1060 = vld [vmem:[#allocation9 + $0xda8] sm:$0xff]
    %v1061 = vld [vmem:[#allocation9 + $0xdb0] sm:$0xff]
    %v1062 = vld [vmem:[#allocation9 + $0xdb8] sm:$0xff]
    %v1063 = vld [vmem:[#allocation9 + $0xdc0] sm:$0xff]
    %v1064 = vld [vmem:[#allocation9 + $0xdc8] sm:$0xff]
    %v1065 = vld [vmem:[#allocation9 + $0xdd0] sm:$0xff]
    %v1066 = vld [vmem:[#allocation9 + $0xdd8] sm:$0xff]
    %v1067 = vld [vmem:[#allocation9 + $0xde0] sm:$0xff]
    %v1068 = vld [vmem:[#allocation9 + $0xde8] sm:$0xff]
    %v1069 = vld [vmem:[#allocation9 + $0xdf0] sm:$0xff]
    %v1070 = vld [vmem:[#allocation9 + $0xdf8] sm:$0xff]
    %v1071 = vld [vmem:[#allocation9 + $0xe00] sm:$0xff]
    %v1072 = vld [vmem:[#allocation9 + $0xe08] sm:$0xff]
    %v1073 = vld [vmem:[#allocation9 + $0xe10] sm:$0xff]
    %v1074 = vld [vmem:[#allocation9 + $0xe18] sm:$0xff]
    %v1075 = vld [vmem:[#allocation9 + $0xe20] sm:$0xff]
    %v1076 = vld [vmem:[#allocation9 + $0xe28] sm:$0xff]
    %v1077 = vld [vmem:[#allocation9 + $0xe30] sm:$0xff]
    %v1078 = vld [vmem:[#allocation9 + $0xe38] sm:$0xff]
    %v1079 = vld [vmem:[#allocation9 + $0xe40] sm:$0xff]
    %v1080 = vld [vmem:[#allocation9 + $0xe48] sm:$0xff]
    %v1081 = vld [vmem:[#allocation9 + $0xe50] sm:$0xff]
    %v1082 = vld [vmem:[#allocation9 + $0xe58] sm:$0xff]
    %v1083 = vld [vmem:[#allocation9 + $0xe60] sm:$0xff]
    %v1084 = vld [vmem:[#allocation9 + $0xe68] sm:$0xff]
    %v1085 = vld [vmem:[#allocation9 + $0xe70] sm:$0xff]
    %v1086 = vld [vmem:[#allocation9 + $0xe78] sm:$0xff]
    %v1087 = vld [vmem:[#allocation9 + $0xe80] sm:$0xff]
    %v1088 = vld [vmem:[#allocation9 + $0xe88] sm:$0xff]
    %v1089 = vld [vmem:[#allocation9 + $0xe90] sm:$0xff]
    %v1090 = vld [vmem:[#allocation9 + $0xe98] sm:$0xff]
    %v1091 = vld [vmem:[#allocation9 + $0xea0] sm:$0xff]
    %v1092 = vld [vmem:[#allocation9 + $0xea8] sm:$0xff]
    %v1093 = vld [vmem:[#allocation9 + $0xeb0] sm:$0xff]
    %v1094 = vld [vmem:[#allocation9 + $0xeb8] sm:$0xff]
    %v1095 = vld [vmem:[#allocation9 + $0xec0] sm:$0xff]
    %v1096 = vld [vmem:[#allocation9 + $0xec8] sm:$0xff]
    %v1097 = vld [vmem:[#allocation9 + $0xed0] sm:$0xff]
    %v1098 = vld [vmem:[#allocation9 + $0xed8] sm:$0xff]
    %v1099 = vld [vmem:[#allocation9 + $0xee0] sm:$0xff]
    %v1100 = vld [vmem:[#allocation9 + $0xee8] sm:$0xff]
    %v1101 = vld [vmem:[#allocation9 + $0xef0] sm:$0xff]
    %v1102 = vld [vmem:[#allocation9 + $0xef8] sm:$0xff]
    %v1103 = vld [vmem:[#allocation9 + $0xf00] sm:$0xff]
    %v1104 = vld [vmem:[#allocation9 + $0xf08] sm:$0xff]
    %v1105 = vld [vmem:[#allocation9 + $0xf10] sm:$0xff]
    %v1106 = vld [vmem:[#allocation9 + $0xf18] sm:$0xff]
    %v1107 = vld [vmem:[#allocation9 + $0xf20] sm:$0xff]
    %v1108 = vld [vmem:[#allocation9 + $0xf28] sm:$0xff]
    %v1109 = vld [vmem:[#allocation9 + $0xf30] sm:$0xff]
    %v1110 = vld [vmem:[#allocation9 + $0xf38] sm:$0xff]
    %v1111 = vld [vmem:[#allocation9 + $0xf40] sm:$0xff]
    %v1112 = vld [vmem:[#allocation9 + $0xf48] sm:$0xff]
    %v1113 = vld [vmem:[#allocation9 + $0xf50] sm:$0xff]
    %v1114 = vld [vmem:[#allocation9 + $0xf58] sm:$0xff]
    %v1115 = vld [vmem:[#allocation9 + $0xf60] sm:$0xff]
    %v1116 = vld [vmem:[#allocation9 + $0xf68] sm:$0xff]
    %v1117 = vld [vmem:[#allocation9 + $0xf70] sm:$0xff]
    %v1118 = vld [vmem:[#allocation9 + $0xf78] sm:$0xff]
    %v1119 = vld [vmem:[#allocation9 + $0xf80] sm:$0xff]
    %v1120 = vld [vmem:[#allocation9 + $0xf88] sm:$0xff]
    %v1121 = vld [vmem:[#allocation9 + $0xf90] sm:$0xff]
    %v1122 = vld [vmem:[#allocation9 + $0xf98] sm:$0xff]
    %v1123 = vld [vmem:[#allocation9 + $0xfa0] sm:$0xff]
    %v1124 = vld [vmem:[#allocation9 + $0xfa8] sm:$0xff]
    %v1125 = vld [vmem:[#allocation9 + $0xfb0] sm:$0xff]
    %v1126 = vld [vmem:[#allocation9 + $0xfb8] sm:$0xff]
    %v1127 = vld [vmem:[#allocation9 + $0xfc0] sm:$0xff]
    %v1128 = vld [vmem:[#allocation9 + $0xfc8] sm:$0xff]
    %v1129 = vld [vmem:[#allocation9 + $0xfd0] sm:$0xff]
    %v1130 = vld [vmem:[#allocation9 + $0xfd8] sm:$0xff]
    %v1131 = vld [vmem:[#allocation9 + $0xfe0] sm:$0xff]
    %v1132 = vld [vmem:[#allocation9 + $0xfe8] sm:$0xff]
    %v1133 = vld [vmem:[#allocation9 + $0xff0] sm:$0xff]
    %v1134 = vld [vmem:[#allocation9 + $0xff8] sm:$0xff]
    %v1135 = vld [vmem:[#allocation9 + $0x1000] sm:$0xff]
    %v1136 = vld [vmem:[#allocation9 + $0x1008] sm:$0xff]
    %v1137 = vld [vmem:[#allocation9 + $0x1010] sm:$0xff]
    %v1138 = vld [vmem:[#allocation9 + $0x1018] sm:$0xff]
    %v1139 = vld [vmem:[#allocation9 + $0x1020] sm:$0xff]
    %v1140 = vld [vmem:[#allocation9 + $0x1028] sm:$0xff]
    %v1141 = vld [vmem:[#allocation9 + $0x1030] sm:$0xff]
    %v1142 = vld [vmem:[#allocation9 + $0x1038] sm:$0xff]
    %v1143 = vld [vmem:[#allocation9 + $0x1040] sm:$0xff]
    %v1144 = vld [vmem:[#allocation9 + $0x1048] sm:$0xff]
    %v1145 = vld [vmem:[#allocation9 + $0x1050] sm:$0xff]
    %v1146 = vld [vmem:[#allocation9 + $0x1058] sm:$0xff]
    %v1147 = vld [vmem:[#allocation9 + $0x1060] sm:$0xff]
    %v1148 = vld [vmem:[#allocation9 + $0x1068] sm:$0xff]
    %v1149 = vld [vmem:[#allocation9 + $0x1070] sm:$0xff]
    %v1150 = vld [vmem:[#allocation9 + $0x1078] sm:$0xff]
    %v1151 = vld [vmem:[#allocation9 + $0x1080] sm:$0xff]
    %v1152 = vld [vmem:[#allocation9 + $0x1088] sm:$0xff]
    %v1153 = vld [vmem:[#allocation9 + $0x1090] sm:$0xff]
    %v1154 = vld [vmem:[#allocation9 + $0x1098] sm:$0xff]
    %v1155 = vld [vmem:[#allocation9 + $0x10a0] sm:$0xff]
    %v1156 = vld [vmem:[#allocation9 + $0x10a8] sm:$0xff]
    %v1157 = vld [vmem:[#allocation9 + $0x10b0] sm:$0xff]
    %v1158 = vld [vmem:[#allocation9 + $0x10b8] sm:$0xff]
    %v1159 = vld [vmem:[#allocation9 + $0x10c0] sm:$0xff]
    %v1160 = vld [vmem:[#allocation9 + $0x10c8] sm:$0xff]
    %v1161 = vld [vmem:[#allocation9 + $0x10d0] sm:$0xff]
    %v1162 = vld [vmem:[#allocation9 + $0x10d8] sm:$0xff]
    %v1163 = vld [vmem:[#allocation9 + $0x10e0] sm:$0xff]
    %v1164 = vld [vmem:[#allocation9 + $0x10e8] sm:$0xff]
    %v1165 = vld [vmem:[#allocation9 + $0x10f0] sm:$0xff]
    %v1166 = vld [vmem:[#allocation9 + $0x10f8] sm:$0xff]
    %v1167 = vld [vmem:[#allocation9 + $0x1100] sm:$0xff]
    %v1168 = vld [vmem:[#allocation9 + $0x1108] sm:$0xff]
    %v1169 = vld [vmem:[#allocation9 + $0x1110] sm:$0xff]
    %v1170 = vld [vmem:[#allocation9 + $0x1118] sm:$0xff]
    %v1171 = vld [vmem:[#allocation9 + $0x1120] sm:$0xff]
    %v1172 = vld [vmem:[#allocation9 + $0x1128] sm:$0xff]
    %v1173 = vld [vmem:[#allocation9 + $0x1130] sm:$0xff]
    %v1174 = vld [vmem:[#allocation9 + $0x1138] sm:$0xff]
    %v1175 = vld [vmem:[#allocation9 + $0x1140] sm:$0xff]
    %v1176 = vld [vmem:[#allocation9 + $0x1148] sm:$0xff]
    %v1177 = vld [vmem:[#allocation9 + $0x1150] sm:$0xff]
    %v1178 = vld [vmem:[#allocation9 + $0x1158] sm:$0xff]
    %v1179 = vld [vmem:[#allocation9 + $0x1160] sm:$0xff]
    %v1180 = vld [vmem:[#allocation9 + $0x1168] sm:$0xff]
    %v1181 = vld [vmem:[#allocation9 + $0x1170] sm:$0xff]
    %v1182 = vld [vmem:[#allocation9 + $0x1178] sm:$0xff]
    %v1183 = vld [vmem:[#allocation9 + $0x1180] sm:$0xff]
    %v1184 = vld [vmem:[#allocation9 + $0x1188] sm:$0xff]
    %v1185 = vld [vmem:[#allocation9 + $0x1190] sm:$0xff]
    %v1186 = vld [vmem:[#allocation9 + $0x1198] sm:$0xff]
    %v1187 = vld [vmem:[#allocation9 + $0x11a0] sm:$0xff]
    %v1188 = vld [vmem:[#allocation9 + $0x11a8] sm:$0xff]
    %v1189 = vld [vmem:[#allocation9 + $0x11b0] sm:$0xff]
    %v1190 = vld [vmem:[#allocation9 + $0x11b8] sm:$0xff]
    %v1191 = vld [vmem:[#allocation9 + $0x11c0] sm:$0xff]
    %v1192 = vld [vmem:[#allocation9 + $0x11c8] sm:$0xff]
    %v1193 = vld [vmem:[#allocation9 + $0x11d0] sm:$0xff]
    %v1194 = vld [vmem:[#allocation9 + $0x11d8] sm:$0xff]
    %v1195 = vld [vmem:[#allocation9 + $0x11e0] sm:$0xff]
    %v1196 = vld [vmem:[#allocation9 + $0x11e8] sm:$0xff]
    %v1197 = vld [vmem:[#allocation9 + $0x11f0] sm:$0xff]
    %v1198 = vld [vmem:[#allocation9 + $0x11f8] sm:$0xff]
    %v1199 = vld [vmem:[#allocation9 + $0x1200] sm:$0xff]
    %v1200 = vld [vmem:[#allocation9 + $0x1208] sm:$0xff]
    %v1201 = vld [vmem:[#allocation9 + $0x1210] sm:$0xff]
    %v1202 = vld [vmem:[#allocation9 + $0x1218] sm:$0xff]
    %v1203 = vld [vmem:[#allocation9 + $0x1220] sm:$0xff]
    %v1204 = vld [vmem:[#allocation9 + $0x1228] sm:$0xff]
    %v1205 = vld [vmem:[#allocation9 + $0x1230] sm:$0xff]
    %v1206 = vld [vmem:[#allocation9 + $0x1238] sm:$0xff]
    %v1207 = vld [vmem:[#allocation9 + $0x1240] sm:$0xff]
    %v1208 = vld [vmem:[#allocation9 + $0x1248] sm:$0xff]
    %v1209 = vld [vmem:[#allocation9 + $0x1250] sm:$0xff]
    %v1210 = vld [vmem:[#allocation9 + $0x1258] sm:$0xff]
    %v1211 = vld [vmem:[#allocation9 + $0x1260] sm:$0xff]
    %v1212 = vld [vmem:[#allocation9 + $0x1268] sm:$0xff]
    %v1213 = vld [vmem:[#allocation9 + $0x1270] sm:$0xff]
    %v1214 = vld [vmem:[#allocation9 + $0x1278] sm:$0xff]
    %v1215 = vld [vmem:[#allocation9 + $0x1280] sm:$0xff]
    %v1216 = vld [vmem:[#allocation9 + $0x1288] sm:$0xff]
    %v1217 = vld [vmem:[#allocation9 + $0x1290] sm:$0xff]
    %v1218 = vld [vmem:[#allocation9 + $0x1298] sm:$0xff]
    %v1219 = vld [vmem:[#allocation9 + $0x12a0] sm:$0xff]
    %v1220 = vld [vmem:[#allocation9 + $0x12a8] sm:$0xff]
    %v1221 = vld [vmem:[#allocation9 + $0x12b0] sm:$0xff]
    %v1222 = vld [vmem:[#allocation9 + $0x12b8] sm:$0xff]
    %v1223 = vld [vmem:[#allocation9 + $0x12c0] sm:$0xff]
    %v1224 = vld [vmem:[#allocation9 + $0x12c8] sm:$0xff]
    %v1225 = vld [vmem:[#allocation9 + $0x12d0] sm:$0xff]
    %v1226 = vld [vmem:[#allocation9 + $0x12d8] sm:$0xff]
    %v1227 = vld [vmem:[#allocation9 + $0x12e0] sm:$0xff]
    %v1228 = vld [vmem:[#allocation9 + $0x12e8] sm:$0xff]
    %v1229 = vld [vmem:[#allocation9 + $0x12f0] sm:$0xff]
    %v1230 = vld [vmem:[#allocation9 + $0x12f8] sm:$0xff]
    %v1231 = vld [vmem:[#allocation9 + $0x1300] sm:$0xff]
    %v1232 = vld [vmem:[#allocation9 + $0x1308] sm:$0xff]
    %v1233 = vld [vmem:[#allocation9 + $0x1310] sm:$0xff]
    %v1234 = vld [vmem:[#allocation9 + $0x1318] sm:$0xff]
    %v1235 = vld [vmem:[#allocation9 + $0x1320] sm:$0xff]
    %v1236 = vld [vmem:[#allocation9 + $0x1328] sm:$0xff]
    %v1237 = vld [vmem:[#allocation9 + $0x1330] sm:$0xff]
    %v1238 = vld [vmem:[#allocation9 + $0x1338] sm:$0xff]
    %v1239 = vld [vmem:[#allocation9 + $0x1340] sm:$0xff]
    %v1240 = vld [vmem:[#allocation9 + $0x1348] sm:$0xff]
    %v1241 = vld [vmem:[#allocation9 + $0x1350] sm:$0xff]
    %v1242 = vld [vmem:[#allocation9 + $0x1358] sm:$0xff]
    %v1243 = vld [vmem:[#allocation9 + $0x1360] sm:$0xff]
    %v1244 = vld [vmem:[#allocation9 + $0x1368] sm:$0xff]
    %v1245 = vld [vmem:[#allocation9 + $0x1370] sm:$0xff]
    %v1246 = vld [vmem:[#allocation9 + $0x1378] sm:$0xff]
    %v1247 = vld [vmem:[#allocation9 + $0x1380] sm:$0xff]
    %v1248 = vld [vmem:[#allocation9 + $0x1388] sm:$0xff]
    %v1249 = vld [vmem:[#allocation9 + $0x1390] sm:$0xff]
    %v1250 = vld [vmem:[#allocation9 + $0x1398] sm:$0xff]
    %v1251 = vld [vmem:[#allocation9 + $0x13a0] sm:$0xff]
    %v1252 = vld [vmem:[#allocation9 + $0x13a8] sm:$0xff]
    %v1253 = vld [vmem:[#allocation9 + $0x13b0] sm:$0xff]
    %v1254 = vld [vmem:[#allocation9 + $0x13b8] sm:$0xff]
    %v1255 = vld [vmem:[#allocation9 + $0x13c0] sm:$0xff]
    %v1256 = vld [vmem:[#allocation9 + $0x13c8] sm:$0xff]
    %v1257 = vld [vmem:[#allocation9 + $0x13d0] sm:$0xff]
    %v1258 = vld [vmem:[#allocation9 + $0x13d8] sm:$0xff]
    %v1259 = vld [vmem:[#allocation9 + $0x13e0] sm:$0xff]
    %v1260 = vld [vmem:[#allocation9 + $0x13e8] sm:$0xff]
    %v1261 = vld [vmem:[#allocation9 + $0x13f0] sm:$0xff]
    %v1262 = vld [vmem:[#allocation9 + $0x13f8] sm:$0xff]
    %v1263 = vld [vmem:[#allocation9 + $0x1400] sm:$0xff]
    %v1264 = vld [vmem:[#allocation9 + $0x1408] sm:$0xff]
    %v1265 = vld [vmem:[#allocation9 + $0x1410] sm:$0xff]
    %v1266 = vld [vmem:[#allocation9 + $0x1418] sm:$0xff]
    %v1267 = vld [vmem:[#allocation9 + $0x1420] sm:$0xff]
    %v1268 = vld [vmem:[#allocation9 + $0x1428] sm:$0xff]
    %v1269 = vld [vmem:[#allocation9 + $0x1430] sm:$0xff]
    %v1270 = vld [vmem:[#allocation9 + $0x1438] sm:$0xff]
    %v1271 = vld [vmem:[#allocation9 + $0x1440] sm:$0xff]
    %v1272 = vld [vmem:[#allocation9 + $0x1448] sm:$0xff]
    %v1273 = vld [vmem:[#allocation9 + $0x1450] sm:$0xff]
    %v1274 = vld [vmem:[#allocation9 + $0x1458] sm:$0xff]
    %v1275 = vld [vmem:[#allocation9 + $0x1460] sm:$0xff]
    %v1276 = vld [vmem:[#allocation9 + $0x1468] sm:$0xff]
    %v1277 = vld [vmem:[#allocation9 + $0x1470] sm:$0xff]
    %v1278 = vld [vmem:[#allocation9 + $0x1478] sm:$0xff]
    %v1279 = vld [vmem:[#allocation9 + $0x1480] sm:$0xff]
    %v1280 = vld [vmem:[#allocation9 + $0x1488] sm:$0xff]
    %v1281 = vld [vmem:[#allocation9 + $0x1490] sm:$0xff]
    %v1282 = vld [vmem:[#allocation9 + $0x1498] sm:$0xff]
    %v1283 = vld [vmem:[#allocation9 + $0x14a0] sm:$0xff]
    %v1284 = vld [vmem:[#allocation9 + $0x14a8] sm:$0xff]
    %v1285 = vld [vmem:[#allocation9 + $0x14b0] sm:$0xff]
    %v1286 = vld [vmem:[#allocation9 + $0x14b8] sm:$0xff]
    %v1287 = vld [vmem:[#allocation9 + $0x14c0] sm:$0xff]
    %v1288 = vld [vmem:[#allocation9 + $0x14c8] sm:$0xff]
    %v1289 = vld [vmem:[#allocation9 + $0x14d0] sm:$0xff]
    %v1290 = vld [vmem:[#allocation9 + $0x14d8] sm:$0xff]
    %v1291 = vld [vmem:[#allocation9 + $0x14e0] sm:$0xff]
    %v1292 = vld [vmem:[#allocation9 + $0x14e8] sm:$0xff]
    %v1293 = vld [vmem:[#allocation9 + $0x14f0] sm:$0xff]
    %v1294 = vld [vmem:[#allocation9 + $0x14f8] sm:$0xff]
    %v1295 = vld [vmem:[#allocation9 + $0x1500] sm:$0xff]
    %v1296 = vld [vmem:[#allocation9 + $0x1508] sm:$0xff]
    %v1297 = vld [vmem:[#allocation9 + $0x1510] sm:$0xff]
    %v1298 = vld [vmem:[#allocation9 + $0x1518] sm:$0xff]
    %v1299 = vld [vmem:[#allocation9 + $0x1520] sm:$0xff]
    %v1300 = vld [vmem:[#allocation9 + $0x1528] sm:$0xff]
    %v1301 = vld [vmem:[#allocation9 + $0x1530] sm:$0xff]
    %v1302 = vld [vmem:[#allocation9 + $0x1538] sm:$0xff]
    %v1303 = vld [vmem:[#allocation9 + $0x1540] sm:$0xff]
    %v1304 = vld [vmem:[#allocation9 + $0x1548] sm:$0xff]
    %v1305 = vld [vmem:[#allocation9 + $0x1550] sm:$0xff]
    %v1306 = vld [vmem:[#allocation9 + $0x1558] sm:$0xff]
    %v1307 = vld [vmem:[#allocation9 + $0x1560] sm:$0xff]
    %v1308 = vld [vmem:[#allocation9 + $0x1568] sm:$0xff]
    %v1309 = vld [vmem:[#allocation9 + $0x1570] sm:$0xff]
    %v1310 = vld [vmem:[#allocation9 + $0x1578] sm:$0xff]
    %v1311 = vld [vmem:[#allocation9 + $0x1580] sm:$0xff]
    %v1312 = vld [vmem:[#allocation9 + $0x1588] sm:$0xff]
    %v1313 = vld [vmem:[#allocation9 + $0x1590] sm:$0xff]
    %v1314 = vld [vmem:[#allocation9 + $0x1598] sm:$0xff]
    %v1315 = vld [vmem:[#allocation9 + $0x15a0] sm:$0xff]
    %v1316 = vld [vmem:[#allocation9 + $0x15a8] sm:$0xff]
    %v1317 = vld [vmem:[#allocation9 + $0x15b0] sm:$0xff]
    %v1318 = vld [vmem:[#allocation9 + $0x15b8] sm:$0xff]
    %v1319 = vld [vmem:[#allocation9 + $0x15c0] sm:$0xff]
    %v1320 = vld [vmem:[#allocation9 + $0x15c8] sm:$0xff]
    %v1321 = vld [vmem:[#allocation9 + $0x15d0] sm:$0xff]
    %v1322 = vld [vmem:[#allocation9 + $0x15d8] sm:$0xff]
    %v1323 = vld [vmem:[#allocation9 + $0x15e0] sm:$0xff]
    %v1324 = vld [vmem:[#allocation9 + $0x15e8] sm:$0xff]
    %v1325 = vld [vmem:[#allocation9 + $0x15f0] sm:$0xff]
    %v1326 = vld [vmem:[#allocation9 + $0x15f8] sm:$0xff]
    %v1327 = vld [vmem:[#allocation9 + $0x1600] sm:$0xff]
    %v1328 = vld [vmem:[#allocation9 + $0x1608] sm:$0xff]
    %v1329 = vld [vmem:[#allocation9 + $0x1610] sm:$0xff]
    %v1330 = vld [vmem:[#allocation9 + $0x1618] sm:$0xff]
    %v1331 = vld [vmem:[#allocation9 + $0x1620] sm:$0xff]
    %v1332 = vld [vmem:[#allocation9 + $0x1628] sm:$0xff]
    %v1333 = vld [vmem:[#allocation9 + $0x1630] sm:$0xff]
    %v1334 = vld [vmem:[#allocation9 + $0x1638] sm:$0xff]
    %v1335 = vld [vmem:[#allocation9 + $0x1640] sm:$0xff]
    %v1336 = vld [vmem:[#allocation9 + $0x1648] sm:$0xff]
    %v1337 = vld [vmem:[#allocation9 + $0x1650] sm:$0xff]
    %v1338 = vld [vmem:[#allocation9 + $0x1658] sm:$0xff]
    %v1339 = vld [vmem:[#allocation9 + $0x1660] sm:$0xff]
    %v1340 = vld [vmem:[#allocation9 + $0x1668] sm:$0xff]
    %v1341 = vld [vmem:[#allocation9 + $0x1670] sm:$0xff]
    %v1342 = vld [vmem:[#allocation9 + $0x1678] sm:$0xff]
    %v1343 = vld [vmem:[#allocation9 + $0x1680] sm:$0xff]
    %v1344 = vld [vmem:[#allocation9 + $0x1688] sm:$0xff]
    %v1345 = vld [vmem:[#allocation9 + $0x1690] sm:$0xff]
    %v1346 = vld [vmem:[#allocation9 + $0x1698] sm:$0xff]
    %v1347 = vld [vmem:[#allocation9 + $0x16a0] sm:$0xff]
    %v1348 = vld [vmem:[#allocation9 + $0x16a8] sm:$0xff]
    %v1349 = vld [vmem:[#allocation9 + $0x16b0] sm:$0xff]
    %v1350 = vld [vmem:[#allocation9 + $0x16b8] sm:$0xff]
    %v1351 = vld [vmem:[#allocation9 + $0x16c0] sm:$0xff]
    %v1352 = vld [vmem:[#allocation9 + $0x16c8] sm:$0xff]
    %v1353 = vld [vmem:[#allocation9 + $0x16d0] sm:$0xff]
    %v1354 = vld [vmem:[#allocation9 + $0x16d8] sm:$0xff]
    %v1355 = vld [vmem:[#allocation9 + $0x16e0] sm:$0xff]
    %v1356 = vld [vmem:[#allocation9 + $0x16e8] sm:$0xff]
    %v1357 = vld [vmem:[#allocation9 + $0x16f0] sm:$0xff]
    %v1358 = vld [vmem:[#allocation9 + $0x16f8] sm:$0xff]
    %v1359 = vld [vmem:[#allocation9 + $0x1700] sm:$0xff]
    %v1360 = vld [vmem:[#allocation9 + $0x1708] sm:$0xff]
    %v1361 = vld [vmem:[#allocation9 + $0x1710] sm:$0xff]
    %v1362 = vld [vmem:[#allocation9 + $0x1718] sm:$0xff]
    %v1363 = vld [vmem:[#allocation9 + $0x1720] sm:$0xff]
    %v1364 = vld [vmem:[#allocation9 + $0x1728] sm:$0xff]
    %v1365 = vld [vmem:[#allocation9 + $0x1730] sm:$0xff]
    %v1366 = vld [vmem:[#allocation9 + $0x1738] sm:$0xff]
    %v1367 = vld [vmem:[#allocation9 + $0x1740] sm:$0xff]
    %v1368 = vld [vmem:[#allocation9 + $0x1748] sm:$0xff]
    %v1369 = vld [vmem:[#allocation9 + $0x1750] sm:$0xff]
    %v1370 = vld [vmem:[#allocation9 + $0x1758] sm:$0xff]
    %v1371 = vld [vmem:[#allocation9 + $0x1760] sm:$0xff]
    %v1372 = vld [vmem:[#allocation9 + $0x1768] sm:$0xff]
    %v1373 = vld [vmem:[#allocation9 + $0x1770] sm:$0xff]
    %v1374 = vld [vmem:[#allocation9 + $0x1778] sm:$0xff]
    %v1375 = vld [vmem:[#allocation9 + $0x1780] sm:$0xff]
    %v1376 = vld [vmem:[#allocation9 + $0x1788] sm:$0xff]
    %v1377 = vld [vmem:[#allocation9 + $0x1790] sm:$0xff]
    %v1378 = vld [vmem:[#allocation9 + $0x1798] sm:$0xff]
    %v1379 = vld [vmem:[#allocation9 + $0x17a0] sm:$0xff]
    %v1380 = vld [vmem:[#allocation9 + $0x17a8] sm:$0xff]
    %v1381 = vld [vmem:[#allocation9 + $0x17b0] sm:$0xff]
    %v1382 = vld [vmem:[#allocation9 + $0x17b8] sm:$0xff]
    %v1383 = vld [vmem:[#allocation9 + $0x17c0] sm:$0xff]
    %v1384 = vld [vmem:[#allocation9 + $0x17c8] sm:$0xff]
    %v1385 = vld [vmem:[#allocation9 + $0x17d0] sm:$0xff]
    %v1386 = vld [vmem:[#allocation9 + $0x17d8] sm:$0xff]
    %v1387 = vld [vmem:[#allocation9 + $0x17e0] sm:$0xff]
    %v1388 = vld [vmem:[#allocation9 + $0x17e8] sm:$0xff]
    %v1389 = vld [vmem:[#allocation9 + $0x17f0] sm:$0xff]
    %v1390 = vld [vmem:[#allocation9 + $0x17f8] sm:$0xff]
    %v1391 = vld [vmem:[#allocation9 + $0x1800] sm:$0xff]
    %v1392 = vld [vmem:[#allocation9 + $0x1808] sm:$0xff]
    %v1393 = vld [vmem:[#allocation9 + $0x1810] sm:$0xff]
    %v1394 = vld [vmem:[#allocation9 + $0x1818] sm:$0xff]
    %v1395 = vld [vmem:[#allocation9 + $0x1820] sm:$0xff]
    %v1396 = vld [vmem:[#allocation9 + $0x1828] sm:$0xff]
    %v1397 = vld [vmem:[#allocation9 + $0x1830] sm:$0xff]
    %v1398 = vld [vmem:[#allocation9 + $0x1838] sm:$0xff]
    %v1399 = vld [vmem:[#allocation9 + $0x1840] sm:$0xff]
    %v1400 = vld [vmem:[#allocation9 + $0x1848] sm:$0xff]
    %v1401 = vld [vmem:[#allocation9 + $0x1850] sm:$0xff]
    %v1402 = vld [vmem:[#allocation9 + $0x1858] sm:$0xff]
    %v1403 = vld [vmem:[#allocation9 + $0x1860] sm:$0xff]
    %v1404 = vld [vmem:[#allocation9 + $0x1868] sm:$0xff]
    %v1405 = vld [vmem:[#allocation9 + $0x1870] sm:$0xff]
    %v1406 = vld [vmem:[#allocation9 + $0x1878] sm:$0xff]
    %v1407 = vld [vmem:[#allocation9 + $0x1880] sm:$0xff]
    %v1408 = vld [vmem:[#allocation9 + $0x1888] sm:$0xff]
    %v1409 = vld [vmem:[#allocation9 + $0x1890] sm:$0xff]
    %v1410 = vld [vmem:[#allocation9 + $0x1898] sm:$0xff]
    %v1411 = vld [vmem:[#allocation9 + $0x18a0] sm:$0xff]
    %v1412 = vld [vmem:[#allocation9 + $0x18a8] sm:$0xff]
    %v1413 = vld [vmem:[#allocation9 + $0x18b0] sm:$0xff]
    %v1414 = vld [vmem:[#allocation9 + $0x18b8] sm:$0xff]
    %v1415 = vld [vmem:[#allocation9 + $0x18c0] sm:$0xff]
    %v1416 = vld [vmem:[#allocation9 + $0x18c8] sm:$0xff]
    %v1417 = vld [vmem:[#allocation9 + $0x18d0] sm:$0xff]
    %v1418 = vld [vmem:[#allocation9 + $0x18d8] sm:$0xff]
    %v1419 = vld [vmem:[#allocation9 + $0x18e0] sm:$0xff]
    %v1420 = vld [vmem:[#allocation9 + $0x18e8] sm:$0xff]
    %v1421 = vld [vmem:[#allocation9 + $0x18f0] sm:$0xff]
    %v1422 = vld [vmem:[#allocation9 + $0x18f8] sm:$0xff]
    %v1423 = vld [vmem:[#allocation9 + $0x1900] sm:$0xff]
    %v1424 = vld [vmem:[#allocation9 + $0x1908] sm:$0xff]
    %v1425 = vld [vmem:[#allocation9 + $0x1910] sm:$0xff]
    %v1426 = vld [vmem:[#allocation9 + $0x1918] sm:$0xff]
    %v1427 = vld [vmem:[#allocation9 + $0x1920] sm:$0xff]
    %v1428 = vld [vmem:[#allocation9 + $0x1928] sm:$0xff]
    %v1429 = vld [vmem:[#allocation9 + $0x1930] sm:$0xff]
    %v1430 = vld [vmem:[#allocation9 + $0x1938] sm:$0xff]
    %v1431 = vld [vmem:[#allocation9 + $0x1940] sm:$0xff]
    %v1432 = vld [vmem:[#allocation9 + $0x1948] sm:$0xff]
    %v1433 = vld [vmem:[#allocation9 + $0x1950] sm:$0xff]
    %v1434 = vld [vmem:[#allocation9 + $0x1958] sm:$0xff]
    %v1435 = vld [vmem:[#allocation9 + $0x1960] sm:$0xff]
    %v1436 = vld [vmem:[#allocation9 + $0x1968] sm:$0xff]
    %v1437 = vld [vmem:[#allocation9 + $0x1970] sm:$0xff]
    %v1438 = vld [vmem:[#allocation9 + $0x1978] sm:$0xff]
    %v1439 = vld [vmem:[#allocation9 + $0x1980] sm:$0xff]
    %v1440 = vld [vmem:[#allocation9 + $0x1988] sm:$0xff]
    %v1441 = vld [vmem:[#allocation9 + $0x1990] sm:$0xff]
    %v1442 = vld [vmem:[#allocation9 + $0x1998] sm:$0xff]
    %v1443 = vld [vmem:[#allocation9 + $0x19a0] sm:$0xff]
    %v1444 = vld [vmem:[#allocation9 + $0x19a8] sm:$0xff]
    %v1445 = vld [vmem:[#allocation9 + $0x19b0] sm:$0xff]
    %v1446 = vld [vmem:[#allocation9 + $0x19b8] sm:$0xff]
    %v1447 = vld [vmem:[#allocation9 + $0x19c0] sm:$0xff]
    %v1448 = vld [vmem:[#allocation9 + $0x19c8] sm:$0xff]
    %v1449 = vld [vmem:[#allocation9 + $0x19d0] sm:$0xff]
    %v1450 = vld [vmem:[#allocation9 + $0x19d8] sm:$0xff]
    %v1451 = vld [vmem:[#allocation9 + $0x19e0] sm:$0xff]
    %v1452 = vld [vmem:[#allocation9 + $0x19e8] sm:$0xff]
    %v1453 = vld [vmem:[#allocation9 + $0x19f0] sm:$0xff]
    %v1454 = vld [vmem:[#allocation9 + $0x19f8] sm:$0xff]
    %v1455 = vld [vmem:[#allocation9 + $0x1a00] sm:$0xff]
    %v1456 = vld [vmem:[#allocation9 + $0x1a08] sm:$0xff]
    %v1457 = vld [vmem:[#allocation9 + $0x1a10] sm:$0xff]
    %v1458 = vld [vmem:[#allocation9 + $0x1a18] sm:$0xff]
    %v1459 = vld [vmem:[#allocation9 + $0x1a20] sm:$0xff]
    %v1460 = vld [vmem:[#allocation9 + $0x1a28] sm:$0xff]
    %v1461 = vld [vmem:[#allocation9 + $0x1a30] sm:$0xff]
    %v1462 = vld [vmem:[#allocation9 + $0x1a38] sm:$0xff]
    %v1463 = vld [vmem:[#allocation9 + $0x1a40] sm:$0xff]
    %v1464 = vld [vmem:[#allocation9 + $0x1a48] sm:$0xff]
    %v1465 = vld [vmem:[#allocation9 + $0x1a50] sm:$0xff]
    %v1466 = vld [vmem:[#allocation9 + $0x1a58] sm:$0xff]
    %v1467 = vld [vmem:[#allocation9 + $0x1a60] sm:$0xff]
    %v1468 = vld [vmem:[#allocation9 + $0x1a68] sm:$0xff]
    %v1469 = vld [vmem:[#allocation9 + $0x1a70] sm:$0xff]
    %v1470 = vld [vmem:[#allocation9 + $0x1a78] sm:$0xff]
    %v1471 = vld [vmem:[#allocation9 + $0x1a80] sm:$0xff]
    %v1472 = vld [vmem:[#allocation9 + $0x1a88] sm:$0xff]
    %v1473 = vld [vmem:[#allocation9 + $0x1a90] sm:$0xff]
    %v1474 = vld [vmem:[#allocation9 + $0x1a98] sm:$0xff]
    %v1475 = vld [vmem:[#allocation9 + $0x1aa0] sm:$0xff]
    %v1476 = vld [vmem:[#allocation9 + $0x1aa8] sm:$0xff]
    %v1477 = vld [vmem:[#allocation9 + $0x1ab0] sm:$0xff]
    %v1478 = vld [vmem:[#allocation9 + $0x1ab8] sm:$0xff]
    %v1479 = vld [vmem:[#allocation9 + $0x1ac0] sm:$0xff]
    %v1480 = vld [vmem:[#allocation9 + $0x1ac8] sm:$0xff]
    %v1481 = vld [vmem:[#allocation9 + $0x1ad0] sm:$0xff]
    %v1482 = vld [vmem:[#allocation9 + $0x1ad8] sm:$0xff]
    %v1483 = vld [vmem:[#allocation9 + $0x1ae0] sm:$0xff]
    %v1484 = vld [vmem:[#allocation9 + $0x1ae8] sm:$0xff]
    %v1485 = vld [vmem:[#allocation9 + $0x1af0] sm:$0xff]
    %v1486 = vld [vmem:[#allocation9 + $0x1af8] sm:$0xff]
    %v1487 = vld [vmem:[#allocation9 + $0x1b00] sm:$0xff]
    %v1488 = vld [vmem:[#allocation9 + $0x1b08] sm:$0xff]
    %v1489 = vld [vmem:[#allocation9 + $0x1b10] sm:$0xff]
    %v1490 = vld [vmem:[#allocation9 + $0x1b18] sm:$0xff]
    %v1491 = vld [vmem:[#allocation9 + $0x1b20] sm:$0xff]
    %v1492 = vld [vmem:[#allocation9 + $0x1b28] sm:$0xff]
    %v1493 = vld [vmem:[#allocation9 + $0x1b30] sm:$0xff]
    %v1494 = vld [vmem:[#allocation9 + $0x1b38] sm:$0xff]
    %v1495 = vld [vmem:[#allocation9 + $0x1b40] sm:$0xff]
    %v1496 = vld [vmem:[#allocation9 + $0x1b48] sm:$0xff]
    %v1497 = vld [vmem:[#allocation9 + $0x1b50] sm:$0xff]
    %v1498 = vld [vmem:[#allocation9 + $0x1b58] sm:$0xff]
    %v1499 = vld [vmem:[#allocation9 + $0x1b60] sm:$0xff]
    %v1500 = vld [vmem:[#allocation9 + $0x1b68] sm:$0xff]
    %v1501 = vld [vmem:[#allocation9 + $0x1b70] sm:$0xff]
    %v1502 = vld [vmem:[#allocation9 + $0x1b78] sm:$0xff]
    %v1503 = vld [vmem:[#allocation9 + $0x1b80] sm:$0xff]
    %v1504 = vld [vmem:[#allocation9 + $0x1b88] sm:$0xff]
    %v1505 = vld [vmem:[#allocation9 + $0x1b90] sm:$0xff]
    %v1506 = vld [vmem:[#allocation9 + $0x1b98] sm:$0xff]
    %v1507 = vld [vmem:[#allocation9 + $0x1ba0] sm:$0xff]
    %v1508 = vld [vmem:[#allocation9 + $0x1ba8] sm:$0xff]
    %v1509 = vld [vmem:[#allocation9 + $0x1bb0] sm:$0xff]
    %v1510 = vld [vmem:[#allocation9 + $0x1bb8] sm:$0xff]
    %v1511 = vld [vmem:[#allocation9 + $0x1bc0] sm:$0xff]
    %v1512 = vld [vmem:[#allocation9 + $0x1bc8] sm:$0xff]
    %v1513 = vld [vmem:[#allocation9 + $0x1bd0] sm:$0xff]
    %v1514 = vld [vmem:[#allocation9 + $0x1bd8] sm:$0xff]
    %v1515 = vld [vmem:[#allocation9 + $0x1be0] sm:$0xff]
    %v1516 = vld [vmem:[#allocation9 + $0x1be8] sm:$0xff]
    %v1517 = vld [vmem:[#allocation9 + $0x1bf0] sm:$0xff]
    %v1518 = vld [vmem:[#allocation9 + $0x1bf8] sm:$0xff]
    %v1519 = vld [vmem:[#allocation9 + $0x1c00] sm:$0xff]
    %v1520 = vld [vmem:[#allocation9 + $0x1c08] sm:$0xff]
    %v1521 = vld [vmem:[#allocation9 + $0x1c10] sm:$0xff]
    %v1522 = vld [vmem:[#allocation9 + $0x1c18] sm:$0xff]
    %v1523 = vld [vmem:[#allocation9 + $0x1c20] sm:$0xff]
    %v1524 = vld [vmem:[#allocation9 + $0x1c28] sm:$0xff]
    %v1525 = vld [vmem:[#allocation9 + $0x1c30] sm:$0xff]
    %v1526 = vld [vmem:[#allocation9 + $0x1c38] sm:$0xff]
    %v1527 = vld [vmem:[#allocation9 + $0x1c40] sm:$0xff]
    %v1528 = vld [vmem:[#allocation9 + $0x1c48] sm:$0xff]
    %v1529 = vld [vmem:[#allocation9 + $0x1c50] sm:$0xff]
    %v1530 = vld [vmem:[#allocation9 + $0x1c58] sm:$0xff]
    %v1531 = vld [vmem:[#allocation9 + $0x1c60] sm:$0xff]
    %v1532 = vld [vmem:[#allocation9 + $0x1c68] sm:$0xff]
    %v1533 = vld [vmem:[#allocation9 + $0x1c70] sm:$0xff]
    %v1534 = vld [vmem:[#allocation9 + $0x1c78] sm:$0xff]
    %v1535 = vld [vmem:[#allocation9 + $0x1c80] sm:$0xff]
    %v1536 = vld [vmem:[#allocation9 + $0x1c88] sm:$0xff]
    %v1537 = vld [vmem:[#allocation9 + $0x1c90] sm:$0xff]
    %v1538 = vld [vmem:[#allocation9 + $0x1c98] sm:$0xff]
    %v1539 = vld [vmem:[#allocation9 + $0x1ca0] sm:$0xff]
    %v1540 = vld [vmem:[#allocation9 + $0x1ca8] sm:$0xff]
    %v1541 = vld [vmem:[#allocation9 + $0x1cb0] sm:$0xff]
    %v1542 = vld [vmem:[#allocation9 + $0x1cb8] sm:$0xff]
    %v1543 = vld [vmem:[#allocation9 + $0x1cc0] sm:$0xff]
    %v1544 = vld [vmem:[#allocation9 + $0x1cc8] sm:$0xff]
    %v1545 = vld [vmem:[#allocation9 + $0x1cd0] sm:$0xff]
    %v1546 = vld [vmem:[#allocation9 + $0x1cd8] sm:$0xff]
    %v1547 = vld [vmem:[#allocation9 + $0x1ce0] sm:$0xff]
    %v1548 = vld [vmem:[#allocation9 + $0x1ce8] sm:$0xff]
    %v1549 = vld [vmem:[#allocation9 + $0x1cf0] sm:$0xff]
    %v1550 = vld [vmem:[#allocation9 + $0x1cf8] sm:$0xff]
    %v1551 = vld [vmem:[#allocation9 + $0x1d00] sm:$0xff]
    %v1552 = vld [vmem:[#allocation9 + $0x1d08] sm:$0xff]
    %v1553 = vld [vmem:[#allocation9 + $0x1d10] sm:$0xff]
    %v1554 = vld [vmem:[#allocation9 + $0x1d18] sm:$0xff]
    %v1555 = vld [vmem:[#allocation9 + $0x1d20] sm:$0xff]
    %v1556 = vld [vmem:[#allocation9 + $0x1d28] sm:$0xff]
    %v1557 = vld [vmem:[#allocation9 + $0x1d30] sm:$0xff]
    %v1558 = vld [vmem:[#allocation9 + $0x1d38] sm:$0xff]
    %v1559 = vld [vmem:[#allocation9 + $0x1d40] sm:$0xff]
    %v1560 = vld [vmem:[#allocation9 + $0x1d48] sm:$0xff]
    %v1561 = vld [vmem:[#allocation9 + $0x1d50] sm:$0xff]
    %v1562 = vld [vmem:[#allocation9 + $0x1d58] sm:$0xff]
    %v1563 = vld [vmem:[#allocation9 + $0x1d60] sm:$0xff]
    %v1564 = vld [vmem:[#allocation9 + $0x1d68] sm:$0xff]
    %v1565 = vld [vmem:[#allocation9 + $0x1d70] sm:$0xff]
    %v1566 = vld [vmem:[#allocation9 + $0x1d78] sm:$0xff]
    %v1567 = vld [vmem:[#allocation9 + $0x1d80] sm:$0xff]
    %v1568 = vld [vmem:[#allocation9 + $0x1d88] sm:$0xff]
    %v1569 = vld [vmem:[#allocation9 + $0x1d90] sm:$0xff]
    %v1570 = vld [vmem:[#allocation9 + $0x1d98] sm:$0xff]
    %v1571 = vld [vmem:[#allocation9 + $0x1da0] sm:$0xff]
    %v1572 = vld [vmem:[#allocation9 + $0x1da8] sm:$0xff]
    %v1573 = vld [vmem:[#allocation9 + $0x1db0] sm:$0xff]
    %v1574 = vld [vmem:[#allocation9 + $0x1db8] sm:$0xff]
    %v1575 = vld [vmem:[#allocation9 + $0x1dc0] sm:$0xff]
    %v1576 = vld [vmem:[#allocation9 + $0x1dc8] sm:$0xff]
    %v1577 = vld [vmem:[#allocation9 + $0x1dd0] sm:$0xff]
    %v1578 = vld [vmem:[#allocation9 + $0x1dd8] sm:$0xff]
    %v1579 = vld [vmem:[#allocation9 + $0x1de0] sm:$0xff]
    %v1580 = vld [vmem:[#allocation9 + $0x1de8] sm:$0xff]
    %v1581 = vld [vmem:[#allocation9 + $0x1df0] sm:$0xff]
    %v1582 = vld [vmem:[#allocation9 + $0x1df8] sm:$0xff]
    %v1583 = vld [vmem:[#allocation9 + $0x1e00] sm:$0xff]
    %v1584 = vld [vmem:[#allocation9 + $0x1e08] sm:$0xff]
    %v1585 = vld [vmem:[#allocation9 + $0x1e10] sm:$0xff]
    %v1586 = vld [vmem:[#allocation9 + $0x1e18] sm:$0xff]
    %v1587 = vld [vmem:[#allocation9 + $0x1e20] sm:$0xff]
    %v1588 = vld [vmem:[#allocation9 + $0x1e28] sm:$0xff]
    %v1589 = vld [vmem:[#allocation9 + $0x1e30] sm:$0xff]
    %v1590 = vld [vmem:[#allocation9 + $0x1e38] sm:$0xff]
    %v1591 = vld [vmem:[#allocation9 + $0x1e40] sm:$0xff]
    %v1592 = vld [vmem:[#allocation9 + $0x1e48] sm:$0xff]
    %v1593 = vld [vmem:[#allocation9 + $0x1e50] sm:$0xff]
    %v1594 = vld [vmem:[#allocation9 + $0x1e58] sm:$0xff]
    %v1595 = vld [vmem:[#allocation9 + $0x1e60] sm:$0xff]
    %v1596 = vld [vmem:[#allocation9 + $0x1e68] sm:$0xff]
    %v1597 = vld [vmem:[#allocation9 + $0x1e70] sm:$0xff]
    %v1598 = vld [vmem:[#allocation9 + $0x1e78] sm:$0xff]
    %v1599 = vld [vmem:[#allocation9 + $0x1e80] sm:$0xff]
    %v1600 = vld [vmem:[#allocation9 + $0x1e88] sm:$0xff]
    %v1601 = vld [vmem:[#allocation9 + $0x1e90] sm:$0xff]
    %v1602 = vld [vmem:[#allocation9 + $0x1e98] sm:$0xff]
    %v1603 = vld [vmem:[#allocation9 + $0x1ea0] sm:$0xff]
    %v1604 = vld [vmem:[#allocation9 + $0x1ea8] sm:$0xff]
    %v1605 = vld [vmem:[#allocation9 + $0x1eb0] sm:$0xff]
    %v1606 = vld [vmem:[#allocation9 + $0x1eb8] sm:$0xff]
    %v1607 = vld [vmem:[#allocation9 + $0x1ec0] sm:$0xff]
    %v1608 = vld [vmem:[#allocation9 + $0x1ec8] sm:$0xff]
    %v1609 = vld [vmem:[#allocation9 + $0x1ed0] sm:$0xff]
    %v1610 = vld [vmem:[#allocation9 + $0x1ed8] sm:$0xff]
    %v1611 = vld [vmem:[#allocation9 + $0x1ee0] sm:$0xff]
    %v1612 = vld [vmem:[#allocation9 + $0x1ee8] sm:$0xff]
    %v1613 = vld [vmem:[#allocation9 + $0x1ef0] sm:$0xff]
    %v1614 = vld [vmem:[#allocation9 + $0x1ef8] sm:$0xff]
    %v1615 = vld [vmem:[#allocation9 + $0x1f00] sm:$0xff]
    %v1616 = vld [vmem:[#allocation9 + $0x1f08] sm:$0xff]
    %v1617 = vld [vmem:[#allocation9 + $0x1f10] sm:$0xff]
    %v1618 = vld [vmem:[#allocation9 + $0x1f18] sm:$0xff]
    %v1619 = vld [vmem:[#allocation9 + $0x1f20] sm:$0xff]
    %v1620 = vld [vmem:[#allocation9 + $0x1f28] sm:$0xff]
    %v1621 = vld [vmem:[#allocation9 + $0x1f30] sm:$0xff]
    %v1622 = vld [vmem:[#allocation9 + $0x1f38] sm:$0xff]
    %v1623 = vld [vmem:[#allocation9 + $0x1f40] sm:$0xff]
    %v1624 = vld [vmem:[#allocation9 + $0x1f48] sm:$0xff]
    %v1625 = vld [vmem:[#allocation9 + $0x1f50] sm:$0xff]
    %v1626 = vld [vmem:[#allocation9 + $0x1f58] sm:$0xff]
    %v1627 = vld [vmem:[#allocation9 + $0x1f60] sm:$0xff]
    %v1628 = vld [vmem:[#allocation9 + $0x1f68] sm:$0xff]
    %v1629 = vld [vmem:[#allocation9 + $0x1f70] sm:$0xff]
    %v1630 = vld [vmem:[#allocation9 + $0x1f78] sm:$0xff]
    %v1631 = vld [vmem:[#allocation9 + $0x1f80] sm:$0xff]
    %v1632 = vld [vmem:[#allocation9 + $0x1f88] sm:$0xff]
    %v1633 = vld [vmem:[#allocation9 + $0x1f90] sm:$0xff]
    %v1634 = vld [vmem:[#allocation9 + $0x1f98] sm:$0xff]
    %v1635 = vld [vmem:[#allocation9 + $0x1fa0] sm:$0xff]
    %v1636 = vld [vmem:[#allocation9 + $0x1fa8] sm:$0xff]
    %v1637 = vld [vmem:[#allocation9 + $0x1fb0] sm:$0xff]
    %v1638 = vld [vmem:[#allocation9 + $0x1fb8] sm:$0xff]
    %v1639 = vld [vmem:[#allocation9 + $0x1fc0] sm:$0xff]
    %v1640 = vld [vmem:[#allocation9 + $0x1fc8] sm:$0xff]
    %v1641 = vld [vmem:[#allocation9 + $0x1fd0] sm:$0xff]
    %v1642 = vld [vmem:[#allocation9 + $0x1fd8] sm:$0xff]
    %v1643 = vld [vmem:[#allocation9 + $0x1fe0] sm:$0xff]
    %v1644 = vld [vmem:[#allocation9 + $0x1fe8] sm:$0xff]
    %v1645 = vld [vmem:[#allocation9 + $0x1ff0] sm:$0xff]
    %v1646 = vld [vmem:[#allocation9 + $0x1ff8] sm:$0xff]
    %v1647 = vld [vmem:[#allocation10] sm:$0xff]
    %v1649 = vlaneseq
    %v1650 = vshrl.u32 %v1649, 7
    %v1651 = vsub.s32 0, %v1650
    %v1652 = vrot.slane %v1647, %v1651
    %v1653 = vlaneseq
    %v1654 = vshrl.u32 %v1653, 7
    %v1655 = vsub.s32 1, %v1654
    %v1656 = vrot.slane %v1647, %v1655
    %v1657 = vlaneseq
    %v1658 = vshrl.u32 %v1657, 7
    %v1659 = vsub.s32 2, %v1658
    %v1660 = vrot.slane %v1647, %v1659
    %v1661 = vlaneseq
    %v1662 = vshrl.u32 %v1661, 7
    %v1663 = vsub.s32 3, %v1662
    %v1664 = vrot.slane %v1647, %v1663
    %v1665 = vlaneseq
    %v1666 = vshrl.u32 %v1665, 7
    %v1667 = vsub.s32 4, %v1666
    %v1668 = vrot.slane %v1647, %v1667
    %v1669 = vlaneseq
    %v1670 = vshrl.u32 %v1669, 7
    %v1671 = vsub.s32 5, %v1670
    %v1672 = vrot.slane %v1647, %v1671
    %v1673 = vlaneseq
    %v1674 = vshrl.u32 %v1673, 7
    %v1675 = vsub.s32 6, %v1674
    %v1676 = vrot.slane %v1647, %v1675
    %v1677 = vlaneseq
    %v1678 = vshrl.u32 %v1677, 7
    %v1679 = vsub.s32 7, %v1678
    %v1680 = vrot.slane %v1647, %v1679
    %1689 = vmatprep.subr.mxu0 %v624
    %1690 = vmatpush1.msra.mxu0 %v623
    %1691 = vmatprep.subr.mxu0 %v632
    %1692 = vmatpush1.msra.mxu0 %v631
    %1693 = vmatprep.subr.mxu0 %v640
    %1694 = vmatpush1.msra.mxu0 %v639
    %1695 = vmatprep.subr.mxu0 %v648
    %1696 = vmatpush1.msra.mxu0 %v647
    %1697 = vmatprep.subr.mxu0 %v656
    %1698 = vmatpush1.msra.mxu0 %v655
    %1699 = vmatprep.subr.mxu0 %v664
    %1700 = vmatpush1.msra.mxu0 %v663
    %1701 = vmatprep.subr.mxu0 %v672
    %1702 = vmatpush1.msra.mxu0 %v671
    %1703 = vmatprep.subr.mxu0 %v680
    %1704 = vmatpush1.msra.mxu0 %v679
    %1705 = vmatprep.subr.mxu0 %v688
    %1706 = vmatpush1.msra.mxu0 %v687
    %1707 = vmatprep.subr.mxu0 %v696
    %1708 = vmatpush1.msra.mxu0 %v695
    %1709 = vmatprep.subr.mxu0 %v704
    %1710 = vmatpush1.msra.mxu0 %v703
    %1711 = vmatprep.subr.mxu0 %v712
    %1712 = vmatpush1.msra.mxu0 %v711
    %1713 = vmatprep.subr.mxu0 %v720
    %1714 = vmatpush1.msra.mxu0 %v719
    %1715 = vmatprep.subr.mxu0 %v728
    %1716 = vmatpush1.msra.mxu0 %v727
    %1717 = vmatprep.subr.mxu0 %v736
    %1718 = vmatpush1.msra.mxu0 %v735
    %1719 = vmatprep.subr.mxu0 %v744
    %1720 = vmatpush1.msra.mxu0 %v743
    %1721 = vmatprep.subr.mxu0 %v752
    %1722 = vmatpush1.msra.mxu0 %v751
    %1723 = vmatprep.subr.mxu0 %v760
    %1724 = vmatpush1.msra.mxu0 %v759
    %1725 = vmatprep.subr.mxu0 %v768
    %1726 = vmatpush1.msra.mxu0 %v767
    %1727 = vmatprep.subr.mxu0 %v776
    %1728 = vmatpush1.msra.mxu0 %v775
    %1729 = vmatprep.subr.mxu0 %v784
    %1730 = vmatpush1.msra.mxu0 %v783
    %1731 = vmatprep.subr.mxu0 %v792
    %1732 = vmatpush1.msra.mxu0 %v791
    %1733 = vmatprep.subr.mxu0 %v800
    %1734 = vmatpush1.msra.mxu0 %v799
    %1735 = vmatprep.subr.mxu0 %v808
    %1736 = vmatpush1.msra.mxu0 %v807
    %1737 = vmatprep.subr.mxu0 %v816
    %1738 = vmatpush1.msra.mxu0 %v815
    %1739 = vmatprep.subr.mxu0 %v824
    %1740 = vmatpush1.msra.mxu0 %v823
    %1741 = vmatprep.subr.mxu0 %v832
    %1742 = vmatpush1.msra.mxu0 %v831
    %1743 = vmatprep.subr.mxu0 %v840
    %1744 = vmatpush1.msra.mxu0 %v839
    %1745 = vmatprep.subr.mxu0 %v848
    %1746 = vmatpush1.msra.mxu0 %v847
    %1747 = vmatprep.subr.mxu0 %v856
    %1748 = vmatpush1.msra.mxu0 %v855
    %1749 = vmatprep.subr.mxu0 %v864
    %1750 = vmatpush1.msra.mxu0 %v863
    %1751 = vmatprep.subr.mxu0 %v872
    %1752 = vmatpush1.msra.mxu0 %v871
    %1753 = vmatprep.mubr.f32.mxu0 %v616
    %1754 = vmatmul.mubr.f32.gmra.mrb[0].mxu0 %v615
    %v1755 = vpop.f32.mrb[0].mxu0
    %v1756 = vadd.f32 %v1652, %v1755
    %v1757 = vpop.f32.mrb[0].mxu0
    %v1758 = vadd.f32 %v1656, %v1757
    %1759 = vdwg.mxu0
    %1760 = vmatprep.subr.mxu0 %v880
    %1761 = vmatpush1.msra.mxu0 %v879
    %1762 = vmatprep.subr.mxu0 %v888
    %1763 = vmatpush1.msra.mxu0 %v887
    %1764 = vmatprep.subr.mxu0 %v896
    %1765 = vmatpush1.msra.mxu0 %v895
    %1766 = vmatprep.subr.mxu0 %v904
    %1767 = vmatpush1.msra.mxu0 %v903
    %1768 = vmatprep.subr.mxu0 %v912
    %1769 = vmatpush1.msra.mxu0 %v911
    %1770 = vmatprep.subr.mxu0 %v920
    %1771 = vmatpush1.msra.mxu0 %v919
    %1772 = vmatprep.subr.mxu0 %v928
    %1773 = vmatpush1.msra.mxu0 %v927
    %1774 = vmatprep.subr.mxu0 %v936
    %1775 = vmatpush1.msra.mxu0 %v935
    %1776 = vmatprep.subr.mxu0 %v944
    %1777 = vmatpush1.msra.mxu0 %v943
    %1778 = vmatprep.subr.mxu0 %v952
    %1779 = vmatpush1.msra.mxu0 %v951
    %1780 = vmatprep.subr.mxu0 %v960
    %1781 = vmatpush1.msra.mxu0 %v959
    %1782 = vmatprep.subr.mxu0 %v968
    %1783 = vmatpush1.msra.mxu0 %v967
    %1784 = vmatprep.subr.mxu0 %v976
    %1785 = vmatpush1.msra.mxu0 %v975
    %1786 = vmatprep.subr.mxu0 %v984
    %1787 = vmatpush1.msra.mxu0 %v983
    %1788 = vmatprep.subr.mxu0 %v992
    %1789 = vmatpush1.msra.mxu0 %v991
    %1790 = vmatprep.subr.mxu0 %v1000
    %1791 = vmatpush1.msra.mxu0 %v999
    %1792 = vmatprep.subr.mxu0 %v1008
    %1793 = vmatpush1.msra.mxu0 %v1007
    %1794 = vmatprep.subr.mxu0 %v1016
    %1795 = vmatpush1.msra.mxu0 %v1015
    %1796 = vmatprep.subr.mxu0 %v1024
    %1797 = vmatpush1.msra.mxu0 %v1023
    %1798 = vmatprep.subr.mxu0 %v1032
    %1799 = vmatpush1.msra.mxu0 %v1031
    %1800 = vmatprep.subr.mxu0 %v1040
    %1801 = vmatpush1.msra.mxu0 %v1039
    %1802 = vmatprep.subr.mxu0 %v1048
    %1803 = vmatpush1.msra.mxu0 %v1047
    %1804 = vmatprep.subr.mxu0 %v1056
    %1805 = vmatpush1.msra.mxu0 %v1055
    %1806 = vmatprep.subr.mxu0 %v1064
    %1807 = vmatpush1.msra.mxu0 %v1063
    %1808 = vmatprep.subr.mxu0 %v1072
    %1809 = vmatpush1.msra.mxu0 %v1071
    %1810 = vmatprep.subr.mxu0 %v1080
    %1811 = vmatpush1.msra.mxu0 %v1079
    %1812 = vmatprep.subr.mxu0 %v1088
    %1813 = vmatpush1.msra.mxu0 %v1087
    %1814 = vmatprep.subr.mxu0 %v1096
    %1815 = vmatpush1.msra.mxu0 %v1095
    %1816 = vmatprep.subr.mxu0 %v1104
    %1817 = vmatpush1.msra.mxu0 %v1103
    %1818 = vmatprep.subr.mxu0 %v1112
    %1819 = vmatpush1.msra.mxu0 %v1111
    %1820 = vmatprep.subr.mxu0 %v1120
    %1821 = vmatpush1.msra.mxu0 %v1119
    %1822 = vmatprep.subr.mxu0 %v1128
    %1823 = vmatpush1.msra.mxu0 %v1127
    %1824 = vmatprep.mubr.f32.mxu0 %v618
    %1825 = vmatmul.mubr.f32.gmra.mrb[0].mxu0 %v617
    %v1826 = vpop.f32.mrb[0].mxu0
    %v1827 = vadd.f32 %v1756, %v1826
    %v1828 = vpop.f32.mrb[0].mxu0
    %v1829 = vadd.f32 %v1758, %v1828
    %1830 = vdwg.mxu0
    %1831 = vmatprep.subr.mxu0 %v1136
    %1832 = vmatpush1.msra.mxu0 %v1135
    %1833 = vmatprep.subr.mxu0 %v1144
    %1834 = vmatpush1.msra.mxu0 %v1143
    %1835 = vmatprep.subr.mxu0 %v1152
    %1836 = vmatpush1.msra.mxu0 %v1151
    %1837 = vmatprep.subr.mxu0 %v1160
    %1838 = vmatpush1.msra.mxu0 %v1159
    %1839 = vmatprep.subr.mxu0 %v1168
    %1840 = vmatpush1.msra.mxu0 %v1167
    %1841 = vmatprep.subr.mxu0 %v1176
    %1842 = vmatpush1.msra.mxu0 %v1175
    %1843 = vmatprep.subr.mxu0 %v1184
    %1844 = vmatpush1.msra.mxu0 %v1183
    %1845 = vmatprep.subr.mxu0 %v1192
    %1846 = vmatpush1.msra.mxu0 %v1191
    %1847 = vmatprep.subr.mxu0 %v1200
    %1848 = vmatpush1.msra.mxu0 %v1199
    %1849 = vmatprep.subr.mxu0 %v1208
    %1850 = vmatpush1.msra.mxu0 %v1207
    %1851 = vmatprep.subr.mxu0 %v1216
    %1852 = vmatpush1.msra.mxu0 %v1215
    %1853 = vmatprep.subr.mxu0 %v1224
    %1854 = vmatpush1.msra.mxu0 %v1223
    %1855 = vmatprep.subr.mxu0 %v1232
    %1856 = vmatpush1.msra.mxu0 %v1231
    %1857 = vmatprep.subr.mxu0 %v1240
    %1858 = vmatpush1.msra.mxu0 %v1239
    %1859 = vmatprep.subr.mxu0 %v1248
    %1860 = vmatpush1.msra.mxu0 %v1247
    %1861 = vmatprep.subr.mxu0 %v1256
    %1862 = vmatpush1.msra.mxu0 %v1255
    %1863 = vmatprep.subr.mxu0 %v1264
    %1864 = vmatpush1.msra.mxu0 %v1263
    %1865 = vmatprep.subr.mxu0 %v1272
    %1866 = vmatpush1.msra.mxu0 %v1271
    %1867 = vmatprep.subr.mxu0 %v1280
    %1868 = vmatpush1.msra.mxu0 %v1279
    %1869 = vmatprep.subr.mxu0 %v1288
    %1870 = vmatpush1.msra.mxu0 %v1287
    %1871 = vmatprep.subr.mxu0 %v1296
    %1872 = vmatpush1.msra.mxu0 %v1295
    %1873 = vmatprep.subr.mxu0 %v1304
    %1874 = vmatpush1.msra.mxu0 %v1303
    %1875 = vmatprep.subr.mxu0 %v1312
    %1876 = vmatpush1.msra.mxu0 %v1311
    %1877 = vmatprep.subr.mxu0 %v1320
    %1878 = vmatpush1.msra.mxu0 %v1319
    %1879 = vmatprep.subr.mxu0 %v1328
    %1880 = vmatpush1.msra.mxu0 %v1327
    %1881 = vmatprep.subr.mxu0 %v1336
    %1882 = vmatpush1.msra.mxu0 %v1335
    %1883 = vmatprep.subr.mxu0 %v1344
    %1884 = vmatpush1.msra.mxu0 %v1343
    %1885 = vmatprep.subr.mxu0 %v1352
    %1886 = vmatpush1.msra.mxu0 %v1351
    %1887 = vmatprep.subr.mxu0 %v1360
    %1888 = vmatpush1.msra.mxu0 %v1359
    %1889 = vmatprep.subr.mxu0 %v1368
    %1890 = vmatpush1.msra.mxu0 %v1367
    %1891 = vmatprep.subr.mxu0 %v1376
    %1892 = vmatpush1.msra.mxu0 %v1375
    %1893 = vmatprep.subr.mxu0 %v1384
    %1894 = vmatpush1.msra.mxu0 %v1383
    %1895 = vmatprep.mubr.f32.mxu0 %v620
    %1896 = vmatmul.mubr.f32.gmra.mrb[0].mxu0 %v619
    %v1897 = vpop.f32.mrb[0].mxu0
    %v1898 = vadd.f32 %v1827, %v1897
    %v1899 = vpop.f32.mrb[0].mxu0
    %v1900 = vadd.f32 %v1829, %v1899
    %1901 = vdwg.mxu0
    %1902 = vmatprep.subr.mxu0 %v1392
    %1903 = vmatpush1.msra.mxu0 %v1391
    %1904 = vmatprep.subr.mxu0 %v1400
    %1905 = vmatpush1.msra.mxu0 %v1399
    %1906 = vmatprep.subr.mxu0 %v1408
    %1907 = vmatpush1.msra.mxu0 %v1407
    %1908 = vmatprep.subr.mxu0 %v1416
    %1909 = vmatpush1.msra.mxu0 %v1415
    %1910 = vmatprep.subr.mxu0 %v1424
    %1911 = vmatpush1.msra.mxu0 %v1423
    %1912 = vmatprep.subr.mxu0 %v1432
    %1913 = vmatpush1.msra.mxu0 %v1431
    %1914 = vmatprep.subr.mxu0 %v1440
    %1915 = vmatpush1.msra.mxu0 %v1439
    %1916 = vmatprep.subr.mxu0 %v1448
    %1917 = vmatpush1.msra.mxu0 %v1447
    %1918 = vmatprep.subr.mxu0 %v1456
    %1919 = vmatpush1.msra.mxu0 %v1455
    %1920 = vmatprep.subr.mxu0 %v1464
    %1921 = vmatpush1.msra.mxu0 %v1463
    %1922 = vmatprep.subr.mxu0 %v1472
    %1923 = vmatpush1.msra.mxu0 %v1471
    %1924 = vmatprep.subr.mxu0 %v1480
    %1925 = vmatpush1.msra.mxu0 %v1479
    %1926 = vmatprep.subr.mxu0 %v1488
    %1927 = vmatpush1.msra.mxu0 %v1487
    %1928 = vmatprep.subr.mxu0 %v1496
    %1929 = vmatpush1.msra.mxu0 %v1495
    %1930 = vmatprep.subr.mxu0 %v1504
    %1931 = vmatpush1.msra.mxu0 %v1503
    %1932 = vmatprep.subr.mxu0 %v1512
    %1933 = vmatpush1.msra.mxu0 %v1511
    %1934 = vmatprep.subr.mxu0 %v1520
    %1935 = vmatpush1.msra.mxu0 %v1519
    %1936 = vmatprep.subr.mxu0 %v1528
    %1937 = vmatpush1.msra.mxu0 %v1527
    %1938 = vmatprep.subr.mxu0 %v1536
    %1939 = vmatpush1.msra.mxu0 %v1535
    %1940 = vmatprep.subr.mxu0 %v1544
    %1941 = vmatpush1.msra.mxu0 %v1543
    %1942 = vmatprep.subr.mxu0 %v1552
    %1943 = vmatpush1.msra.mxu0 %v1551
    %1944 = vmatprep.subr.mxu0 %v1560
    %1945 = vmatpush1.msra.mxu0 %v1559
    %1946 = vmatprep.subr.mxu0 %v1568
    %1947 = vmatpush1.msra.mxu0 %v1567
    %1948 = vmatprep.subr.mxu0 %v1576
    %1949 = vmatpush1.msra.mxu0 %v1575
    %1950 = vmatprep.subr.mxu0 %v1584
    %1951 = vmatpush1.msra.mxu0 %v1583
    %1952 = vmatprep.subr.mxu0 %v1592
    %1953 = vmatpush1.msra.mxu0 %v1591
    %1954 = vmatprep.subr.mxu0 %v1600
    %1955 = vmatpush1.msra.mxu0 %v1599
    %1956 = vmatprep.subr.mxu0 %v1608
    %1957 = vmatpush1.msra.mxu0 %v1607
    %1958 = vmatprep.subr.mxu0 %v1616
    %1959 = vmatpush1.msra.mxu0 %v1615
    %1960 = vmatprep.subr.mxu0 %v1624
    %1961 = vmatpush1.msra.mxu0 %v1623
    %1962 = vmatprep.subr.mxu0 %v1632
    %1963 = vmatpush1.msra.mxu0 %v1631
    %1964 = vmatprep.subr.mxu0 %v1640
    %1965 = vmatpush1.msra.mxu0 %v1639
    %1966 = vmatprep.mubr.f32.mxu0 %v622
    %1967 = vmatmul.mubr.f32.gmra.mrb[0].mxu0 %v621
    %v1968 = vpop.f32.mrb[0].mxu0
    %v1969 = vadd.f32 %v1898, %v1968
    %v1970 = vpop.f32.mrb[0].mxu0
    %v1971 = vadd.f32 %v1900, %v1970
    %1972 = vdwg.mxu0
    %1973 = vmatprep.subr.mxu0 %v626
    %1974 = vmatpush1.msra.mxu0 %v625
    %1975 = vmatprep.subr.mxu0 %v634
    %1976 = vmatpush1.msra.mxu0 %v633
    %1977 = vmatprep.subr.mxu0 %v642
    %1978 = vmatpush1.msra.mxu0 %v641
    %1979 = vmatprep.subr.mxu0 %v650
    %1980 = vmatpush1.msra.mxu0 %v649
    %1981 = vmatprep.subr.mxu0 %v658
    %1982 = vmatpush1.msra.mxu0 %v657
    %1983 = vmatprep.subr.mxu0 %v666
    %1984 = vmatpush1.msra.mxu0 %v665
    %1985 = vmatprep.subr.mxu0 %v674
    %1986 = vmatpush1.msra.mxu0 %v673
    %1987 = vmatprep.subr.mxu0 %v682
    %1988 = vmatpush1.msra.mxu0 %v681
    %1989 = vmatprep.subr.mxu0 %v690
    %1990 = vmatpush1.msra.mxu0 %v689
    %1991 = vmatprep.subr.mxu0 %v698
    %1992 = vmatpush1.msra.mxu0 %v697
    %1993 = vmatprep.subr.mxu0 %v706
    %1994 = vmatpush1.msra.mxu0 %v705
    %1995 = vmatprep.subr.mxu0 %v714
    %1996 = vmatpush1.msra.mxu0 %v713
    %1997 = vmatprep.subr.mxu0 %v722
    %1998 = vmatpush1.msra.mxu0 %v721
    %1999 = vmatprep.subr.mxu0 %v730
    %2000 = vmatpush1.msra.mxu0 %v729
    %2001 = vmatprep.subr.mxu0 %v738
    %2002 = vmatpush1.msra.mxu0 %v737
    %2003 = vmatprep.subr.mxu0 %v746
    %2004 = vmatpush1.msra.mxu0 %v745
    %2005 = vmatprep.subr.mxu0 %v754
    %2006 = vmatpush1.msra.mxu0 %v753
    %2007 = vmatprep.subr.mxu0 %v762
    %2008 = vmatpush1.msra.mxu0 %v761
    %2009 = vmatprep.subr.mxu0 %v770
    %2010 = vmatpush1.msra.mxu0 %v769
    %2011 = vmatprep.subr.mxu0 %v778
    %2012 = vmatpush1.msra.mxu0 %v777
    %2013 = vmatprep.subr.mxu0 %v786
    %2014 = vmatpush1.msra.mxu0 %v785
    %2015 = vmatprep.subr.mxu0 %v794
    %2016 = vmatpush1.msra.mxu0 %v793
    %2017 = vmatprep.subr.mxu0 %v802
    %2018 = vmatpush1.msra.mxu0 %v801
    %2019 = vmatprep.subr.mxu0 %v810
    %2020 = vmatpush1.msra.mxu0 %v809
    %2021 = vmatprep.subr.mxu0 %v818
    %2022 = vmatpush1.msra.mxu0 %v817
    %2023 = vmatprep.subr.mxu0 %v826
    %2024 = vmatpush1.msra.mxu0 %v825
    %2025 = vmatprep.subr.mxu0 %v834
    %2026 = vmatpush1.msra.mxu0 %v833
    %2027 = vmatprep.subr.mxu0 %v842
    %2028 = vmatpush1.msra.mxu0 %v841
    %2029 = vmatprep.subr.mxu0 %v850
    %2030 = vmatpush1.msra.mxu0 %v849
    %2031 = vmatprep.subr.mxu0 %v858
    %2032 = vmatpush1.msra.mxu0 %v857
    %2033 = vmatprep.subr.mxu0 %v866
    %2034 = vmatpush1.msra.mxu0 %v865
    %2035 = vmatprep.subr.mxu0 %v874
    %2036 = vmatpush1.msra.mxu0 %v873
    %2037 = vmatprep.mubr.f32.mxu0 %v616
    %2038 = vmatmul.mubr.f32.gmra.mrb[0].mxu0 %v615
    %v2039 = vpop.f32.mrb[0].mxu0
    %v2040 = vadd.f32 %v1660, %v2039
    %v2041 = vpop.f32.mrb[0].mxu0
    %v2042 = vadd.f32 %v1664, %v2041
    %2043 = vdwg.mxu0
    %2044 = vmatprep.subr.mxu0 %v882
    %2045 = vmatpush1.msra.mxu0 %v881
    %2046 = vmatprep.subr.mxu0 %v890
    %2047 = vmatpush1.msra.mxu0 %v889
    %2048 = vmatprep.subr.mxu0 %v898
    %2049 = vmatpush1.msra.mxu0 %v897
    %2050 = vmatprep.subr.mxu0 %v906
    %2051 = vmatpush1.msra.mxu0 %v905
    %2052 = vmatprep.subr.mxu0 %v914
    %2053 = vmatpush1.msra.mxu0 %v913
    %2054 = vmatprep.subr.mxu0 %v922
    %2055 = vmatpush1.msra.mxu0 %v921
    %2056 = vmatprep.subr.mxu0 %v930
    %2057 = vmatpush1.msra.mxu0 %v929
    %2058 = vmatprep.subr.mxu0 %v938
    %2059 = vmatpush1.msra.mxu0 %v937
    %2060 = vmatprep.subr.mxu0 %v946
    %2061 = vmatpush1.msra.mxu0 %v945
    %2062 = vmatprep.subr.mxu0 %v954
    %2063 = vmatpush1.msra.mxu0 %v953
    %2064 = vmatprep.subr.mxu0 %v962
    %2065 = vmatpush1.msra.mxu0 %v961
    %2066 = vmatprep.subr.mxu0 %v970
    %2067 = vmatpush1.msra.mxu0 %v969
    %2068 = vmatprep.subr.mxu0 %v978
    %2069 = vmatpush1.msra.mxu0 %v977
    %2070 = vmatprep.subr.mxu0 %v986
    %2071 = vmatpush1.msra.mxu0 %v985
    %2072 = vmatprep.subr.mxu0 %v994
    %2073 = vmatpush1.msra.mxu0 %v993
    %2074 = vmatprep.subr.mxu0 %v1002
    %2075 = vmatpush1.msra.mxu0 %v1001
    %2076 = vmatprep.subr.mxu0 %v1010
    %2077 = vmatpush1.msra.mxu0 %v1009
    %2078 = vmatprep.subr.mxu0 %v1018
    %2079 = vmatpush1.msra.mxu0 %v1017
    %2080 = vmatprep.subr.mxu0 %v1026
    %2081 = vmatpush1.msra.mxu0 %v1025
    %2082 = vmatprep.subr.mxu0 %v1034
    %2083 = vmatpush1.msra.mxu0 %v1033
    %2084 = vmatprep.subr.mxu0 %v1042
    %2085 = vmatpush1.msra.mxu0 %v1041
    %2086 = vmatprep.subr.mxu0 %v1050
    %2087 = vmatpush1.msra.mxu0 %v1049
    %2088 = vmatprep.subr.mxu0 %v1058
    %2089 = vmatpush1.msra.mxu0 %v1057
    %2090 = vmatprep.subr.mxu0 %v1066
    %2091 = vmatpush1.msra.mxu0 %v1065
    %2092 = vmatprep.subr.mxu0 %v1074
    %2093 = vmatpush1.msra.mxu0 %v1073
    %2094 = vmatprep.subr.mxu0 %v1082
    %2095 = vmatpush1.msra.mxu0 %v1081
    %2096 = vmatprep.subr.mxu0 %v1090
    %2097 = vmatpush1.msra.mxu0 %v1089
    %2098 = vmatprep.subr.mxu0 %v1098
    %2099 = vmatpush1.msra.mxu0 %v1097
    %2100 = vmatprep.subr.mxu0 %v1106
    %2101 = vmatpush1.msra.mxu0 %v1105
    %2102 = vmatprep.subr.mxu0 %v1114
    %2103 = vmatpush1.msra.mxu0 %v1113
    %2104 = vmatprep.subr.mxu0 %v1122
    %2105 = vmatpush1.msra.mxu0 %v1121
    %2106 = vmatprep.subr.mxu0 %v1130
    %2107 = vmatpush1.msra.mxu0 %v1129
    %2108 = vmatprep.mubr.f32.mxu0 %v618
    %2109 = vmatmul.mubr.f32.gmra.mrb[0].mxu0 %v617
    %v2110 = vpop.f32.mrb[0].mxu0
    %v2111 = vadd.f32 %v2040, %v2110
    %v2112 = vpop.f32.mrb[0].mxu0
    %v2113 = vadd.f32 %v2042, %v2112
    %2114 = vdwg.mxu0
    %2115 = vmatprep.subr.mxu0 %v1138
    %2116 = vmatpush1.msra.mxu0 %v1137
    %2117 = vmatprep.subr.mxu0 %v1146
    %2118 = vmatpush1.msra.mxu0 %v1145
    %2119 = vmatprep.subr.mxu0 %v1154
    %2120 = vmatpush1.msra.mxu0 %v1153
    %2121 = vmatprep.subr.mxu0 %v1162
    %2122 = vmatpush1.msra.mxu0 %v1161
    %2123 = vmatprep.subr.mxu0 %v1170
    %2124 = vmatpush1.msra.mxu0 %v1169
    %2125 = vmatprep.subr.mxu0 %v1178
    %2126 = vmatpush1.msra.mxu0 %v1177
    %2127 = vmatprep.subr.mxu0 %v1186
    %2128 = vmatpush1.msra.mxu0 %v1185
    %2129 = vmatprep.subr.mxu0 %v1194
    %2130 = vmatpush1.msra.mxu0 %v1193
    %2131 = vmatprep.subr.mxu0 %v1202
    %2132 = vmatpush1.msra.mxu0 %v1201
    %2133 = vmatprep.subr.mxu0 %v1210
    %2134 = vmatpush1.msra.mxu0 %v1209
    %2135 = vmatprep.subr.mxu0 %v1218
    %2136 = vmatpush1.msra.mxu0 %v1217
    %2137 = vmatprep.subr.mxu0 %v1226
    %2138 = vmatpush1.msra.mxu0 %v1225
    %2139 = vmatprep.subr.mxu0 %v1234
    %2140 = vmatpush1.msra.mxu0 %v1233
    %2141 = vmatprep.subr.mxu0 %v1242
    %2142 = vmatpush1.msra.mxu0 %v1241
    %2143 = vmatprep.subr.mxu0 %v1250
    %2144 = vmatpush1.msra.mxu0 %v1249
    %2145 = vmatprep.subr.mxu0 %v1258
    %2146 = vmatpush1.msra.mxu0 %v1257
    %2147 = vmatprep.subr.mxu0 %v1266
    %2148 = vmatpush1.msra.mxu0 %v1265
    %2149 = vmatprep.subr.mxu0 %v1274
    %2150 = vmatpush1.msra.mxu0 %v1273
    %2151 = vmatprep.subr.mxu0 %v1282
    %2152 = vmatpush1.msra.mxu0 %v1281
    %2153 = vmatprep.subr.mxu0 %v1290
    %2154 = vmatpush1.msra.mxu0 %v1289
    %2155 = vmatprep.subr.mxu0 %v1298
    %2156 = vmatpush1.msra.mxu0 %v1297
    %2157 = vmatprep.subr.mxu0 %v1306
    %2158 = vmatpush1.msra.mxu0 %v1305
    %2159 = vmatprep.subr.mxu0 %v1314
    %2160 = vmatpush1.msra.mxu0 %v1313
    %2161 = vmatprep.subr.mxu0 %v1322
    %2162 = vmatpush1.msra.mxu0 %v1321
    %2163 = vmatprep.subr.mxu0 %v1330
    %2164 = vmatpush1.msra.mxu0 %v1329
    %2165 = vmatprep.subr.mxu0 %v1338
    %2166 = vmatpush1.msra.mxu0 %v1337
    %2167 = vmatprep.subr.mxu0 %v1346
    %2168 = vmatpush1.msra.mxu0 %v1345
    %2169 = vmatprep.subr.mxu0 %v1354
    %2170 = vmatpush1.msra.mxu0 %v1353
    %2171 = vmatprep.subr.mxu0 %v1362
    %2172 = vmatpush1.msra.mxu0 %v1361
    %2173 = vmatprep.subr.mxu0 %v1370
    %2174 = vmatpush1.msra.mxu0 %v1369
    %2175 = vmatprep.subr.mxu0 %v1378
    %2176 = vmatpush1.msra.mxu0 %v1377
    %2177 = vmatprep.subr.mxu0 %v1386
    %2178 = vmatpush1.msra.mxu0 %v1385
    %2179 = vmatprep.mubr.f32.mxu0 %v620
    %2180 = vmatmul.mubr.f32.gmra.mrb[0].mxu0 %v619
    %v2181 = vpop.f32.mrb[0].mxu0
    %v2182 = vadd.f32 %v2111, %v2181
    %v2183 = vpop.f32.mrb[0].mxu0
    %v2184 = vadd.f32 %v2113, %v2183
    %2185 = vdwg.mxu0
    %2186 = vmatprep.subr.mxu0 %v1394
    %2187 = vmatpush1.msra.mxu0 %v1393
    %2188 = vmatprep.subr.mxu0 %v1402
    %2189 = vmatpush1.msra.mxu0 %v1401
    %2190 = vmatprep.subr.mxu0 %v1410
    %2191 = vmatpush1.msra.mxu0 %v1409
    %2192 = vmatprep.subr.mxu0 %v1418
    %2193 = vmatpush1.msra.mxu0 %v1417
    %2194 = vmatprep.subr.mxu0 %v1426
    %2195 = vmatpush1.msra.mxu0 %v1425
    %2196 = vmatprep.subr.mxu0 %v1434
    %2197 = vmatpush1.msra.mxu0 %v1433
    %2198 = vmatprep.subr.mxu0 %v1442
    %2199 = vmatpush1.msra.mxu0 %v1441
    %2200 = vmatprep.subr.mxu0 %v1450
    %2201 = vmatpush1.msra.mxu0 %v1449
    %2202 = vmatprep.subr.mxu0 %v1458
    %2203 = vmatpush1.msra.mxu0 %v1457
    %2204 = vmatprep.subr.mxu0 %v1466
    %2205 = vmatpush1.msra.mxu0 %v1465
    %2206 = vmatprep.subr.mxu0 %v1474
    %2207 = vmatpush1.msra.mxu0 %v1473
    %2208 = vmatprep.subr.mxu0 %v1482
    %2209 = vmatpush1.msra.mxu0 %v1481
    %2210 = vmatprep.subr.mxu0 %v1490
    %2211 = vmatpush1.msra.mxu0 %v1489
    %2212 = vmatprep.subr.mxu0 %v1498
    %2213 = vmatpush1.msra.mxu0 %v1497
    %2214 = vmatprep.subr.mxu0 %v1506
    %2215 = vmatpush1.msra.mxu0 %v1505
    %2216 = vmatprep.subr.mxu0 %v1514
    %2217 = vmatpush1.msra.mxu0 %v1513
    %2218 = vmatprep.subr.mxu0 %v1522
    %2219 = vmatpush1.msra.mxu0 %v1521
    %2220 = vmatprep.subr.mxu0 %v1530
    %2221 = vmatpush1.msra.mxu0 %v1529
    %2222 = vmatprep.subr.mxu0 %v1538
    %2223 = vmatpush1.msra.mxu0 %v1537
    %2224 = vmatprep.subr.mxu0 %v1546
    %2225 = vmatpush1.msra.mxu0 %v1545
    %2226 = vmatprep.subr.mxu0 %v1554
    %2227 = vmatpush1.msra.mxu0 %v1553
    %2228 = vmatprep.subr.mxu0 %v1562
    %2229 = vmatpush1.msra.mxu0 %v1561
    %2230 = vmatprep.subr.mxu0 %v1570
    %2231 = vmatpush1.msra.mxu0 %v1569
    %2232 = vmatprep.subr.mxu0 %v1578
    %2233 = vmatpush1.msra.mxu0 %v1577
    %2234 = vmatprep.subr.mxu0 %v1586
    %2235 = vmatpush1.msra.mxu0 %v1585
    %2236 = vmatprep.subr.mxu0 %v1594
    %2237 = vmatpush1.msra.mxu0 %v1593
    %2238 = vmatprep.subr.mxu0 %v1602
    %2239 = vmatpush1.msra.mxu0 %v1601
    %2240 = vmatprep.subr.mxu0 %v1610
    %2241 = vmatpush1.msra.mxu0 %v1609
    %2242 = vmatprep.subr.mxu0 %v1618
    %2243 = vmatpush1.msra.mxu0 %v1617
    %2244 = vmatprep.subr.mxu0 %v1626
    %2245 = vmatpush1.msra.mxu0 %v1625
    %2246 = vmatprep.subr.mxu0 %v1634
    %2247 = vmatpush1.msra.mxu0 %v1633
    %2248 = vmatprep.subr.mxu0 %v1642
    %2249 = vmatpush1.msra.mxu0 %v1641
    %2250 = vmatprep.mubr.f32.mxu0 %v622
    %2251 = vmatmul.mubr.f32.gmra.mrb[0].mxu0 %v621
    %v2252 = vpop.f32.mrb[0].mxu0
    %v2253 = vadd.f32 %v2182, %v2252
    %v2254 = vpop.f32.mrb[0].mxu0
    %v2255 = vadd.f32 %v2184, %v2254
    %2256 = vdwg.mxu0
    %2257 = vmatprep.subr.mxu0 %v628
    %2258 = vmatpush1.msra.mxu0 %v627
    %2259 = vmatprep.subr.mxu0 %v636
    %2260 = vmatpush1.msra.mxu0 %v635
    %2261 = vmatprep.subr.mxu0 %v644
    %2262 = vmatpush1.msra.mxu0 %v643
    %2263 = vmatprep.subr.mxu0 %v652
    %2264 = vmatpush1.msra.mxu0 %v651
    %2265 = vmatprep.subr.mxu0 %v660
    %2266 = vmatpush1.msra.mxu0 %v659
    %2267 = vmatprep.subr.mxu0 %v668
    %2268 = vmatpush1.msra.mxu0 %v667
    %2269 = vmatprep.subr.mxu0 %v676
    %2270 = vmatpush1.msra.mxu0 %v675
    %2271 = vmatprep.subr.mxu0 %v684
    %2272 = vmatpush1.msra.mxu0 %v683
    %2273 = vmatprep.subr.mxu0 %v692
    %2274 = vmatpush1.msra.mxu0 %v691
    %2275 = vmatprep.subr.mxu0 %v700
    %2276 = vmatpush1.msra.mxu0 %v699
    %2277 = vmatprep.subr.mxu0 %v708
    %2278 = vmatpush1.msra.mxu0 %v707
    %2279 = vmatprep.subr.mxu0 %v716
    %2280 = vmatpush1.msra.mxu0 %v715
    %2281 = vmatprep.subr.mxu0 %v724
    %2282 = vmatpush1.msra.mxu0 %v723
    %2283 = vmatprep.subr.mxu0 %v732
    %2284 = vmatpush1.msra.mxu0 %v731
    %2285 = vmatprep.subr.mxu0 %v740
    %2286 = vmatpush1.msra.mxu0 %v739
    %2287 = vmatprep.subr.mxu0 %v748
    %2288 = vmatpush1.msra.mxu0 %v747
    %2289 = vmatprep.subr.mxu0 %v756
    %2290 = vmatpush1.msra.mxu0 %v755
    %2291 = vmatprep.subr.mxu0 %v764
    %2292 = vmatpush1.msra.mxu0 %v763
    %2293 = vmatprep.subr.mxu0 %v772
    %2294 = vmatpush1.msra.mxu0 %v771
    %2295 = vmatprep.subr.mxu0 %v780
    %2296 = vmatpush1.msra.mxu0 %v779
    %2297 = vmatprep.subr.mxu0 %v788
    %2298 = vmatpush1.msra.mxu0 %v787
    %2299 = vmatprep.subr.mxu0 %v796
    %2300 = vmatpush1.msra.mxu0 %v795
    %2301 = vmatprep.subr.mxu0 %v804
    %2302 = vmatpush1.msra.mxu0 %v803
    %2303 = vmatprep.subr.mxu0 %v812
    %2304 = vmatpush1.msra.mxu0 %v811
    %2305 = vmatprep.subr.mxu0 %v820
    %2306 = vmatpush1.msra.mxu0 %v819
    %2307 = vmatprep.subr.mxu0 %v828
    %2308 = vmatpush1.msra.mxu0 %v827
    %2309 = vmatprep.subr.mxu0 %v836
    %2310 = vmatpush1.msra.mxu0 %v835
    %2311 = vmatprep.subr.mxu0 %v844
    %2312 = vmatpush1.msra.mxu0 %v843
    %2313 = vmatprep.subr.mxu0 %v852
    %2314 = vmatpush1.msra.mxu0 %v851
    %2315 = vmatprep.subr.mxu0 %v860
    %2316 = vmatpush1.msra.mxu0 %v859
    %2317 = vmatprep.subr.mxu0 %v868
    %2318 = vmatpush1.msra.mxu0 %v867
    %2319 = vmatprep.subr.mxu0 %v876
    %2320 = vmatpush1.msra.mxu0 %v875
    %2321 = vmatprep.mubr.f32.mxu0 %v616
    %2322 = vmatmul.mubr.f32.gmra.mrb[0].mxu0 %v615
    %v2323 = vpop.f32.mrb[0].mxu0
    %v2324 = vadd.f32 %v1668, %v2323
    %v2325 = vpop.f32.mrb[0].mxu0
    %v2326 = vadd.f32 %v1672, %v2325
    %2327 = vdwg.mxu0
    %2328 = vmatprep.subr.mxu0 %v884
    %2329 = vmatpush1.msra.mxu0 %v883
    %2330 = vmatprep.subr.mxu0 %v892
    %2331 = vmatpush1.msra.mxu0 %v891
    %2332 = vmatprep.subr.mxu0 %v900
    %2333 = vmatpush1.msra.mxu0 %v899
    %2334 = vmatprep.subr.mxu0 %v908
    %2335 = vmatpush1.msra.mxu0 %v907
    %2336 = vmatprep.subr.mxu0 %v916
    %2337 = vmatpush1.msra.mxu0 %v915
    %2338 = vmatprep.subr.mxu0 %v924
    %2339 = vmatpush1.msra.mxu0 %v923
    %2340 = vmatprep.subr.mxu0 %v932
    %2341 = vmatpush1.msra.mxu0 %v931
    %2342 = vmatprep.subr.mxu0 %v940
    %2343 = vmatpush1.msra.mxu0 %v939
    %2344 = vmatprep.subr.mxu0 %v948
    %2345 = vmatpush1.msra.mxu0 %v947
    %2346 = vmatprep.subr.mxu0 %v956
    %2347 = vmatpush1.msra.mxu0 %v955
    %2348 = vmatprep.subr.mxu0 %v964
    %2349 = vmatpush1.msra.mxu0 %v963
    %2350 = vmatprep.subr.mxu0 %v972
    %2351 = vmatpush1.msra.mxu0 %v971
    %2352 = vmatprep.subr.mxu0 %v980
    %2353 = vmatpush1.msra.mxu0 %v979
    %2354 = vmatprep.subr.mxu0 %v988
    %2355 = vmatpush1.msra.mxu0 %v987
    %2356 = vmatprep.subr.mxu0 %v996
    %2357 = vmatpush1.msra.mxu0 %v995
    %2358 = vmatprep.subr.mxu0 %v1004
    %2359 = vmatpush1.msra.mxu0 %v1003
    %2360 = vmatprep.subr.mxu0 %v1012
    %2361 = vmatpush1.msra.mxu0 %v1011
    %2362 = vmatprep.subr.mxu0 %v1020
    %2363 = vmatpush1.msra.mxu0 %v1019
    %2364 = vmatprep.subr.mxu0 %v1028
    %2365 = vmatpush1.msra.mxu0 %v1027
    %2366 = vmatprep.subr.mxu0 %v1036
    %2367 = vmatpush1.msra.mxu0 %v1035
    %2368 = vmatprep.subr.mxu0 %v1044
    %2369 = vmatpush1.msra.mxu0 %v1043
    %2370 = vmatprep.subr.mxu0 %v1052
    %2371 = vmatpush1.msra.mxu0 %v1051
    %2372 = vmatprep.subr.mxu0 %v1060
    %2373 = vmatpush1.msra.mxu0 %v1059
    %2374 = vmatprep.subr.mxu0 %v1068
    %2375 = vmatpush1.msra.mxu0 %v1067
    %2376 = vmatprep.subr.mxu0 %v1076
    %2377 = vmatpush1.msra.mxu0 %v1075
    %2378 = vmatprep.subr.mxu0 %v1084
    %2379 = vmatpush1.msra.mxu0 %v1083
    %2380 = vmatprep.subr.mxu0 %v1092
    %2381 = vmatpush1.msra.mxu0 %v1091
    %2382 = vmatprep.subr.mxu0 %v1100
    %2383 = vmatpush1.msra.mxu0 %v1099
    %2384 = vmatprep.subr.mxu0 %v1108
    %2385 = vmatpush1.msra.mxu0 %v1107
    %2386 = vmatprep.subr.mxu0 %v1116
    %2387 = vmatpush1.msra.mxu0 %v1115
    %2388 = vmatprep.subr.mxu0 %v1124
    %2389 = vmatpush1.msra.mxu0 %v1123
    %2390 = vmatprep.subr.mxu0 %v1132
    %2391 = vmatpush1.msra.mxu0 %v1131
    %2392 = vmatprep.mubr.f32.mxu0 %v618
    %2393 = vmatmul.mubr.f32.gmra.mrb[0].mxu0 %v617
    %v2394 = vpop.f32.mrb[0].mxu0
    %v2395 = vadd.f32 %v2324, %v2394
    %v2396 = vpop.f32.mrb[0].mxu0
    %v2397 = vadd.f32 %v2326, %v2396
    %2398 = vdwg.mxu0
    %2399 = vmatprep.subr.mxu0 %v1140
    %2400 = vmatpush1.msra.mxu0 %v1139
    %2401 = vmatprep.subr.mxu0 %v1148
    %2402 = vmatpush1.msra.mxu0 %v1147
    %2403 = vmatprep.subr.mxu0 %v1156
    %2404 = vmatpush1.msra.mxu0 %v1155
    %2405 = vmatprep.subr.mxu0 %v1164
    %2406 = vmatpush1.msra.mxu0 %v1163
    %2407 = vmatprep.subr.mxu0 %v1172
    %2408 = vmatpush1.msra.mxu0 %v1171
    %2409 = vmatprep.subr.mxu0 %v1180
    %2410 = vmatpush1.msra.mxu0 %v1179
    %2411 = vmatprep.subr.mxu0 %v1188
    %2412 = vmatpush1.msra.mxu0 %v1187
    %2413 = vmatprep.subr.mxu0 %v1196
    %2414 = vmatpush1.msra.mxu0 %v1195
    %2415 = vmatprep.subr.mxu0 %v1204
    %2416 = vmatpush1.msra.mxu0 %v1203
    %2417 = vmatprep.subr.mxu0 %v1212
    %2418 = vmatpush1.msra.mxu0 %v1211
    %2419 = vmatprep.subr.mxu0 %v1220
    %2420 = vmatpush1.msra.mxu0 %v1219
    %2421 = vmatprep.subr.mxu0 %v1228
    %2422 = vmatpush1.msra.mxu0 %v1227
    %2423 = vmatprep.subr.mxu0 %v1236
    %2424 = vmatpush1.msra.mxu0 %v1235
    %2425 = vmatprep.subr.mxu0 %v1244
    %2426 = vmatpush1.msra.mxu0 %v1243
    %2427 = vmatprep.subr.mxu0 %v1252
    %2428 = vmatpush1.msra.mxu0 %v1251
    %2429 = vmatprep.subr.mxu0 %v1260
    %2430 = vmatpush1.msra.mxu0 %v1259
    %2431 = vmatprep.subr.mxu0 %v1268
    %2432 = vmatpush1.msra.mxu0 %v1267
    %2433 = vmatprep.subr.mxu0 %v1276
    %2434 = vmatpush1.msra.mxu0 %v1275
    %2435 = vmatprep.subr.mxu0 %v1284
    %2436 = vmatpush1.msra.mxu0 %v1283
    %2437 = vmatprep.subr.mxu0 %v1292
    %2438 = vmatpush1.msra.mxu0 %v1291
    %2439 = vmatprep.subr.mxu0 %v1300
    %2440 = vmatpush1.msra.mxu0 %v1299
    %2441 = vmatprep.subr.mxu0 %v1308
    %2442 = vmatpush1.msra.mxu0 %v1307
    %2443 = vmatprep.subr.mxu0 %v1316
    %2444 = vmatpush1.msra.mxu0 %v1315
    %2445 = vmatprep.subr.mxu0 %v1324
    %2446 = vmatpush1.msra.mxu0 %v1323
    %2447 = vmatprep.subr.mxu0 %v1332
    %2448 = vmatpush1.msra.mxu0 %v1331
    %2449 = vmatprep.subr.mxu0 %v1340
    %2450 = vmatpush1.msra.mxu0 %v1339
    %2451 = vmatprep.subr.mxu0 %v1348
    %2452 = vmatpush1.msra.mxu0 %v1347
    %2453 = vmatprep.subr.mxu0 %v1356
    %2454 = vmatpush1.msra.mxu0 %v1355
    %2455 = vmatprep.subr.mxu0 %v1364
    %2456 = vmatpush1.msra.mxu0 %v1363
    %2457 = vmatprep.subr.mxu0 %v1372
    %2458 = vmatpush1.msra.mxu0 %v1371
    %2459 = vmatprep.subr.mxu0 %v1380
    %2460 = vmatpush1.msra.mxu0 %v1379
    %2461 = vmatprep.subr.mxu0 %v1388
    %2462 = vmatpush1.msra.mxu0 %v1387
    %2463 = vmatprep.mubr.f32.mxu0 %v620
    %2464 = vmatmul.mubr.f32.gmra.mrb[0].mxu0 %v619
    %v2465 = vpop.f32.mrb[0].mxu0
    %v2466 = vadd.f32 %v2395, %v2465
    %v2467 = vpop.f32.mrb[0].mxu0
    %v2468 = vadd.f32 %v2397, %v2467
    %2469 = vdwg.mxu0
    %2470 = vmatprep.subr.mxu0 %v1396
    %2471 = vmatpush1.msra.mxu0 %v1395
    %2472 = vmatprep.subr.mxu0 %v1404
    %2473 = vmatpush1.msra.mxu0 %v1403
    %2474 = vmatprep.subr.mxu0 %v1412
    %2475 = vmatpush1.msra.mxu0 %v1411
    %2476 = vmatprep.subr.mxu0 %v1420
    %2477 = vmatpush1.msra.mxu0 %v1419
    %2478 = vmatprep.subr.mxu0 %v1428
    %2479 = vmatpush1.msra.mxu0 %v1427
    %2480 = vmatprep.subr.mxu0 %v1436
    %2481 = vmatpush1.msra.mxu0 %v1435
    %2482 = vmatprep.subr.mxu0 %v1444
    %2483 = vmatpush1.msra.mxu0 %v1443
    %2484 = vmatprep.subr.mxu0 %v1452
    %2485 = vmatpush1.msra.mxu0 %v1451
    %2486 = vmatprep.subr.mxu0 %v1460
    %2487 = vmatpush1.msra.mxu0 %v1459
    %2488 = vmatprep.subr.mxu0 %v1468
    %2489 = vmatpush1.msra.mxu0 %v1467
    %2490 = vmatprep.subr.mxu0 %v1476
    %2491 = vmatpush1.msra.mxu0 %v1475
    %2492 = vmatprep.subr.mxu0 %v1484
    %2493 = vmatpush1.msra.mxu0 %v1483
    %2494 = vmatprep.subr.mxu0 %v1492
    %2495 = vmatpush1.msra.mxu0 %v1491
    %2496 = vmatprep.subr.mxu0 %v1500
    %2497 = vmatpush1.msra.mxu0 %v1499
    %2498 = vmatprep.subr.mxu0 %v1508
    %2499 = vmatpush1.msra.mxu0 %v1507
    %2500 = vmatprep.subr.mxu0 %v1516
    %2501 = vmatpush1.msra.mxu0 %v1515
    %2502 = vmatprep.subr.mxu0 %v1524
    %2503 = vmatpush1.msra.mxu0 %v1523
    %2504 = vmatprep.subr.mxu0 %v1532
    %2505 = vmatpush1.msra.mxu0 %v1531
    %2506 = vmatprep.subr.mxu0 %v1540
    %2507 = vmatpush1.msra.mxu0 %v1539
    %2508 = vmatprep.subr.mxu0 %v1548
    %2509 = vmatpush1.msra.mxu0 %v1547
    %2510 = vmatprep.subr.mxu0 %v1556
    %2511 = vmatpush1.msra.mxu0 %v1555
    %2512 = vmatprep.subr.mxu0 %v1564
    %2513 = vmatpush1.msra.mxu0 %v1563
    %2514 = vmatprep.subr.mxu0 %v1572
    %2515 = vmatpush1.msra.mxu0 %v1571
    %2516 = vmatprep.subr.mxu0 %v1580
    %2517 = vmatpush1.msra.mxu0 %v1579
    %2518 = vmatprep.subr.mxu0 %v1588
    %2519 = vmatpush1.msra.mxu0 %v1587
    %2520 = vmatprep.subr.mxu0 %v1596
    %2521 = vmatpush1.msra.mxu0 %v1595
    %2522 = vmatprep.subr.mxu0 %v1604
    %2523 = vmatpush1.msra.mxu0 %v1603
    %2524 = vmatprep.subr.mxu0 %v1612
    %2525 = vmatpush1.msra.mxu0 %v1611
    %2526 = vmatprep.subr.mxu0 %v1620
    %2527 = vmatpush1.msra.mxu0 %v1619
    %2528 = vmatprep.subr.mxu0 %v1628
    %2529 = vmatpush1.msra.mxu0 %v1627
    %2530 = vmatprep.subr.mxu0 %v1636
    %2531 = vmatpush1.msra.mxu0 %v1635
    %2532 = vmatprep.subr.mxu0 %v1644
    %2533 = vmatpush1.msra.mxu0 %v1643
    %2534 = vmatprep.mubr.f32.mxu0 %v622
    %2535 = vmatmul.mubr.f32.gmra.mrb[0].mxu0 %v621
    %v2536 = vpop.f32.mrb[0].mxu0
    %v2537 = vadd.f32 %v2466, %v2536
    %v2538 = vpop.f32.mrb[0].mxu0
    %v2539 = vadd.f32 %v2468, %v2538
    %2540 = vdwg.mxu0
    %2541 = vmatprep.subr.mxu0 %v630
    %2542 = vmatpush1.msra.mxu0 %v629
    %2543 = vmatprep.subr.mxu0 %v638
    %2544 = vmatpush1.msra.mxu0 %v637
    %2545 = vmatprep.subr.mxu0 %v646
    %2546 = vmatpush1.msra.mxu0 %v645
    %2547 = vmatprep.subr.mxu0 %v654
    %2548 = vmatpush1.msra.mxu0 %v653
    %2549 = vmatprep.subr.mxu0 %v662
    %2550 = vmatpush1.msra.mxu0 %v661
    %2551 = vmatprep.subr.mxu0 %v670
    %2552 = vmatpush1.msra.mxu0 %v669
    %2553 = vmatprep.subr.mxu0 %v678
    %2554 = vmatpush1.msra.mxu0 %v677
    %2555 = vmatprep.subr.mxu0 %v686
    %2556 = vmatpush1.msra.mxu0 %v685
    %2557 = vmatprep.subr.mxu0 %v694
    %2558 = vmatpush1.msra.mxu0 %v693
    %2559 = vmatprep.subr.mxu0 %v702
    %2560 = vmatpush1.msra.mxu0 %v701
    %2561 = vmatprep.subr.mxu0 %v710
    %2562 = vmatpush1.msra.mxu0 %v709
    %2563 = vmatprep.subr.mxu0 %v718
    %2564 = vmatpush1.msra.mxu0 %v717
    %2565 = vmatprep.subr.mxu0 %v726
    %2566 = vmatpush1.msra.mxu0 %v725
    %2567 = vmatprep.subr.mxu0 %v734
    %2568 = vmatpush1.msra.mxu0 %v733
    %2569 = vmatprep.subr.mxu0 %v742
    %2570 = vmatpush1.msra.mxu0 %v741
    %2571 = vmatprep.subr.mxu0 %v750
    %2572 = vmatpush1.msra.mxu0 %v749
    %2573 = vmatprep.subr.mxu0 %v758
    %2574 = vmatpush1.msra.mxu0 %v757
    %2575 = vmatprep.subr.mxu0 %v766
    %2576 = vmatpush1.msra.mxu0 %v765
    %2577 = vmatprep.subr.mxu0 %v774
    %2578 = vmatpush1.msra.mxu0 %v773
    %2579 = vmatprep.subr.mxu0 %v782
    %2580 = vmatpush1.msra.mxu0 %v781
    %2581 = vmatprep.subr.mxu0 %v790
    %2582 = vmatpush1.msra.mxu0 %v789
    %2583 = vmatprep.subr.mxu0 %v798
    %2584 = vmatpush1.msra.mxu0 %v797
    %2585 = vmatprep.subr.mxu0 %v806
    %2586 = vmatpush1.msra.mxu0 %v805
    %2587 = vmatprep.subr.mxu0 %v814
    %2588 = vmatpush1.msra.mxu0 %v813
    %2589 = vmatprep.subr.mxu0 %v822
    %2590 = vmatpush1.msra.mxu0 %v821
    %2591 = vmatprep.subr.mxu0 %v830
    %2592 = vmatpush1.msra.mxu0 %v829
    %2593 = vmatprep.subr.mxu0 %v838
    %2594 = vmatpush1.msra.mxu0 %v837
    %2595 = vmatprep.subr.mxu0 %v846
    %2596 = vmatpush1.msra.mxu0 %v845
    %2597 = vmatprep.subr.mxu0 %v854
    %2598 = vmatpush1.msra.mxu0 %v853
    %2599 = vmatprep.subr.mxu0 %v862
    %2600 = vmatpush1.msra.mxu0 %v861
    %2601 = vmatprep.subr.mxu0 %v870
    %2602 = vmatpush1.msra.mxu0 %v869
    %2603 = vmatprep.subr.mxu0 %v878
    %2604 = vmatpush1.msra.mxu0 %v877
    %2605 = vmatprep.mubr.f32.mxu0 %v616
    %2606 = vmatmul.mubr.f32.gmra.mrb[0].mxu0 %v615
    %v2607 = vpop.f32.mrb[0].mxu0
    %v2608 = vadd.f32 %v1676, %v2607
    %v2609 = vpop.f32.mrb[0].mxu0
    %v2610 = vadd.f32 %v1680, %v2609
    %2611 = vdwg.mxu0
    %2612 = vmatprep.subr.mxu0 %v886
    %2613 = vmatpush1.msra.mxu0 %v885
    %2614 = vmatprep.subr.mxu0 %v894
    %2615 = vmatpush1.msra.mxu0 %v893
    %2616 = vmatprep.subr.mxu0 %v902
    %2617 = vmatpush1.msra.mxu0 %v901
    %2618 = vmatprep.subr.mxu0 %v910
    %2619 = vmatpush1.msra.mxu0 %v909
    %2620 = vmatprep.subr.mxu0 %v918
    %2621 = vmatpush1.msra.mxu0 %v917
    %2622 = vmatprep.subr.mxu0 %v926
    %2623 = vmatpush1.msra.mxu0 %v925
    %2624 = vmatprep.subr.mxu0 %v934
    %2625 = vmatpush1.msra.mxu0 %v933
    %2626 = vmatprep.subr.mxu0 %v942
    %2627 = vmatpush1.msra.mxu0 %v941
    %2628 = vmatprep.subr.mxu0 %v950
    %2629 = vmatpush1.msra.mxu0 %v949
    %2630 = vmatprep.subr.mxu0 %v958
    %2631 = vmatpush1.msra.mxu0 %v957
    %2632 = vmatprep.subr.mxu0 %v966
    %2633 = vmatpush1.msra.mxu0 %v965
    %2634 = vmatprep.subr.mxu0 %v974
    %2635 = vmatpush1.msra.mxu0 %v973
    %2636 = vmatprep.subr.mxu0 %v982
    %2637 = vmatpush1.msra.mxu0 %v981
    %2638 = vmatprep.subr.mxu0 %v990
    %2639 = vmatpush1.msra.mxu0 %v989
    %2640 = vmatprep.subr.mxu0 %v998
    %2641 = vmatpush1.msra.mxu0 %v997
    %2642 = vmatprep.subr.mxu0 %v1006
    %2643 = vmatpush1.msra.mxu0 %v1005
    %2644 = vmatprep.subr.mxu0 %v1014
    %2645 = vmatpush1.msra.mxu0 %v1013
    %2646 = vmatprep.subr.mxu0 %v1022
    %2647 = vmatpush1.msra.mxu0 %v1021
    %2648 = vmatprep.subr.mxu0 %v1030
    %2649 = vmatpush1.msra.mxu0 %v1029
    %2650 = vmatprep.subr.mxu0 %v1038
    %2651 = vmatpush1.msra.mxu0 %v1037
    %2652 = vmatprep.subr.mxu0 %v1046
    %2653 = vmatpush1.msra.mxu0 %v1045
    %2654 = vmatprep.subr.mxu0 %v1054
    %2655 = vmatpush1.msra.mxu0 %v1053
    %2656 = vmatprep.subr.mxu0 %v1062
    %2657 = vmatpush1.msra.mxu0 %v1061
    %2658 = vmatprep.subr.mxu0 %v1070
    %2659 = vmatpush1.msra.mxu0 %v1069
    %2660 = vmatprep.subr.mxu0 %v1078
    %2661 = vmatpush1.msra.mxu0 %v1077
    %2662 = vmatprep.subr.mxu0 %v1086
    %2663 = vmatpush1.msra.mxu0 %v1085
    %2664 = vmatprep.subr.mxu0 %v1094
    %2665 = vmatpush1.msra.mxu0 %v1093
    %2666 = vmatprep.subr.mxu0 %v1102
    %2667 = vmatpush1.msra.mxu0 %v1101
    %2668 = vmatprep.subr.mxu0 %v1110
    %2669 = vmatpush1.msra.mxu0 %v1109
    %2670 = vmatprep.subr.mxu0 %v1118
    %2671 = vmatpush1.msra.mxu0 %v1117
    %2672 = vmatprep.subr.mxu0 %v1126
    %2673 = vmatpush1.msra.mxu0 %v1125
    %2674 = vmatprep.subr.mxu0 %v1134
    %2675 = vmatpush1.msra.mxu0 %v1133
    %2676 = vmatprep.mubr.f32.mxu0 %v618
    %2677 = vmatmul.mubr.f32.gmra.mrb[0].mxu0 %v617
    %v2678 = vpop.f32.mrb[0].mxu0
    %v2679 = vadd.f32 %v2608, %v2678
    %v2680 = vpop.f32.mrb[0].mxu0
    %v2681 = vadd.f32 %v2610, %v2680
    %2682 = vdwg.mxu0
    %2683 = vmatprep.subr.mxu0 %v1142
    %2684 = vmatpush1.msra.mxu0 %v1141
    %2685 = vmatprep.subr.mxu0 %v1150
    %2686 = vmatpush1.msra.mxu0 %v1149
    %2687 = vmatprep.subr.mxu0 %v1158
    %2688 = vmatpush1.msra.mxu0 %v1157
    %2689 = vmatprep.subr.mxu0 %v1166
    %2690 = vmatpush1.msra.mxu0 %v1165
    %2691 = vmatprep.subr.mxu0 %v1174
    %2692 = vmatpush1.msra.mxu0 %v1173
    %2693 = vmatprep.subr.mxu0 %v1182
    %2694 = vmatpush1.msra.mxu0 %v1181
    %2695 = vmatprep.subr.mxu0 %v1190
    %2696 = vmatpush1.msra.mxu0 %v1189
    %2697 = vmatprep.subr.mxu0 %v1198
    %2698 = vmatpush1.msra.mxu0 %v1197
    %2699 = vmatprep.subr.mxu0 %v1206
    %2700 = vmatpush1.msra.mxu0 %v1205
    %2701 = vmatprep.subr.mxu0 %v1214
    %2702 = vmatpush1.msra.mxu0 %v1213
    %2703 = vmatprep.subr.mxu0 %v1222
    %2704 = vmatpush1.msra.mxu0 %v1221
    %2705 = vmatprep.subr.mxu0 %v1230
    %2706 = vmatpush1.msra.mxu0 %v1229
    %2707 = vmatprep.subr.mxu0 %v1238
    %2708 = vmatpush1.msra.mxu0 %v1237
    %2709 = vmatprep.subr.mxu0 %v1246
    %2710 = vmatpush1.msra.mxu0 %v1245
    %2711 = vmatprep.subr.mxu0 %v1254
    %2712 = vmatpush1.msra.mxu0 %v1253
    %2713 = vmatprep.subr.mxu0 %v1262
    %2714 = vmatpush1.msra.mxu0 %v1261
    %2715 = vmatprep.subr.mxu0 %v1270
    %2716 = vmatpush1.msra.mxu0 %v1269
    %2717 = vmatprep.subr.mxu0 %v1278
    %2718 = vmatpush1.msra.mxu0 %v1277
    %2719 = vmatprep.subr.mxu0 %v1286
    %2720 = vmatpush1.msra.mxu0 %v1285
    %2721 = vmatprep.subr.mxu0 %v1294
    %2722 = vmatpush1.msra.mxu0 %v1293
    %2723 = vmatprep.subr.mxu0 %v1302
    %2724 = vmatpush1.msra.mxu0 %v1301
    %2725 = vmatprep.subr.mxu0 %v1310
    %2726 = vmatpush1.msra.mxu0 %v1309
    %2727 = vmatprep.subr.mxu0 %v1318
    %2728 = vmatpush1.msra.mxu0 %v1317
    %2729 = vmatprep.subr.mxu0 %v1326
    %2730 = vmatpush1.msra.mxu0 %v1325
    %2731 = vmatprep.subr.mxu0 %v1334
    %2732 = vmatpush1.msra.mxu0 %v1333
    %2733 = vmatprep.subr.mxu0 %v1342
    %2734 = vmatpush1.msra.mxu0 %v1341
    %2735 = vmatprep.subr.mxu0 %v1350
    %2736 = vmatpush1.msra.mxu0 %v1349
    %2737 = vmatprep.subr.mxu0 %v1358
    %2738 = vmatpush1.msra.mxu0 %v1357
    %2739 = vmatprep.subr.mxu0 %v1366
    %2740 = vmatpush1.msra.mxu0 %v1365
    %2741 = vmatprep.subr.mxu0 %v1374
    %2742 = vmatpush1.msra.mxu0 %v1373
    %2743 = vmatprep.subr.mxu0 %v1382
    %2744 = vmatpush1.msra.mxu0 %v1381
    %2745 = vmatprep.subr.mxu0 %v1390
    %2746 = vmatpush1.msra.mxu0 %v1389
    %2747 = vmatprep.mubr.f32.mxu0 %v620
    %2748 = vmatmul.mubr.f32.gmra.mrb[0].mxu0 %v619
    %v2749 = vpop.f32.mrb[0].mxu0
    %v2750 = vadd.f32 %v2679, %v2749
    %v2751 = vpop.f32.mrb[0].mxu0
    %v2752 = vadd.f32 %v2681, %v2751
    %2753 = vdwg.mxu0
    %2754 = vmatprep.subr.mxu0 %v1398
    %2755 = vmatpush1.msra.mxu0 %v1397
    %2756 = vmatprep.subr.mxu0 %v1406
    %2757 = vmatpush1.msra.mxu0 %v1405
    %2758 = vmatprep.subr.mxu0 %v1414
    %2759 = vmatpush1.msra.mxu0 %v1413
    %2760 = vmatprep.subr.mxu0 %v1422
    %2761 = vmatpush1.msra.mxu0 %v1421
    %2762 = vmatprep.subr.mxu0 %v1430
    %2763 = vmatpush1.msra.mxu0 %v1429
    %2764 = vmatprep.subr.mxu0 %v1438
    %2765 = vmatpush1.msra.mxu0 %v1437
    %2766 = vmatprep.subr.mxu0 %v1446
    %2767 = vmatpush1.msra.mxu0 %v1445
    %2768 = vmatprep.subr.mxu0 %v1454
    %2769 = vmatpush1.msra.mxu0 %v1453
    %2770 = vmatprep.subr.mxu0 %v1462
    %2771 = vmatpush1.msra.mxu0 %v1461
    %2772 = vmatprep.subr.mxu0 %v1470
    %2773 = vmatpush1.msra.mxu0 %v1469
    %2774 = vmatprep.subr.mxu0 %v1478
    %2775 = vmatpush1.msra.mxu0 %v1477
    %2776 = vmatprep.subr.mxu0 %v1486
    %2777 = vmatpush1.msra.mxu0 %v1485
    %2778 = vmatprep.subr.mxu0 %v1494
    %2779 = vmatpush1.msra.mxu0 %v1493
    %2780 = vmatprep.subr.mxu0 %v1502
    %2781 = vmatpush1.msra.mxu0 %v1501
    %2782 = vmatprep.subr.mxu0 %v1510
    %2783 = vmatpush1.msra.mxu0 %v1509
    %2784 = vmatprep.subr.mxu0 %v1518
    %2785 = vmatpush1.msra.mxu0 %v1517
    %2786 = vmatprep.subr.mxu0 %v1526
    %2787 = vmatpush1.msra.mxu0 %v1525
    %2788 = vmatprep.subr.mxu0 %v1534
    %2789 = vmatpush1.msra.mxu0 %v1533
    %2790 = vmatprep.subr.mxu0 %v1542
    %2791 = vmatpush1.msra.mxu0 %v1541
    %2792 = vmatprep.subr.mxu0 %v1550
    %2793 = vmatpush1.msra.mxu0 %v1549
    %2794 = vmatprep.subr.mxu0 %v1558
    %2795 = vmatpush1.msra.mxu0 %v1557
    %2796 = vmatprep.subr.mxu0 %v1566
    %2797 = vmatpush1.msra.mxu0 %v1565
    %2798 = vmatprep.subr.mxu0 %v1574
    %2799 = vmatpush1.msra.mxu0 %v1573
    %2800 = vmatprep.subr.mxu0 %v1582
    %2801 = vmatpush1.msra.mxu0 %v1581
    %2802 = vmatprep.subr.mxu0 %v1590
    %2803 = vmatpush1.msra.mxu0 %v1589
    %2804 = vmatprep.subr.mxu0 %v1598
    %2805 = vmatpush1.msra.mxu0 %v1597
    %2806 = vmatprep.subr.mxu0 %v1606
    %2807 = vmatpush1.msra.mxu0 %v1605
    %2808 = vmatprep.subr.mxu0 %v1614
    %2809 = vmatpush1.msra.mxu0 %v1613
    %2810 = vmatprep.subr.mxu0 %v1622
    %2811 = vmatpush1.msra.mxu0 %v1621
    %2812 = vmatprep.subr.mxu0 %v1630
    %2813 = vmatpush1.msra.mxu0 %v1629
    %2814 = vmatprep.subr.mxu0 %v1638
    %2815 = vmatpush1.msra.mxu0 %v1637
    %2816 = vmatprep.subr.mxu0 %v1646
    %2817 = vmatpush1.msra.mxu0 %v1645
    %2818 = vmatprep.mubr.f32.mxu0 %v622
    %2819 = vmatmul.mubr.f32.gmra.mrb[0].mxu0 %v621
    %v2820 = vpop.f32.mrb[0].mxu0
    %v2821 = vadd.f32 %v2750, %v2820
    %v2822 = vpop.f32.mrb[0].mxu0
    %v2823 = vadd.f32 %v2752, %v2822
    %2824 = vdwg.mxu0
    %v2825 = vand.u32 2147483647, %v1969
    %v2826 = vand.u32 2147483647, %v1971
    %v2827 = vand.u32 2147483647, %v2253
    %v2828 = vand.u32 2147483647, %v2255
    %v2829 = vand.u32 2147483647, %v2537
    %v2830 = vand.u32 2147483647, %v2539
    %v2831 = vand.u32 2147483647, %v2821
    %v2832 = vand.u32 2147483647, %v2823
    %v2833 = vsub.f32 0.0, %v2825
    %v2834 = vsub.f32 0.0, %v2826
    %v2835 = vsub.f32 0.0, %v2827
    %v2836 = vsub.f32 0.0, %v2828
    %v2837 = vsub.f32 0.0, %v2829
    %v2838 = vsub.f32 0.0, %v2830
    %v2839 = vsub.f32 0.0, %v2831
    %v2840 = vsub.f32 0.0, %v2832
    %v2841 = vmul.f32 %v2833, 1.442695
    %v2842 = vpow.pop %v2841
    %v2843 = vmul.f32 %v2834, 1.442695
    %v2844 = vpow.pop %v2843
    %v2845 = vmul.f32 %v2835, 1.442695
    %v2846 = vpow.pop %v2845
    %v2847 = vmul.f32 %v2836, 1.442695
    %v2848 = vpow.pop %v2847
    %v2849 = vmul.f32 %v2837, 1.442695
    %v2850 = vpow.pop %v2849
    %v2851 = vmul.f32 %v2838, 1.442695
    %v2852 = vpow.pop %v2851
    %v2853 = vmul.f32 %v2839, 1.442695
    %v2854 = vpow.pop %v2853
    %v2855 = vmul.f32 %v2840, 1.442695
    %v2856 = vpow.pop %v2855
    %v2857 = vadd.f32 %v2842, 1.0
    %v2858 = vadd.f32 %v2844, 1.0
    %v2859 = vadd.f32 %v2846, 1.0
    %v2860 = vadd.f32 %v2848, 1.0
    %v2861 = vadd.f32 %v2850, 1.0
    %v2862 = vadd.f32 %v2852, 1.0
    %v2863 = vadd.f32 %v2854, 1.0
    %v2864 = vadd.f32 %v2856, 1.0
    %v2865 = vrcp.pop %v2857
    %v2866 = vmul.f32 1.0, %v2865
    %v2867 = vrcp.pop %v2858
    %v2868 = vmul.f32 1.0, %v2867
    %v2869 = vrcp.pop %v2859
    %v2870 = vmul.f32 1.0, %v2869
    %v2871 = vrcp.pop %v2860
    %v2872 = vmul.f32 1.0, %v2871
    %v2873 = vrcp.pop %v2861
    %v2874 = vmul.f32 1.0, %v2873
    %v2875 = vrcp.pop %v2862
    %v2876 = vmul.f32 1.0, %v2875
    %v2877 = vrcp.pop %v2863
    %v2878 = vmul.f32 1.0, %v2877
    %v2879 = vrcp.pop %v2864
    %v2880 = vmul.f32 1.0, %v2879
    %vm2881 = vcmp.ge.f32.partialorder %v1969, 0.0
    %vm2882 = vcmp.ge.f32.partialorder %v1971, 0.0
    %vm2883 = vcmp.ge.f32.partialorder %v2253, 0.0
    %vm2884 = vcmp.ge.f32.partialorder %v2255, 0.0
    %vm2885 = vcmp.ge.f32.partialorder %v2537, 0.0
    %vm2886 = vcmp.ge.f32.partialorder %v2539, 0.0
    %vm2887 = vcmp.ge.f32.partialorder %v2821, 0.0
    %vm2888 = vcmp.ge.f32.partialorder %v2823, 0.0
    %v2889 = vmul.f32 %v2842, %v2866
    %v2890 = vmul.f32 %v2844, %v2868
    %v2891 = vmul.f32 %v2846, %v2870
    %v2892 = vmul.f32 %v2848, %v2872
    %v2893 = vmul.f32 %v2850, %v2874
    %v2894 = vmul.f32 %v2852, %v2876
    %v2895 = vmul.f32 %v2854, %v2878
    %v2896 = vmul.f32 %v2856, %v2880
    %v2897 = vsel %vm2881, %v2866, %v2889
    %v2898 = vsel %vm2882, %v2868, %v2890
    %v2899 = vsel %vm2883, %v2870, %v2891
    %v2900 = vsel %vm2884, %v2872, %v2892
    %v2901 = vsel %vm2885, %v2874, %v2893
    %v2902 = vsel %vm2886, %v2876, %v2894
    %v2903 = vsel %vm2887, %v2878, %v2895
    %v2904 = vsel %vm2888, %v2880, %v2896
    %2905 = vst [vmem:[%s7] sm:$0xff] %v2897
    %2906 = vst [vmem:[%s7 + $0x8] sm:$0xff] %v2898
    %2907 = vst [vmem:[%s7 + $0x10] sm:$0xff] %v2899
    %2908 = vst [vmem:[%s7 + $0x18] sm:$0xff] %v2900
    %2909 = vst [vmem:[%s7 + $0x20] sm:$0xff] %v2901
    %2910 = vst [vmem:[%s7 + $0x28] sm:$0xff] %v2902
    %2911 = vst [vmem:[%s7 + $0x30] sm:$0xff] %v2903
    %2912 = vst [vmem:[%s7 + $0x38] sm:$0xff] %v2904
    // Predicated region
    $region54: #{_lambda_.1} parent=1 // pred_check
      _
    $region55: #{_lambda_.1} parent=1 // pred_check_branch
      %2914 = sbr.rel (0) target = $region57
    $region56: #{_lambda_.1} parent=1 // pred_region
      _
    $region57: #{_lambda_.1} parent=1 // pred_fallthru
      _
    // Predicated region
    $region58: #{_lambda_.1} parent=1 // pred_check
      _
    $region59: #{_lambda_.1} parent=1 // pred_check_branch
      %2916 = sbr.rel (0) target = $region61
    $region60: #{_lambda_.1} parent=1 // pred_region
      _
    $region61: #{_lambda_.1} parent=1 // pred_fallthru
      _
    %2917 = vsyncpa [#allocation3], 1
    %2918 = vsyncpa [#allocation5], 1
    %2919 = vsyncpa [#allocation8], 1
    %2920 = vsyncpa [#allocation11], 1

</llo_original>
